<compile_context>
chip_gen: v7x
topology: tpu7x:2x2x1
jax: 0.10.0
libtpu: 0.0.40
codegen_flags: <defaults>
</compile_context>

<pallas_src>
import functools
import math

import jax
import jax.numpy as jnp
from jax import lax
from jax.experimental import pallas as pl
from jax.experimental.pallas import tpu as pltpu

NEG_SLOPE = 0.01   # nn.LeakyReLU default
BN_EPS = 1e-4      # nn.BatchNorm2d(..., eps=0.0001)


def _leaky_relu(x):
    return jnp.where(x >= 0, x, NEG_SLOPE * x)


# -----------------------------------------------------------------------------
# Single fused kernel: projections + attention + (permute/view) + BN + convs
# -----------------------------------------------------------------------------
def _mhsa_fused_kernel(x_ref, wq_ref, bq_ref, wk_ref, bk_ref, wv_ref, bv_ref,
                       gamma_ref, beta_ref, w1_ref, b1_ref, w2_ref, b2_ref,
                       o_ref):
    """Fused forward.

    x_ref:        (B, C, S)        VMEM   flattened input image
    wq/wk/wv_ref: (cnh, C)         VMEM   1x1-conv projection weights
    bq/bk/bv_ref: (cnh, 1)         VMEM   projection biases
    gamma/beta:   (cnh,)           SMEM   BatchNorm affine
    w1: (cnh, cnh), b1: (cnh,)     SMEM   conv_out Conv2d(cnh, cnh, 1)
    w2: (C,   cnh), b2: (C,)       SMEM   conv_out Conv2d(cnh, C, 1)
    o_ref: (B, C, S//cnh, cnh)     VMEM   row-major identical to the module's
           (B, C, H, W) output, so the wrapper reshape is a free bitcast.
    """
    B, C, S = x_ref.shape
    cnh = wq_ref.shape[0]
    blk = S // cnh                       # spatial positions per scrambled channel
    n_bn = B * S                         # elements per BatchNorm channel
    inv_scale = 1.0 / math.sqrt(float(S))

    # ---- q/k/v 1x1-conv projections on one lane-dense (C, B*S) slab (VPU) ----
    xb = jnp.concatenate([x_ref[b] for b in range(B)], axis=-1)      # (C, B*S)

    def _project(w, bias):               # w: (cnh, C), bias: (cnh, 1)
        acc = w[:, 0:1] * xb[0:1, :]
        for ci in range(1, C):
            acc = acc + w[:, ci:ci + 1] * xb[ci:ci + 1, :]
        return acc + bias                                             # (cnh, B*S)

    q_all = _project(wq_ref[...], bq_ref[...])
    k_all = _project(wk_ref[...], bk_ref[...])
    v_all = _project(wv_ref[...], bv_ref[...])

    # ---- batched scaled-dot-product attention over the channel axis (MXU) ----
    def _split(a):                       # (cnh, B*S) -> (B, cnh, S)
        return jnp.stack([a[:, b * S:(b + 1) * S] for b in range(B)], axis=0)

    q, k, v = _split(q_all), _split(k_all), _split(v_all)

    s = jnp.einsum("bis,bjs->bij", q, k,
                   preferred_element_type=jnp.float32) * inv_scale   # (B,cnh,cnh)
    m = jnp.max(s, axis=-1, keepdims=True)
    e = jnp.exp(s - m)
    p = e / jnp.sum(e, axis=-1, keepdims=True)
    att = jnp.einsum("bij,bjs->bis", p, v,
                     preferred_element_type=jnp.float32)              # (B,cnh,S)

    # ---- permute(0,2,1).contiguous().view(B,-1,H,W), kept implicit -----------
    # The scrambled tensor y satisfies y[b, c2, t*cnh + c] == att[b, c, c2*blk + t],
    # i.e. scrambled channel c2 is exactly the lane block att[:, c2*blk:(c2+1)*blk].
    # BatchNorm + both 1x1 convs are evaluated on those blocks; the physical
    # relayout happens only once, as a single 2-D transpose at the end.

    # BatchNorm2d (training-mode batch statistics, biased variance) + LeakyReLU
    a_blk = []                                                        # (cnh, B*blk)
    for c2 in range(cnh):
        yb = jnp.concatenate(
            [att[b][:, c2 * blk:(c2 + 1) * blk] for b in range(B)], axis=-1)
        mean = jnp.sum(yb) * (1.0 / n_bn)
        d = yb - mean
        var = jnp.sum(d * d) * (1.0 / n_bn)
        sc = gamma_ref[c2] * lax.rsqrt(var + BN_EPS)
        sh = beta_ref[c2] - mean * sc
        a_blk.append(_leaky_relu(yb * sc + sh))

    # conv1x1 (cnh -> cnh) + LeakyReLU: mixing across the scrambled-channel
    # (block) index with scalar weights from SMEM (VPU broadcast-FMAs).
    z_blk = []
    for co in range(cnh):
        acc = w1_ref[co, 0] * a_blk[0]
        for ci in range(1, cnh):
            acc = acc + w1_ref[co, ci] * a_blk[ci]
        z_blk.append(_leaky_relu(acc + b1_ref[co]))

    # conv1x1 (cnh -> C)
    out_blk = []
    for co in range(C):
        acc = w2_ref[co, 0] * z_blk[0]
        for ci in range(1, cnh):
            acc = acc + w2_ref[co, ci] * z_blk[ci]
        out_blk.append(acc + b2_ref[co])                              # (cnh, B*blk)

    # One lane-concat + one 2-D transpose realises every (c, t) -> (t, c) flip;
    # each store slice is a (blk, cnh) tile of the final layout.
    cat = jnp.concatenate(out_blk, axis=-1)                           # (cnh, C*B*blk)
    cat_t = cat.T                                                     # (C*B*blk, cnh)
    for b in range(B):
        for co in range(C):
            r0 = (co * B + b) * blk
            o_ref[b, co] = cat_t[r0:r0 + blk, :].astype(o_ref.dtype)


# -----------------------------------------------------------------------------
# Wrapper (self-attention: q = k = v = x)
# -----------------------------------------------------------------------------
def multi_head_self_attention(x, params, n_heads):
    B, C, H, W = x.shape
    S = H * W
    cnh = C * n_heads
    assert S % cnh == 0, (S, cnh)
    blk = S // cnh
    xf = x.reshape(B, C, S)              # free row-major bitcast

    vmem = pl.BlockSpec(memory_space=pltpu.MemorySpace.VMEM)
    smem = pl.BlockSpec(memory_space=pltpu.MemorySpace.SMEM)

    flops = (3 * 2 * C * cnh * B * S          # q/k/v projections
             + 2 * 2 * B * cnh * cnh * S      # score + PV matmuls
             + 6 * B * cnh * S                # BatchNorm + LeakyReLUs
             + 2 * B * S * cnh * cnh          # conv1x1 cnh->cnh
             + 2 * B * S * C * cnh)           # conv1x1 cnh->C
    transcendentals = B * cnh * cnh + cnh     # exp + rsqrt
    param_elems = 3 * (cnh * C + cnh) + 2 * cnh + cnh * cnh + cnh + C * cnh + C
    bytes_accessed = 4 * (B * C * S + B * C * S + param_elems)

    out4 = pl.pallas_call(
        _mhsa_fused_kernel,
        out_shape=jax.ShapeDtypeStruct((B, C, blk, cnh), x.dtype),
        in_specs=[vmem] * 7 + [smem] * 6,
        out_specs=vmem,
        cost_estimate=pl.CostEstimate(flops=flops,
                                      transcendentals=transcendentals,
                                      bytes_accessed=bytes_accessed),
    )(xf,
      params["wq"], params["bq"], params["wk"], params["bk"],
      params["wv"], params["bv"],
      params["bn_gamma"], params["bn_beta"],
      params["w1"], params["b1"], params["w2"], params["b2"])

    # (blk, cnh) flattens row-major to the scrambled spatial index s2 = h*W + w,
    # so this reshape IS permute(0,2,1).contiguous().view(B,-1,H,W) and costs
    # nothing (row-major bitcast).
    return out4.reshape(B, C, H, W)


def init_params(key, n_heads, channels):
    """Kernel-ready parameter shapes (built once, outside the jitted hot path)."""
    cnh = channels * n_heads
    ks = jax.random.split(key, 12)
    f = lambda k, shape: jax.random.normal(k, shape, jnp.float32) * 0.1
    return {
        "wq": f(ks[0], (cnh, channels)), "bq": f(ks[1], (cnh, 1)),
        "wk": f(ks[2], (cnh, channels)), "bk": f(ks[3], (cnh, 1)),
        "wv": f(ks[4], (cnh, channels)), "bv": f(ks[5], (cnh, 1)),
        "bn_gamma": 1.0 + f(ks[6], (cnh,)), "bn_beta": f(ks[7], (cnh,)),
        "w1": f(ks[8], (cnh, cnh)), "b1": f(ks[9], (cnh,)),
        "w2": f(ks[10], (channels, cnh)), "b2": f(ks[11], (channels,)),
    }


if __name__ == "__main__":
    n_heads, channels = 2, 4
    B, H, W = 2, 16, 16

    key = jax.random.PRNGKey(0)
    k_x, k_p = jax.random.split(key)
    x = jax.random.normal(k_x, (B, channels, H, W), jnp.float32)
    params = init_params(k_p, n_heads, channels)

    fwd = jax.jit(functools.partial(multi_head_self_attention, n_heads=n_heads))
    out = fwd(x, params)
    jax.block_until_ready(out)

    assert out.shape == (B, channels, H, W), out.shape
    assert bool(jnp.all(jnp.isfinite(out)))
    print("KERNEL_OK")
</pallas_src>

<mosaic_0001>
module attributes {stable_mosaic.version = 11 : i64} {
  func.func @_mhsa_fused_kernel(%arg0: memref<2x4x256xf32, #tpu.memory_space<vmem>>, %arg1: memref<8x4xf32, #tpu.memory_space<vmem>>, %arg2: memref<8x1xf32, #tpu.memory_space<vmem>>, %arg3: memref<8x4xf32, #tpu.memory_space<vmem>>, %arg4: memref<8x1xf32, #tpu.memory_space<vmem>>, %arg5: memref<8x4xf32, #tpu.memory_space<vmem>>, %arg6: memref<8x1xf32, #tpu.memory_space<vmem>>, %arg7: memref<8xf32, #tpu.memory_space<smem>>, %arg8: memref<8xf32, #tpu.memory_space<smem>>, %arg9: memref<8x8xf32, #tpu.memory_space<smem>>, %arg10: memref<8xf32, #tpu.memory_space<smem>>, %arg11: memref<4x8xf32, #tpu.memory_space<smem>>, %arg12: memref<4xf32, #tpu.memory_space<smem>>, %arg13: memref<2x4x32x8xf32, #tpu.memory_space<vmem>>) attributes {dimension_semantics = [], scalar_prefetch = 0 : i64, scratch_operands = 0 : i64, tpu.core_type = #tpu.core_type<tc>} {
    %c0 = arith.constant 0 : index
    %c0_0 = arith.constant 0 : index
    %c0_1 = arith.constant 0 : index
    %0 = vector.load %arg0[%c0, %c0_0, %c0_1] : memref<2x4x256xf32, #tpu.memory_space<vmem>>, vector<1x4x256xf32>
    %1 = vector.shape_cast %0 : vector<1x4x256xf32> to vector<4x256xf32>
    %c1 = arith.constant 1 : index
    %c0_2 = arith.constant 0 : index
    %c0_3 = arith.constant 0 : index
    %2 = vector.load %arg0[%c1, %c0_2, %c0_3] : memref<2x4x256xf32, #tpu.memory_space<vmem>>, vector<1x4x256xf32>
    %3 = vector.shape_cast %2 : vector<1x4x256xf32> to vector<4x256xf32>
    %4 = tpu.concatenate %1, %3 in 1 : vector<4x256xf32>, vector<4x256xf32> -> vector<4x512xf32>
    %c0_4 = arith.constant 0 : index
    %c0_5 = arith.constant 0 : index
    %5 = vector.load %arg1[%c0_4, %c0_5] : memref<8x4xf32, #tpu.memory_space<vmem>>, vector<8x4xf32>
    %c0_6 = arith.constant 0 : index
    %c0_7 = arith.constant 0 : index
    %6 = vector.load %arg2[%c0_6, %c0_7] : memref<8x1xf32, #tpu.memory_space<vmem>>, vector<8x1xf32>
    %7 = vector.extract_strided_slice %5 {offsets = [0, 0], sizes = [8, 1], strides = [1, 1]} : vector<8x4xf32> to vector<8x1xf32>
    %8 = vector.extract_strided_slice %4 {offsets = [0, 0], sizes = [1, 512], strides = [1, 1]} : vector<4x512xf32> to vector<1x512xf32>
    %9 = vector.broadcast %7 : vector<8x1xf32> to vector<8x512xf32>
    %10 = vector.broadcast %8 : vector<1x512xf32> to vector<8x512xf32>
    %11 = arith.mulf %9, %10 : vector<8x512xf32>
    %12 = vector.extract_strided_slice %5 {offsets = [0, 1], sizes = [8, 1], strides = [1, 1]} : vector<8x4xf32> to vector<8x1xf32>
    %13 = vector.extract_strided_slice %4 {offsets = [1, 0], sizes = [1, 512], strides = [1, 1]} : vector<4x512xf32> to vector<1x512xf32>
    %14 = vector.broadcast %12 : vector<8x1xf32> to vector<8x512xf32>
    %15 = vector.broadcast %13 : vector<1x512xf32> to vector<8x512xf32>
    %16 = arith.mulf %14, %15 : vector<8x512xf32>
    %17 = arith.addf %11, %16 : vector<8x512xf32>
    %18 = vector.extract_strided_slice %5 {offsets = [0, 2], sizes = [8, 1], strides = [1, 1]} : vector<8x4xf32> to vector<8x1xf32>
    %19 = vector.extract_strided_slice %4 {offsets = [2, 0], sizes = [1, 512], strides = [1, 1]} : vector<4x512xf32> to vector<1x512xf32>
    %20 = vector.broadcast %18 : vector<8x1xf32> to vector<8x512xf32>
    %21 = vector.broadcast %19 : vector<1x512xf32> to vector<8x512xf32>
    %22 = arith.mulf %20, %21 : vector<8x512xf32>
    %23 = arith.addf %17, %22 : vector<8x512xf32>
    %24 = vector.extract_strided_slice %5 {offsets = [0, 3], sizes = [8, 1], strides = [1, 1]} : vector<8x4xf32> to vector<8x1xf32>
    %25 = vector.extract_strided_slice %4 {offsets = [3, 0], sizes = [1, 512], strides = [1, 1]} : vector<4x512xf32> to vector<1x512xf32>
    %26 = vector.broadcast %24 : vector<8x1xf32> to vector<8x512xf32>
    %27 = vector.broadcast %25 : vector<1x512xf32> to vector<8x512xf32>
    %28 = arith.mulf %26, %27 : vector<8x512xf32>
    %29 = arith.addf %23, %28 : vector<8x512xf32>
    %30 = vector.broadcast %6 : vector<8x1xf32> to vector<8x512xf32>
    %31 = arith.addf %29, %30 : vector<8x512xf32>
    %c0_8 = arith.constant 0 : index
    %c0_9 = arith.constant 0 : index
    %32 = vector.load %arg3[%c0_8, %c0_9] : memref<8x4xf32, #tpu.memory_space<vmem>>, vector<8x4xf32>
    %c0_10 = arith.constant 0 : index
    %c0_11 = arith.constant 0 : index
    %33 = vector.load %arg4[%c0_10, %c0_11] : memref<8x1xf32, #tpu.memory_space<vmem>>, vector<8x1xf32>
    %34 = vector.extract_strided_slice %32 {offsets = [0, 0], sizes = [8, 1], strides = [1, 1]} : vector<8x4xf32> to vector<8x1xf32>
    %35 = vector.extract_strided_slice %4 {offsets = [0, 0], sizes = [1, 512], strides = [1, 1]} : vector<4x512xf32> to vector<1x512xf32>
    %36 = vector.broadcast %34 : vector<8x1xf32> to vector<8x512xf32>
    %37 = vector.broadcast %35 : vector<1x512xf32> to vector<8x512xf32>
    %38 = arith.mulf %36, %37 : vector<8x512xf32>
    %39 = vector.extract_strided_slice %32 {offsets = [0, 1], sizes = [8, 1], strides = [1, 1]} : vector<8x4xf32> to vector<8x1xf32>
    %40 = vector.extract_strided_slice %4 {offsets = [1, 0], sizes = [1, 512], strides = [1, 1]} : vector<4x512xf32> to vector<1x512xf32>
    %41 = vector.broadcast %39 : vector<8x1xf32> to vector<8x512xf32>
    %42 = vector.broadcast %40 : vector<1x512xf32> to vector<8x512xf32>
    %43 = arith.mulf %41, %42 : vector<8x512xf32>
    %44 = arith.addf %38, %43 : vector<8x512xf32>
    %45 = vector.extract_strided_slice %32 {offsets = [0, 2], sizes = [8, 1], strides = [1, 1]} : vector<8x4xf32> to vector<8x1xf32>
    %46 = vector.extract_strided_slice %4 {offsets = [2, 0], sizes = [1, 512], strides = [1, 1]} : vector<4x512xf32> to vector<1x512xf32>
    %47 = vector.broadcast %45 : vector<8x1xf32> to vector<8x512xf32>
    %48 = vector.broadcast %46 : vector<1x512xf32> to vector<8x512xf32>
    %49 = arith.mulf %47, %48 : vector<8x512xf32>
    %50 = arith.addf %44, %49 : vector<8x512xf32>
    %51 = vector.extract_strided_slice %32 {offsets = [0, 3], sizes = [8, 1], strides = [1, 1]} : vector<8x4xf32> to vector<8x1xf32>
    %52 = vector.extract_strided_slice %4 {offsets = [3, 0], sizes = [1, 512], strides = [1, 1]} : vector<4x512xf32> to vector<1x512xf32>
    %53 = vector.broadcast %51 : vector<8x1xf32> to vector<8x512xf32>
    %54 = vector.broadcast %52 : vector<1x512xf32> to vector<8x512xf32>
    %55 = arith.mulf %53, %54 : vector<8x512xf32>
    %56 = arith.addf %50, %55 : vector<8x512xf32>
    %57 = vector.broadcast %33 : vector<8x1xf32> to vector<8x512xf32>
    %58 = arith.addf %56, %57 : vector<8x512xf32>
    %c0_12 = arith.constant 0 : index
    %c0_13 = arith.constant 0 : index
    %59 = vector.load %arg5[%c0_12, %c0_13] : memref<8x4xf32, #tpu.memory_space<vmem>>, vector<8x4xf32>
    %c0_14 = arith.constant 0 : index
    %c0_15 = arith.constant 0 : index
    %60 = vector.load %arg6[%c0_14, %c0_15] : memref<8x1xf32, #tpu.memory_space<vmem>>, vector<8x1xf32>
    %61 = vector.extract_strided_slice %59 {offsets = [0, 0], sizes = [8, 1], strides = [1, 1]} : vector<8x4xf32> to vector<8x1xf32>
    %62 = vector.extract_strided_slice %4 {offsets = [0, 0], sizes = [1, 512], strides = [1, 1]} : vector<4x512xf32> to vector<1x512xf32>
    %63 = vector.broadcast %61 : vector<8x1xf32> to vector<8x512xf32>
    %64 = vector.broadcast %62 : vector<1x512xf32> to vector<8x512xf32>
    %65 = arith.mulf %63, %64 : vector<8x512xf32>
    %66 = vector.extract_strided_slice %59 {offsets = [0, 1], sizes = [8, 1], strides = [1, 1]} : vector<8x4xf32> to vector<8x1xf32>
    %67 = vector.extract_strided_slice %4 {offsets = [1, 0], sizes = [1, 512], strides = [1, 1]} : vector<4x512xf32> to vector<1x512xf32>
    %68 = vector.broadcast %66 : vector<8x1xf32> to vector<8x512xf32>
    %69 = vector.broadcast %67 : vector<1x512xf32> to vector<8x512xf32>
    %70 = arith.mulf %68, %69 : vector<8x512xf32>
    %71 = arith.addf %65, %70 : vector<8x512xf32>
    %72 = vector.extract_strided_slice %59 {offsets = [0, 2], sizes = [8, 1], strides = [1, 1]} : vector<8x4xf32> to vector<8x1xf32>
    %73 = vector.extract_strided_slice %4 {offsets = [2, 0], sizes = [1, 512], strides = [1, 1]} : vector<4x512xf32> to vector<1x512xf32>
    %74 = vector.broadcast %72 : vector<8x1xf32> to vector<8x512xf32>
    %75 = vector.broadcast %73 : vector<1x512xf32> to vector<8x512xf32>
    %76 = arith.mulf %74, %75 : vector<8x512xf32>
    %77 = arith.addf %71, %76 : vector<8x512xf32>
    %78 = vector.extract_strided_slice %59 {offsets = [0, 3], sizes = [8, 1], strides = [1, 1]} : vector<8x4xf32> to vector<8x1xf32>
    %79 = vector.extract_strided_slice %4 {offsets = [3, 0], sizes = [1, 512], strides = [1, 1]} : vector<4x512xf32> to vector<1x512xf32>
    %80 = vector.broadcast %78 : vector<8x1xf32> to vector<8x512xf32>
    %81 = vector.broadcast %79 : vector<1x512xf32> to vector<8x512xf32>
    %82 = arith.mulf %80, %81 : vector<8x512xf32>
    %83 = arith.addf %77, %82 : vector<8x512xf32>
    %84 = vector.broadcast %60 : vector<8x1xf32> to vector<8x512xf32>
    %85 = arith.addf %83, %84 : vector<8x512xf32>
    %86 = vector.extract_strided_slice %31 {offsets = [0, 0], sizes = [8, 256], strides = [1, 1]} : vector<8x512xf32> to vector<8x256xf32>
    %87 = vector.extract_strided_slice %31 {offsets = [0, 256], sizes = [8, 256], strides = [1, 1]} : vector<8x512xf32> to vector<8x256xf32>
    %88 = vector.shape_cast %86 : vector<8x256xf32> to vector<1x8x256xf32>
    %89 = vector.shape_cast %87 : vector<8x256xf32> to vector<1x8x256xf32>
    %90 = tpu.concatenate %88, %89 in 0 : vector<1x8x256xf32>, vector<1x8x256xf32> -> vector<2x8x256xf32>
    %91 = vector.extract_strided_slice %58 {offsets = [0, 0], sizes = [8, 256], strides = [1, 1]} : vector<8x512xf32> to vector<8x256xf32>
    %92 = vector.extract_strided_slice %58 {offsets = [0, 256], sizes = [8, 256], strides = [1, 1]} : vector<8x512xf32> to vector<8x256xf32>
    %93 = vector.shape_cast %91 : vector<8x256xf32> to vector<1x8x256xf32>
    %94 = vector.shape_cast %92 : vector<8x256xf32> to vector<1x8x256xf32>
    %95 = tpu.concatenate %93, %94 in 0 : vector<1x8x256xf32>, vector<1x8x256xf32> -> vector<2x8x256xf32>
    %96 = vector.extract_strided_slice %85 {offsets = [0, 0], sizes = [8, 256], strides = [1, 1]} : vector<8x512xf32> to vector<8x256xf32>
    %97 = vector.extract_strided_slice %85 {offsets = [0, 256], sizes = [8, 256], strides = [1, 1]} : vector<8x512xf32> to vector<8x256xf32>
    %98 = vector.shape_cast %96 : vector<8x256xf32> to vector<1x8x256xf32>
    %99 = vector.shape_cast %97 : vector<8x256xf32> to vector<1x8x256xf32>
    %100 = tpu.concatenate %98, %99 in 0 : vector<1x8x256xf32>, vector<1x8x256xf32> -> vector<2x8x256xf32>
    "tpu.trace_start"() <{level = 10 : i32, message = "bis,bjs->bij"}> : () -> ()
    %cst = arith.constant dense<0.000000e+00> : vector<2x8x8xf32>
    %101 = tpu.matmul %90, %95, %cst {dimension_numbers = #tpu.dot_dimension_numbers<[2], [2], [1], [1], [0, 0, 0, 1, 1, 1], [0], [0]>} : vector<2x8x256xf32>, vector<2x8x256xf32>, vector<2x8x8xf32> -> vector<2x8x8xf32>
    "tpu.trace_stop"() : () -> ()
    %cst_16 = arith.constant 6.250000e-02 : f32
    %102 = vector.broadcast %cst_16 : f32 to vector<2x8x8xf32>
    %103 = arith.mulf %101, %102 : vector<2x8x8xf32>
    %cst_17 = arith.constant dense<0xFF800000> : vector<2x8xf32>
    %104 = vector.multi_reduction <maximumf>, %103, %cst_17 [2] : vector<2x8x8xf32> to vector<2x8xf32>
    %105 = vector.shape_cast %104 : vector<2x8xf32> to vector<2x8x1xf32>
    %106 = vector.broadcast %105 : vector<2x8x1xf32> to vector<2x8x8xf32>
    %107 = arith.subf %103, %106 : vector<2x8x8xf32>
    %108 = math.exp %107 : vector<2x8x8xf32>
    %cst_18 = arith.constant dense<0.000000e+00> : vector<2x8xf32>
    %109 = vector.multi_reduction <add>, %108, %cst_18 [2] : vector<2x8x8xf32> to vector<2x8xf32>
    %110 = vector.shape_cast %109 : vector<2x8xf32> to vector<2x8x1xf32>
    %111 = vector.broadcast %110 : vector<2x8x1xf32> to vector<2x8x8xf32>
    %112 = arith.divf %108, %111 : vector<2x8x8xf32>
    "tpu.trace_start"() <{level = 10 : i32, message = "bij,bjs->bis"}> : () -> ()
    %cst_19 = arith.constant dense<0.000000e+00> : vector<2x8x256xf32>
    %113 = tpu.matmul %112, %100, %cst_19 {dimension_numbers = #tpu.dot_dimension_numbers<[2], [1], [1], [2], [0, 0, 0, 1, 1, 2], [0], [0]>} : vector<2x8x8xf32>, vector<2x8x256xf32>, vector<2x8x256xf32> -> vector<2x8x256xf32>
    "tpu.trace_stop"() : () -> ()
    %114 = vector.extract_strided_slice %113 {offsets = [0, 0, 0], sizes = [1, 8, 256], strides = [1, 1, 1]} : vector<2x8x256xf32> to vector<1x8x256xf32>
    %115 = vector.shape_cast %114 : vector<1x8x256xf32> to vector<8x256xf32>
    %116 = vector.extract_strided_slice %115 {offsets = [0, 0], sizes = [8, 32], strides = [1, 1]} : vector<8x256xf32> to vector<8x32xf32>
    %117 = vector.extract_strided_slice %113 {offsets = [1, 0, 0], sizes = [1, 8, 256], strides = [1, 1, 1]} : vector<2x8x256xf32> to vector<1x8x256xf32>
    %118 = vector.shape_cast %117 : vector<1x8x256xf32> to vector<8x256xf32>
    %119 = vector.extract_strided_slice %118 {offsets = [0, 0], sizes = [8, 32], strides = [1, 1]} : vector<8x256xf32> to vector<8x32xf32>
    %120 = tpu.concatenate %116, %119 in 1 : vector<8x32xf32>, vector<8x32xf32> -> vector<8x64xf32>
    %121 = vector.shape_cast %120 : vector<8x64xf32> to vector<1x8x64xf32>
    %cst_20 = arith.constant dense<0.000000e+00> : vector<1xf32>
    %122 = vector.multi_reduction <add>, %121, %cst_20 [1, 2] : vector<1x8x64xf32> to vector<1xf32>
    %123 = vector.shape_cast %122 : vector<1xf32> to vector<1x1x1xf32>
    %124 = vector.extract %123[0, 0, 0] : f32 from vector<1x1x1xf32>
    %cst_21 = arith.constant 0.001953125 : f32
    %125 = arith.mulf %124, %cst_21 : f32
    %126 = vector.broadcast %125 : f32 to vector<8x64xf32>
    %127 = arith.subf %120, %126 : vector<8x64xf32>
    %128 = arith.mulf %127, %127 : vector<8x64xf32>
    %129 = vector.shape_cast %128 : vector<8x64xf32> to vector<1x8x64xf32>
    %cst_22 = arith.constant dense<0.000000e+00> : vector<1xf32>
    %130 = vector.multi_reduction <add>, %129, %cst_22 [1, 2] : vector<1x8x64xf32> to vector<1xf32>
    %131 = vector.shape_cast %130 : vector<1xf32> to vector<1x1x1xf32>
    %132 = vector.extract %131[0, 0, 0] : f32 from vector<1x1x1xf32>
    %cst_23 = arith.constant 0.001953125 : f32
    %133 = arith.mulf %132, %cst_23 : f32
    %c0_24 = arith.constant 0 : index
    %134 = memref.load %arg7[%c0_24] : memref<8xf32, #tpu.memory_space<smem>>
    %cst_25 = arith.constant 9.99999974E-5 : f32
    %135 = arith.addf %133, %cst_25 : f32
    %136 = math.rsqrt %135 : f32
    %137 = arith.mulf %134, %136 : f32
    %c0_26 = arith.constant 0 : index
    %138 = memref.load %arg8[%c0_26] : memref<8xf32, #tpu.memory_space<smem>>
    %139 = arith.mulf %125, %137 : f32
    %140 = arith.subf %138, %139 : f32
    %141 = vector.broadcast %137 : f32 to vector<8x64xf32>
    %142 = arith.mulf %120, %141 : vector<8x64xf32>
    %143 = vector.broadcast %140 : f32 to vector<8x64xf32>
    %144 = arith.addf %142, %143 : vector<8x64xf32>
    %cst_27 = arith.constant 0.000000e+00 : f32
    %145 = vector.broadcast %cst_27 : f32 to vector<8x64xf32>
    %146 = arith.cmpf oge, %144, %145 : vector<8x64xf32>
    %cst_28 = arith.constant 0.00999999977 : f32
    %147 = vector.broadcast %cst_28 : f32 to vector<8x64xf32>
    %148 = arith.mulf %147, %144 : vector<8x64xf32>
    %149 = arith.select %146, %144, %148 : vector<8x64xi1>, vector<8x64xf32>
    %150 = vector.extract_strided_slice %113 {offsets = [0, 0, 0], sizes = [1, 8, 256], strides = [1, 1, 1]} : vector<2x8x256xf32> to vector<1x8x256xf32>
    %151 = vector.shape_cast %150 : vector<1x8x256xf32> to vector<8x256xf32>
    %152 = vector.extract_strided_slice %151 {offsets = [0, 32], sizes = [8, 32], strides = [1, 1]} : vector<8x256xf32> to vector<8x32xf32>
    %153 = vector.extract_strided_slice %113 {offsets = [1, 0, 0], sizes = [1, 8, 256], strides = [1, 1, 1]} : vector<2x8x256xf32> to vector<1x8x256xf32>
    %154 = vector.shape_cast %153 : vector<1x8x256xf32> to vector<8x256xf32>
    %155 = vector.extract_strided_slice %154 {offsets = [0, 32], sizes = [8, 32], strides = [1, 1]} : vector<8x256xf32> to vector<8x32xf32>
    %156 = tpu.concatenate %152, %155 in 1 : vector<8x32xf32>, vector<8x32xf32> -> vector<8x64xf32>
    %157 = vector.shape_cast %156 : vector<8x64xf32> to vector<1x8x64xf32>
    %cst_29 = arith.constant dense<0.000000e+00> : vector<1xf32>
    %158 = vector.multi_reduction <add>, %157, %cst_29 [1, 2] : vector<1x8x64xf32> to vector<1xf32>
    %159 = vector.shape_cast %158 : vector<1xf32> to vector<1x1x1xf32>
    %160 = vector.extract %159[0, 0, 0] : f32 from vector<1x1x1xf32>
    %cst_30 = arith.constant 0.001953125 : f32
    %161 = arith.mulf %160, %cst_30 : f32
    %162 = vector.broadcast %161 : f32 to vector<8x64xf32>
    %163 = arith.subf %156, %162 : vector<8x64xf32>
    %164 = arith.mulf %163, %163 : vector<8x64xf32>
    %165 = vector.shape_cast %164 : vector<8x64xf32> to vector<1x8x64xf32>
    %cst_31 = arith.constant dense<0.000000e+00> : vector<1xf32>
    %166 = vector.multi_reduction <add>, %165, %cst_31 [1, 2] : vector<1x8x64xf32> to vector<1xf32>
    %167 = vector.shape_cast %166 : vector<1xf32> to vector<1x1x1xf32>
    %168 = vector.extract %167[0, 0, 0] : f32 from vector<1x1x1xf32>
    %cst_32 = arith.constant 0.001953125 : f32
    %169 = arith.mulf %168, %cst_32 : f32
    %c1_33 = arith.constant 1 : index
    %170 = memref.load %arg7[%c1_33] : memref<8xf32, #tpu.memory_space<smem>>
    %cst_34 = arith.constant 9.99999974E-5 : f32
    %171 = arith.addf %169, %cst_34 : f32
    %172 = math.rsqrt %171 : f32
    %173 = arith.mulf %170, %172 : f32
    %c1_35 = arith.constant 1 : index
    %174 = memref.load %arg8[%c1_35] : memref<8xf32, #tpu.memory_space<smem>>
    %175 = arith.mulf %161, %173 : f32
    %176 = arith.subf %174, %175 : f32
    %177 = vector.broadcast %173 : f32 to vector<8x64xf32>
    %178 = arith.mulf %156, %177 : vector<8x64xf32>
    %179 = vector.broadcast %176 : f32 to vector<8x64xf32>
    %180 = arith.addf %178, %179 : vector<8x64xf32>
    %cst_36 = arith.constant 0.000000e+00 : f32
    %181 = vector.broadcast %cst_36 : f32 to vector<8x64xf32>
    %182 = arith.cmpf oge, %180, %181 : vector<8x64xf32>
    %cst_37 = arith.constant 0.00999999977 : f32
    %183 = vector.broadcast %cst_37 : f32 to vector<8x64xf32>
    %184 = arith.mulf %183, %180 : vector<8x64xf32>
    %185 = arith.select %182, %180, %184 : vector<8x64xi1>, vector<8x64xf32>
    %186 = vector.extract_strided_slice %113 {offsets = [0, 0, 0], sizes = [1, 8, 256], strides = [1, 1, 1]} : vector<2x8x256xf32> to vector<1x8x256xf32>
    %187 = vector.shape_cast %186 : vector<1x8x256xf32> to vector<8x256xf32>
    %188 = vector.extract_strided_slice %187 {offsets = [0, 64], sizes = [8, 32], strides = [1, 1]} : vector<8x256xf32> to vector<8x32xf32>
    %189 = vector.extract_strided_slice %113 {offsets = [1, 0, 0], sizes = [1, 8, 256], strides = [1, 1, 1]} : vector<2x8x256xf32> to vector<1x8x256xf32>
    %190 = vector.shape_cast %189 : vector<1x8x256xf32> to vector<8x256xf32>
    %191 = vector.extract_strided_slice %190 {offsets = [0, 64], sizes = [8, 32], strides = [1, 1]} : vector<8x256xf32> to vector<8x32xf32>
    %192 = tpu.concatenate %188, %191 in 1 : vector<8x32xf32>, vector<8x32xf32> -> vector<8x64xf32>
    %193 = vector.shape_cast %192 : vector<8x64xf32> to vector<1x8x64xf32>
    %cst_38 = arith.constant dense<0.000000e+00> : vector<1xf32>
    %194 = vector.multi_reduction <add>, %193, %cst_38 [1, 2] : vector<1x8x64xf32> to vector<1xf32>
    %195 = vector.shape_cast %194 : vector<1xf32> to vector<1x1x1xf32>
    %196 = vector.extract %195[0, 0, 0] : f32 from vector<1x1x1xf32>
    %cst_39 = arith.constant 0.001953125 : f32
    %197 = arith.mulf %196, %cst_39 : f32
    %198 = vector.broadcast %197 : f32 to vector<8x64xf32>
    %199 = arith.subf %192, %198 : vector<8x64xf32>
    %200 = arith.mulf %199, %199 : vector<8x64xf32>
    %201 = vector.shape_cast %200 : vector<8x64xf32> to vector<1x8x64xf32>
    %cst_40 = arith.constant dense<0.000000e+00> : vector<1xf32>
    %202 = vector.multi_reduction <add>, %201, %cst_40 [1, 2] : vector<1x8x64xf32> to vector<1xf32>
    %203 = vector.shape_cast %202 : vector<1xf32> to vector<1x1x1xf32>
    %204 = vector.extract %203[0, 0, 0] : f32 from vector<1x1x1xf32>
    %cst_41 = arith.constant 0.001953125 : f32
    %205 = arith.mulf %204, %cst_41 : f32
    %c2 = arith.constant 2 : index
    %206 = memref.load %arg7[%c2] : memref<8xf32, #tpu.memory_space<smem>>
    %cst_42 = arith.constant 9.99999974E-5 : f32
    %207 = arith.addf %205, %cst_42 : f32
    %208 = math.rsqrt %207 : f32
    %209 = arith.mulf %206, %208 : f32
    %c2_43 = arith.constant 2 : index
    %210 = memref.load %arg8[%c2_43] : memref<8xf32, #tpu.memory_space<smem>>
    %211 = arith.mulf %197, %209 : f32
    %212 = arith.subf %210, %211 : f32
    %213 = vector.broadcast %209 : f32 to vector<8x64xf32>
    %214 = arith.mulf %192, %213 : vector<8x64xf32>
    %215 = vector.broadcast %212 : f32 to vector<8x64xf32>
    %216 = arith.addf %214, %215 : vector<8x64xf32>
    %cst_44 = arith.constant 0.000000e+00 : f32
    %217 = vector.broadcast %cst_44 : f32 to vector<8x64xf32>
    %218 = arith.cmpf oge, %216, %217 : vector<8x64xf32>
    %cst_45 = arith.constant 0.00999999977 : f32
    %219 = vector.broadcast %cst_45 : f32 to vector<8x64xf32>
    %220 = arith.mulf %219, %216 : vector<8x64xf32>
    %221 = arith.select %218, %216, %220 : vector<8x64xi1>, vector<8x64xf32>
    %222 = vector.extract_strided_slice %113 {offsets = [0, 0, 0], sizes = [1, 8, 256], strides = [1, 1, 1]} : vector<2x8x256xf32> to vector<1x8x256xf32>
    %223 = vector.shape_cast %222 : vector<1x8x256xf32> to vector<8x256xf32>
    %224 = vector.extract_strided_slice %223 {offsets = [0, 96], sizes = [8, 32], strides = [1, 1]} : vector<8x256xf32> to vector<8x32xf32>
    %225 = vector.extract_strided_slice %113 {offsets = [1, 0, 0], sizes = [1, 8, 256], strides = [1, 1, 1]} : vector<2x8x256xf32> to vector<1x8x256xf32>
    %226 = vector.shape_cast %225 : vector<1x8x256xf32> to vector<8x256xf32>
    %227 = vector.extract_strided_slice %226 {offsets = [0, 96], sizes = [8, 32], strides = [1, 1]} : vector<8x256xf32> to vector<8x32xf32>
    %228 = tpu.concatenate %224, %227 in 1 : vector<8x32xf32>, vector<8x32xf32> -> vector<8x64xf32>
    %229 = vector.shape_cast %228 : vector<8x64xf32> to vector<1x8x64xf32>
    %cst_46 = arith.constant dense<0.000000e+00> : vector<1xf32>
    %230 = vector.multi_reduction <add>, %229, %cst_46 [1, 2] : vector<1x8x64xf32> to vector<1xf32>
    %231 = vector.shape_cast %230 : vector<1xf32> to vector<1x1x1xf32>
    %232 = vector.extract %231[0, 0, 0] : f32 from vector<1x1x1xf32>
    %cst_47 = arith.constant 0.001953125 : f32
    %233 = arith.mulf %232, %cst_47 : f32
    %234 = vector.broadcast %233 : f32 to vector<8x64xf32>
    %235 = arith.subf %228, %234 : vector<8x64xf32>
    %236 = arith.mulf %235, %235 : vector<8x64xf32>
    %237 = vector.shape_cast %236 : vector<8x64xf32> to vector<1x8x64xf32>
    %cst_48 = arith.constant dense<0.000000e+00> : vector<1xf32>
    %238 = vector.multi_reduction <add>, %237, %cst_48 [1, 2] : vector<1x8x64xf32> to vector<1xf32>
    %239 = vector.shape_cast %238 : vector<1xf32> to vector<1x1x1xf32>
    %240 = vector.extract %239[0, 0, 0] : f32 from vector<1x1x1xf32>
    %cst_49 = arith.constant 0.001953125 : f32
    %241 = arith.mulf %240, %cst_49 : f32
    %c3 = arith.constant 3 : index
    %242 = memref.load %arg7[%c3] : memref<8xf32, #tpu.memory_space<smem>>
    %cst_50 = arith.constant 9.99999974E-5 : f32
    %243 = arith.addf %241, %cst_50 : f32
    %244 = math.rsqrt %243 : f32
    %245 = arith.mulf %242, %244 : f32
    %c3_51 = arith.constant 3 : index
    %246 = memref.load %arg8[%c3_51] : memref<8xf32, #tpu.memory_space<smem>>
    %247 = arith.mulf %233, %245 : f32
    %248 = arith.subf %246, %247 : f32
    %249 = vector.broadcast %245 : f32 to vector<8x64xf32>
    %250 = arith.mulf %228, %249 : vector<8x64xf32>
    %251 = vector.broadcast %248 : f32 to vector<8x64xf32>
    %252 = arith.addf %250, %251 : vector<8x64xf32>
    %cst_52 = arith.constant 0.000000e+00 : f32
    %253 = vector.broadcast %cst_52 : f32 to vector<8x64xf32>
    %254 = arith.cmpf oge, %252, %253 : vector<8x64xf32>
    %cst_53 = arith.constant 0.00999999977 : f32
    %255 = vector.broadcast %cst_53 : f32 to vector<8x64xf32>
    %256 = arith.mulf %255, %252 : vector<8x64xf32>
    %257 = arith.select %254, %252, %256 : vector<8x64xi1>, vector<8x64xf32>
    %258 = vector.extract_strided_slice %113 {offsets = [0, 0, 0], sizes = [1, 8, 256], strides = [1, 1, 1]} : vector<2x8x256xf32> to vector<1x8x256xf32>
    %259 = vector.shape_cast %258 : vector<1x8x256xf32> to vector<8x256xf32>
    %260 = vector.extract_strided_slice %259 {offsets = [0, 128], sizes = [8, 32], strides = [1, 1]} : vector<8x256xf32> to vector<8x32xf32>
    %261 = vector.extract_strided_slice %113 {offsets = [1, 0, 0], sizes = [1, 8, 256], strides = [1, 1, 1]} : vector<2x8x256xf32> to vector<1x8x256xf32>
    %262 = vector.shape_cast %261 : vector<1x8x256xf32> to vector<8x256xf32>
    %263 = vector.extract_strided_slice %262 {offsets = [0, 128], sizes = [8, 32], strides = [1, 1]} : vector<8x256xf32> to vector<8x32xf32>
    %264 = tpu.concatenate %260, %263 in 1 : vector<8x32xf32>, vector<8x32xf32> -> vector<8x64xf32>
    %265 = vector.shape_cast %264 : vector<8x64xf32> to vector<1x8x64xf32>
    %cst_54 = arith.constant dense<0.000000e+00> : vector<1xf32>
    %266 = vector.multi_reduction <add>, %265, %cst_54 [1, 2] : vector<1x8x64xf32> to vector<1xf32>
    %267 = vector.shape_cast %266 : vector<1xf32> to vector<1x1x1xf32>
    %268 = vector.extract %267[0, 0, 0] : f32 from vector<1x1x1xf32>
    %cst_55 = arith.constant 0.001953125 : f32
    %269 = arith.mulf %268, %cst_55 : f32
    %270 = vector.broadcast %269 : f32 to vector<8x64xf32>
    %271 = arith.subf %264, %270 : vector<8x64xf32>
    %272 = arith.mulf %271, %271 : vector<8x64xf32>
    %273 = vector.shape_cast %272 : vector<8x64xf32> to vector<1x8x64xf32>
    %cst_56 = arith.constant dense<0.000000e+00> : vector<1xf32>
    %274 = vector.multi_reduction <add>, %273, %cst_56 [1, 2] : vector<1x8x64xf32> to vector<1xf32>
    %275 = vector.shape_cast %274 : vector<1xf32> to vector<1x1x1xf32>
    %276 = vector.extract %275[0, 0, 0] : f32 from vector<1x1x1xf32>
    %cst_57 = arith.constant 0.001953125 : f32
    %277 = arith.mulf %276, %cst_57 : f32
    %c4 = arith.constant 4 : index
    %278 = memref.load %arg7[%c4] : memref<8xf32, #tpu.memory_space<smem>>
    %cst_58 = arith.constant 9.99999974E-5 : f32
    %279 = arith.addf %277, %cst_58 : f32
    %280 = math.rsqrt %279 : f32
    %281 = arith.mulf %278, %280 : f32
    %c4_59 = arith.constant 4 : index
    %282 = memref.load %arg8[%c4_59] : memref<8xf32, #tpu.memory_space<smem>>
    %283 = arith.mulf %269, %281 : f32
    %284 = arith.subf %282, %283 : f32
    %285 = vector.broadcast %281 : f32 to vector<8x64xf32>
    %286 = arith.mulf %264, %285 : vector<8x64xf32>
    %287 = vector.broadcast %284 : f32 to vector<8x64xf32>
    %288 = arith.addf %286, %287 : vector<8x64xf32>
    %cst_60 = arith.constant 0.000000e+00 : f32
    %289 = vector.broadcast %cst_60 : f32 to vector<8x64xf32>
    %290 = arith.cmpf oge, %288, %289 : vector<8x64xf32>
    %cst_61 = arith.constant 0.00999999977 : f32
    %291 = vector.broadcast %cst_61 : f32 to vector<8x64xf32>
    %292 = arith.mulf %291, %288 : vector<8x64xf32>
    %293 = arith.select %290, %288, %292 : vector<8x64xi1>, vector<8x64xf32>
    %294 = vector.extract_strided_slice %113 {offsets = [0, 0, 0], sizes = [1, 8, 256], strides = [1, 1, 1]} : vector<2x8x256xf32> to vector<1x8x256xf32>
    %295 = vector.shape_cast %294 : vector<1x8x256xf32> to vector<8x256xf32>
    %296 = vector.extract_strided_slice %295 {offsets = [0, 160], sizes = [8, 32], strides = [1, 1]} : vector<8x256xf32> to vector<8x32xf32>
    %297 = vector.extract_strided_slice %113 {offsets = [1, 0, 0], sizes = [1, 8, 256], strides = [1, 1, 1]} : vector<2x8x256xf32> to vector<1x8x256xf32>
    %298 = vector.shape_cast %297 : vector<1x8x256xf32> to vector<8x256xf32>
    %299 = vector.extract_strided_slice %298 {offsets = [0, 160], sizes = [8, 32], strides = [1, 1]} : vector<8x256xf32> to vector<8x32xf32>
    %300 = tpu.concatenate %296, %299 in 1 : vector<8x32xf32>, vector<8x32xf32> -> vector<8x64xf32>
    %301 = vector.shape_cast %300 : vector<8x64xf32> to vector<1x8x64xf32>
    %cst_62 = arith.constant dense<0.000000e+00> : vector<1xf32>
    %302 = vector.multi_reduction <add>, %301, %cst_62 [1, 2] : vector<1x8x64xf32> to vector<1xf32>
    %303 = vector.shape_cast %302 : vector<1xf32> to vector<1x1x1xf32>
    %304 = vector.extract %303[0, 0, 0] : f32 from vector<1x1x1xf32>
    %cst_63 = arith.constant 0.001953125 : f32
    %305 = arith.mulf %304, %cst_63 : f32
    %306 = vector.broadcast %305 : f32 to vector<8x64xf32>
    %307 = arith.subf %300, %306 : vector<8x64xf32>
    %308 = arith.mulf %307, %307 : vector<8x64xf32>
    %309 = vector.shape_cast %308 : vector<8x64xf32> to vector<1x8x64xf32>
    %cst_64 = arith.constant dense<0.000000e+00> : vector<1xf32>
    %310 = vector.multi_reduction <add>, %309, %cst_64 [1, 2] : vector<1x8x64xf32> to vector<1xf32>
    %311 = vector.shape_cast %310 : vector<1xf32> to vector<1x1x1xf32>
    %312 = vector.extract %311[0, 0, 0] : f32 from vector<1x1x1xf32>
    %cst_65 = arith.constant 0.001953125 : f32
    %313 = arith.mulf %312, %cst_65 : f32
    %c5 = arith.constant 5 : index
    %314 = memref.load %arg7[%c5] : memref<8xf32, #tpu.memory_space<smem>>
    %cst_66 = arith.constant 9.99999974E-5 : f32
    %315 = arith.addf %313, %cst_66 : f32
    %316 = math.rsqrt %315 : f32
    %317 = arith.mulf %314, %316 : f32
    %c5_67 = arith.constant 5 : index
    %318 = memref.load %arg8[%c5_67] : memref<8xf32, #tpu.memory_space<smem>>
    %319 = arith.mulf %305, %317 : f32
    %320 = arith.subf %318, %319 : f32
    %321 = vector.broadcast %317 : f32 to vector<8x64xf32>
    %322 = arith.mulf %300, %321 : vector<8x64xf32>
    %323 = vector.broadcast %320 : f32 to vector<8x64xf32>
    %324 = arith.addf %322, %323 : vector<8x64xf32>
    %cst_68 = arith.constant 0.000000e+00 : f32
    %325 = vector.broadcast %cst_68 : f32 to vector<8x64xf32>
    %326 = arith.cmpf oge, %324, %325 : vector<8x64xf32>
    %cst_69 = arith.constant 0.00999999977 : f32
    %327 = vector.broadcast %cst_69 : f32 to vector<8x64xf32>
    %328 = arith.mulf %327, %324 : vector<8x64xf32>
    %329 = arith.select %326, %324, %328 : vector<8x64xi1>, vector<8x64xf32>
    %330 = vector.extract_strided_slice %113 {offsets = [0, 0, 0], sizes = [1, 8, 256], strides = [1, 1, 1]} : vector<2x8x256xf32> to vector<1x8x256xf32>
    %331 = vector.shape_cast %330 : vector<1x8x256xf32> to vector<8x256xf32>
    %332 = vector.extract_strided_slice %331 {offsets = [0, 192], sizes = [8, 32], strides = [1, 1]} : vector<8x256xf32> to vector<8x32xf32>
    %333 = vector.extract_strided_slice %113 {offsets = [1, 0, 0], sizes = [1, 8, 256], strides = [1, 1, 1]} : vector<2x8x256xf32> to vector<1x8x256xf32>
    %334 = vector.shape_cast %333 : vector<1x8x256xf32> to vector<8x256xf32>
    %335 = vector.extract_strided_slice %334 {offsets = [0, 192], sizes = [8, 32], strides = [1, 1]} : vector<8x256xf32> to vector<8x32xf32>
    %336 = tpu.concatenate %332, %335 in 1 : vector<8x32xf32>, vector<8x32xf32> -> vector<8x64xf32>
    %337 = vector.shape_cast %336 : vector<8x64xf32> to vector<1x8x64xf32>
    %cst_70 = arith.constant dense<0.000000e+00> : vector<1xf32>
    %338 = vector.multi_reduction <add>, %337, %cst_70 [1, 2] : vector<1x8x64xf32> to vector<1xf32>
    %339 = vector.shape_cast %338 : vector<1xf32> to vector<1x1x1xf32>
    %340 = vector.extract %339[0, 0, 0] : f32 from vector<1x1x1xf32>
    %cst_71 = arith.constant 0.001953125 : f32
    %341 = arith.mulf %340, %cst_71 : f32
    %342 = vector.broadcast %341 : f32 to vector<8x64xf32>
    %343 = arith.subf %336, %342 : vector<8x64xf32>
    %344 = arith.mulf %343, %343 : vector<8x64xf32>
    %345 = vector.shape_cast %344 : vector<8x64xf32> to vector<1x8x64xf32>
    %cst_72 = arith.constant dense<0.000000e+00> : vector<1xf32>
    %346 = vector.multi_reduction <add>, %345, %cst_72 [1, 2] : vector<1x8x64xf32> to vector<1xf32>
    %347 = vector.shape_cast %346 : vector<1xf32> to vector<1x1x1xf32>
    %348 = vector.extract %347[0, 0, 0] : f32 from vector<1x1x1xf32>
    %cst_73 = arith.constant 0.001953125 : f32
    %349 = arith.mulf %348, %cst_73 : f32
    %c6 = arith.constant 6 : index
    %350 = memref.load %arg7[%c6] : memref<8xf32, #tpu.memory_space<smem>>
    %cst_74 = arith.constant 9.99999974E-5 : f32
    %351 = arith.addf %349, %cst_74 : f32
    %352 = math.rsqrt %351 : f32
    %353 = arith.mulf %350, %352 : f32
    %c6_75 = arith.constant 6 : index
    %354 = memref.load %arg8[%c6_75] : memref<8xf32, #tpu.memory_space<smem>>
    %355 = arith.mulf %341, %353 : f32
    %356 = arith.subf %354, %355 : f32
    %357 = vector.broadcast %353 : f32 to vector<8x64xf32>
    %358 = arith.mulf %336, %357 : vector<8x64xf32>
    %359 = vector.broadcast %356 : f32 to vector<8x64xf32>
    %360 = arith.addf %358, %359 : vector<8x64xf32>
    %cst_76 = arith.constant 0.000000e+00 : f32
    %361 = vector.broadcast %cst_76 : f32 to vector<8x64xf32>
    %362 = arith.cmpf oge, %360, %361 : vector<8x64xf32>
    %cst_77 = arith.constant 0.00999999977 : f32
    %363 = vector.broadcast %cst_77 : f32 to vector<8x64xf32>
    %364 = arith.mulf %363, %360 : vector<8x64xf32>
    %365 = arith.select %362, %360, %364 : vector<8x64xi1>, vector<8x64xf32>
    %366 = vector.extract_strided_slice %113 {offsets = [0, 0, 0], sizes = [1, 8, 256], strides = [1, 1, 1]} : vector<2x8x256xf32> to vector<1x8x256xf32>
    %367 = vector.shape_cast %366 : vector<1x8x256xf32> to vector<8x256xf32>
    %368 = vector.extract_strided_slice %367 {offsets = [0, 224], sizes = [8, 32], strides = [1, 1]} : vector<8x256xf32> to vector<8x32xf32>
    %369 = vector.extract_strided_slice %113 {offsets = [1, 0, 0], sizes = [1, 8, 256], strides = [1, 1, 1]} : vector<2x8x256xf32> to vector<1x8x256xf32>
    %370 = vector.shape_cast %369 : vector<1x8x256xf32> to vector<8x256xf32>
    %371 = vector.extract_strided_slice %370 {offsets = [0, 224], sizes = [8, 32], strides = [1, 1]} : vector<8x256xf32> to vector<8x32xf32>
    %372 = tpu.concatenate %368, %371 in 1 : vector<8x32xf32>, vector<8x32xf32> -> vector<8x64xf32>
    %373 = vector.shape_cast %372 : vector<8x64xf32> to vector<1x8x64xf32>
    %cst_78 = arith.constant dense<0.000000e+00> : vector<1xf32>
    %374 = vector.multi_reduction <add>, %373, %cst_78 [1, 2] : vector<1x8x64xf32> to vector<1xf32>
    %375 = vector.shape_cast %374 : vector<1xf32> to vector<1x1x1xf32>
    %376 = vector.extract %375[0, 0, 0] : f32 from vector<1x1x1xf32>
    %cst_79 = arith.constant 0.001953125 : f32
    %377 = arith.mulf %376, %cst_79 : f32
    %378 = vector.broadcast %377 : f32 to vector<8x64xf32>
    %379 = arith.subf %372, %378 : vector<8x64xf32>
    %380 = arith.mulf %379, %379 : vector<8x64xf32>
    %381 = vector.shape_cast %380 : vector<8x64xf32> to vector<1x8x64xf32>
    %cst_80 = arith.constant dense<0.000000e+00> : vector<1xf32>
    %382 = vector.multi_reduction <add>, %381, %cst_80 [1, 2] : vector<1x8x64xf32> to vector<1xf32>
    %383 = vector.shape_cast %382 : vector<1xf32> to vector<1x1x1xf32>
    %384 = vector.extract %383[0, 0, 0] : f32 from vector<1x1x1xf32>
    %cst_81 = arith.constant 0.001953125 : f32
    %385 = arith.mulf %384, %cst_81 : f32
    %c7 = arith.constant 7 : index
    %386 = memref.load %arg7[%c7] : memref<8xf32, #tpu.memory_space<smem>>
    %cst_82 = arith.constant 9.99999974E-5 : f32
    %387 = arith.addf %385, %cst_82 : f32
    %388 = math.rsqrt %387 : f32
    %389 = arith.mulf %386, %388 : f32
    %c7_83 = arith.constant 7 : index
    %390 = memref.load %arg8[%c7_83] : memref<8xf32, #tpu.memory_space<smem>>
    %391 = arith.mulf %377, %389 : f32
    %392 = arith.subf %390, %391 : f32
    %393 = vector.broadcast %389 : f32 to vector<8x64xf32>
    %394 = arith.mulf %372, %393 : vector<8x64xf32>
    %395 = vector.broadcast %392 : f32 to vector<8x64xf32>
    %396 = arith.addf %394, %395 : vector<8x64xf32>
    %cst_84 = arith.constant 0.000000e+00 : f32
    %397 = vector.broadcast %cst_84 : f32 to vector<8x64xf32>
    %398 = arith.cmpf oge, %396, %397 : vector<8x64xf32>
    %cst_85 = arith.constant 0.00999999977 : f32
    %399 = vector.broadcast %cst_85 : f32 to vector<8x64xf32>
    %400 = arith.mulf %399, %396 : vector<8x64xf32>
    %401 = arith.select %398, %396, %400 : vector<8x64xi1>, vector<8x64xf32>
    %c0_86 = arith.constant 0 : index
    %c0_87 = arith.constant 0 : index
    %402 = memref.load %arg9[%c0_86, %c0_87] : memref<8x8xf32, #tpu.memory_space<smem>>
    %403 = vector.broadcast %402 : f32 to vector<8x64xf32>
    %404 = arith.mulf %403, %149 : vector<8x64xf32>
    %c0_88 = arith.constant 0 : index
    %c1_89 = arith.constant 1 : index
    %405 = memref.load %arg9[%c0_88, %c1_89] : memref<8x8xf32, #tpu.memory_space<smem>>
    %406 = vector.broadcast %405 : f32 to vector<8x64xf32>
    %407 = arith.mulf %406, %185 : vector<8x64xf32>
    %408 = arith.addf %404, %407 : vector<8x64xf32>
    %c0_90 = arith.constant 0 : index
    %c2_91 = arith.constant 2 : index
    %409 = memref.load %arg9[%c0_90, %c2_91] : memref<8x8xf32, #tpu.memory_space<smem>>
    %410 = vector.broadcast %409 : f32 to vector<8x64xf32>
    %411 = arith.mulf %410, %221 : vector<8x64xf32>
    %412 = arith.addf %408, %411 : vector<8x64xf32>
    %c0_92 = arith.constant 0 : index
    %c3_93 = arith.constant 3 : index
    %413 = memref.load %arg9[%c0_92, %c3_93] : memref<8x8xf32, #tpu.memory_space<smem>>
    %414 = vector.broadcast %413 : f32 to vector<8x64xf32>
    %415 = arith.mulf %414, %257 : vector<8x64xf32>
    %416 = arith.addf %412, %415 : vector<8x64xf32>
    %c0_94 = arith.constant 0 : index
    %c4_95 = arith.constant 4 : index
    %417 = memref.load %arg9[%c0_94, %c4_95] : memref<8x8xf32, #tpu.memory_space<smem>>
    %418 = vector.broadcast %417 : f32 to vector<8x64xf32>
    %419 = arith.mulf %418, %293 : vector<8x64xf32>
    %420 = arith.addf %416, %419 : vector<8x64xf32>
    %c0_96 = arith.constant 0 : index
    %c5_97 = arith.constant 5 : index
    %421 = memref.load %arg9[%c0_96, %c5_97] : memref<8x8xf32, #tpu.memory_space<smem>>
    %422 = vector.broadcast %421 : f32 to vector<8x64xf32>
    %423 = arith.mulf %422, %329 : vector<8x64xf32>
    %424 = arith.addf %420, %423 : vector<8x64xf32>
    %c0_98 = arith.constant 0 : index
    %c6_99 = arith.constant 6 : index
    %425 = memref.load %arg9[%c0_98, %c6_99] : memref<8x8xf32, #tpu.memory_space<smem>>
    %426 = vector.broadcast %425 : f32 to vector<8x64xf32>
    %427 = arith.mulf %426, %365 : vector<8x64xf32>
    %428 = arith.addf %424, %427 : vector<8x64xf32>
    %c0_100 = arith.constant 0 : index
    %c7_101 = arith.constant 7 : index
    %429 = memref.load %arg9[%c0_100, %c7_101] : memref<8x8xf32, #tpu.memory_space<smem>>
    %430 = vector.broadcast %429 : f32 to vector<8x64xf32>
    %431 = arith.mulf %430, %401 : vector<8x64xf32>
    %432 = arith.addf %428, %431 : vector<8x64xf32>
    %c0_102 = arith.constant 0 : index
    %433 = memref.load %arg10[%c0_102] : memref<8xf32, #tpu.memory_space<smem>>
    %434 = vector.broadcast %433 : f32 to vector<8x64xf32>
    %435 = arith.addf %432, %434 : vector<8x64xf32>
    %cst_103 = arith.constant 0.000000e+00 : f32
    %436 = vector.broadcast %cst_103 : f32 to vector<8x64xf32>
    %437 = arith.cmpf oge, %435, %436 : vector<8x64xf32>
    %cst_104 = arith.constant 0.00999999977 : f32
    %438 = vector.broadcast %cst_104 : f32 to vector<8x64xf32>
    %439 = arith.mulf %438, %435 : vector<8x64xf32>
    %440 = arith.select %437, %435, %439 : vector<8x64xi1>, vector<8x64xf32>
    %c1_105 = arith.constant 1 : index
    %c0_106 = arith.constant 0 : index
    %441 = memref.load %arg9[%c1_105, %c0_106] : memref<8x8xf32, #tpu.memory_space<smem>>
    %442 = vector.broadcast %441 : f32 to vector<8x64xf32>
    %443 = arith.mulf %442, %149 : vector<8x64xf32>
    %c1_107 = arith.constant 1 : index
    %c1_108 = arith.constant 1 : index
    %444 = memref.load %arg9[%c1_107, %c1_108] : memref<8x8xf32, #tpu.memory_space<smem>>
    %445 = vector.broadcast %444 : f32 to vector<8x64xf32>
    %446 = arith.mulf %445, %185 : vector<8x64xf32>
    %447 = arith.addf %443, %446 : vector<8x64xf32>
    %c1_109 = arith.constant 1 : index
    %c2_110 = arith.constant 2 : index
    %448 = memref.load %arg9[%c1_109, %c2_110] : memref<8x8xf32, #tpu.memory_space<smem>>
    %449 = vector.broadcast %448 : f32 to vector<8x64xf32>
    %450 = arith.mulf %449, %221 : vector<8x64xf32>
    %451 = arith.addf %447, %450 : vector<8x64xf32>
    %c1_111 = arith.constant 1 : index
    %c3_112 = arith.constant 3 : index
    %452 = memref.load %arg9[%c1_111, %c3_112] : memref<8x8xf32, #tpu.memory_space<smem>>
    %453 = vector.broadcast %452 : f32 to vector<8x64xf32>
    %454 = arith.mulf %453, %257 : vector<8x64xf32>
    %455 = arith.addf %451, %454 : vector<8x64xf32>
    %c1_113 = arith.constant 1 : index
    %c4_114 = arith.constant 4 : index
    %456 = memref.load %arg9[%c1_113, %c4_114] : memref<8x8xf32, #tpu.memory_space<smem>>
    %457 = vector.broadcast %456 : f32 to vector<8x64xf32>
    %458 = arith.mulf %457, %293 : vector<8x64xf32>
    %459 = arith.addf %455, %458 : vector<8x64xf32>
    %c1_115 = arith.constant 1 : index
    %c5_116 = arith.constant 5 : index
    %460 = memref.load %arg9[%c1_115, %c5_116] : memref<8x8xf32, #tpu.memory_space<smem>>
    %461 = vector.broadcast %460 : f32 to vector<8x64xf32>
    %462 = arith.mulf %461, %329 : vector<8x64xf32>
    %463 = arith.addf %459, %462 : vector<8x64xf32>
    %c1_117 = arith.constant 1 : index
    %c6_118 = arith.constant 6 : index
    %464 = memref.load %arg9[%c1_117, %c6_118] : memref<8x8xf32, #tpu.memory_space<smem>>
    %465 = vector.broadcast %464 : f32 to vector<8x64xf32>
    %466 = arith.mulf %465, %365 : vector<8x64xf32>
    %467 = arith.addf %463, %466 : vector<8x64xf32>
    %c1_119 = arith.constant 1 : index
    %c7_120 = arith.constant 7 : index
    %468 = memref.load %arg9[%c1_119, %c7_120] : memref<8x8xf32, #tpu.memory_space<smem>>
    %469 = vector.broadcast %468 : f32 to vector<8x64xf32>
    %470 = arith.mulf %469, %401 : vector<8x64xf32>
    %471 = arith.addf %467, %470 : vector<8x64xf32>
    %c1_121 = arith.constant 1 : index
    %472 = memref.load %arg10[%c1_121] : memref<8xf32, #tpu.memory_space<smem>>
    %473 = vector.broadcast %472 : f32 to vector<8x64xf32>
    %474 = arith.addf %471, %473 : vector<8x64xf32>
    %cst_122 = arith.constant 0.000000e+00 : f32
    %475 = vector.broadcast %cst_122 : f32 to vector<8x64xf32>
    %476 = arith.cmpf oge, %474, %475 : vector<8x64xf32>
    %cst_123 = arith.constant 0.00999999977 : f32
    %477 = vector.broadcast %cst_123 : f32 to vector<8x64xf32>
    %478 = arith.mulf %477, %474 : vector<8x64xf32>
    %479 = arith.select %476, %474, %478 : vector<8x64xi1>, vector<8x64xf32>
    %c2_124 = arith.constant 2 : index
    %c0_125 = arith.constant 0 : index
    %480 = memref.load %arg9[%c2_124, %c0_125] : memref<8x8xf32, #tpu.memory_space<smem>>
    %481 = vector.broadcast %480 : f32 to vector<8x64xf32>
    %482 = arith.mulf %481, %149 : vector<8x64xf32>
    %c2_126 = arith.constant 2 : index
    %c1_127 = arith.constant 1 : index
    %483 = memref.load %arg9[%c2_126, %c1_127] : memref<8x8xf32, #tpu.memory_space<smem>>
    %484 = vector.broadcast %483 : f32 to vector<8x64xf32>
    %485 = arith.mulf %484, %185 : vector<8x64xf32>
    %486 = arith.addf %482, %485 : vector<8x64xf32>
    %c2_128 = arith.constant 2 : index
    %c2_129 = arith.constant 2 : index
    %487 = memref.load %arg9[%c2_128, %c2_129] : memref<8x8xf32, #tpu.memory_space<smem>>
    %488 = vector.broadcast %487 : f32 to vector<8x64xf32>
    %489 = arith.mulf %488, %221 : vector<8x64xf32>
    %490 = arith.addf %486, %489 : vector<8x64xf32>
    %c2_130 = arith.constant 2 : index
    %c3_131 = arith.constant 3 : index
    %491 = memref.load %arg9[%c2_130, %c3_131] : memref<8x8xf32, #tpu.memory_space<smem>>
    %492 = vector.broadcast %491 : f32 to vector<8x64xf32>
    %493 = arith.mulf %492, %257 : vector<8x64xf32>
    %494 = arith.addf %490, %493 : vector<8x64xf32>
    %c2_132 = arith.constant 2 : index
    %c4_133 = arith.constant 4 : index
    %495 = memref.load %arg9[%c2_132, %c4_133] : memref<8x8xf32, #tpu.memory_space<smem>>
    %496 = vector.broadcast %495 : f32 to vector<8x64xf32>
    %497 = arith.mulf %496, %293 : vector<8x64xf32>
    %498 = arith.addf %494, %497 : vector<8x64xf32>
    %c2_134 = arith.constant 2 : index
    %c5_135 = arith.constant 5 : index
    %499 = memref.load %arg9[%c2_134, %c5_135] : memref<8x8xf32, #tpu.memory_space<smem>>
    %500 = vector.broadcast %499 : f32 to vector<8x64xf32>
    %501 = arith.mulf %500, %329 : vector<8x64xf32>
    %502 = arith.addf %498, %501 : vector<8x64xf32>
    %c2_136 = arith.constant 2 : index
    %c6_137 = arith.constant 6 : index
    %503 = memref.load %arg9[%c2_136, %c6_137] : memref<8x8xf32, #tpu.memory_space<smem>>
    %504 = vector.broadcast %503 : f32 to vector<8x64xf32>
    %505 = arith.mulf %504, %365 : vector<8x64xf32>
    %506 = arith.addf %502, %505 : vector<8x64xf32>
    %c2_138 = arith.constant 2 : index
    %c7_139 = arith.constant 7 : index
    %507 = memref.load %arg9[%c2_138, %c7_139] : memref<8x8xf32, #tpu.memory_space<smem>>
    %508 = vector.broadcast %507 : f32 to vector<8x64xf32>
    %509 = arith.mulf %508, %401 : vector<8x64xf32>
    %510 = arith.addf %506, %509 : vector<8x64xf32>
    %c2_140 = arith.constant 2 : index
    %511 = memref.load %arg10[%c2_140] : memref<8xf32, #tpu.memory_space<smem>>
    %512 = vector.broadcast %511 : f32 to vector<8x64xf32>
    %513 = arith.addf %510, %512 : vector<8x64xf32>
    %cst_141 = arith.constant 0.000000e+00 : f32
    %514 = vector.broadcast %cst_141 : f32 to vector<8x64xf32>
    %515 = arith.cmpf oge, %513, %514 : vector<8x64xf32>
    %cst_142 = arith.constant 0.00999999977 : f32
    %516 = vector.broadcast %cst_142 : f32 to vector<8x64xf32>
    %517 = arith.mulf %516, %513 : vector<8x64xf32>
    %518 = arith.select %515, %513, %517 : vector<8x64xi1>, vector<8x64xf32>
    %c3_143 = arith.constant 3 : index
    %c0_144 = arith.constant 0 : index
    %519 = memref.load %arg9[%c3_143, %c0_144] : memref<8x8xf32, #tpu.memory_space<smem>>
    %520 = vector.broadcast %519 : f32 to vector<8x64xf32>
    %521 = arith.mulf %520, %149 : vector<8x64xf32>
    %c3_145 = arith.constant 3 : index
    %c1_146 = arith.constant 1 : index
    %522 = memref.load %arg9[%c3_145, %c1_146] : memref<8x8xf32, #tpu.memory_space<smem>>
    %523 = vector.broadcast %522 : f32 to vector<8x64xf32>
    %524 = arith.mulf %523, %185 : vector<8x64xf32>
    %525 = arith.addf %521, %524 : vector<8x64xf32>
    %c3_147 = arith.constant 3 : index
    %c2_148 = arith.constant 2 : index
    %526 = memref.load %arg9[%c3_147, %c2_148] : memref<8x8xf32, #tpu.memory_space<smem>>
    %527 = vector.broadcast %526 : f32 to vector<8x64xf32>
    %528 = arith.mulf %527, %221 : vector<8x64xf32>
    %529 = arith.addf %525, %528 : vector<8x64xf32>
    %c3_149 = arith.constant 3 : index
    %c3_150 = arith.constant 3 : index
    %530 = memref.load %arg9[%c3_149, %c3_150] : memref<8x8xf32, #tpu.memory_space<smem>>
    %531 = vector.broadcast %530 : f32 to vector<8x64xf32>
    %532 = arith.mulf %531, %257 : vector<8x64xf32>
    %533 = arith.addf %529, %532 : vector<8x64xf32>
    %c3_151 = arith.constant 3 : index
    %c4_152 = arith.constant 4 : index
    %534 = memref.load %arg9[%c3_151, %c4_152] : memref<8x8xf32, #tpu.memory_space<smem>>
    %535 = vector.broadcast %534 : f32 to vector<8x64xf32>
    %536 = arith.mulf %535, %293 : vector<8x64xf32>
    %537 = arith.addf %533, %536 : vector<8x64xf32>
    %c3_153 = arith.constant 3 : index
    %c5_154 = arith.constant 5 : index
    %538 = memref.load %arg9[%c3_153, %c5_154] : memref<8x8xf32, #tpu.memory_space<smem>>
    %539 = vector.broadcast %538 : f32 to vector<8x64xf32>
    %540 = arith.mulf %539, %329 : vector<8x64xf32>
    %541 = arith.addf %537, %540 : vector<8x64xf32>
    %c3_155 = arith.constant 3 : index
    %c6_156 = arith.constant 6 : index
    %542 = memref.load %arg9[%c3_155, %c6_156] : memref<8x8xf32, #tpu.memory_space<smem>>
    %543 = vector.broadcast %542 : f32 to vector<8x64xf32>
    %544 = arith.mulf %543, %365 : vector<8x64xf32>
    %545 = arith.addf %541, %544 : vector<8x64xf32>
    %c3_157 = arith.constant 3 : index
    %c7_158 = arith.constant 7 : index
    %546 = memref.load %arg9[%c3_157, %c7_158] : memref<8x8xf32, #tpu.memory_space<smem>>
    %547 = vector.broadcast %546 : f32 to vector<8x64xf32>
    %548 = arith.mulf %547, %401 : vector<8x64xf32>
    %549 = arith.addf %545, %548 : vector<8x64xf32>
    %c3_159 = arith.constant 3 : index
    %550 = memref.load %arg10[%c3_159] : memref<8xf32, #tpu.memory_space<smem>>
    %551 = vector.broadcast %550 : f32 to vector<8x64xf32>
    %552 = arith.addf %549, %551 : vector<8x64xf32>
    %cst_160 = arith.constant 0.000000e+00 : f32
    %553 = vector.broadcast %cst_160 : f32 to vector<8x64xf32>
    %554 = arith.cmpf oge, %552, %553 : vector<8x64xf32>
    %cst_161 = arith.constant 0.00999999977 : f32
    %555 = vector.broadcast %cst_161 : f32 to vector<8x64xf32>
    %556 = arith.mulf %555, %552 : vector<8x64xf32>
    %557 = arith.select %554, %552, %556 : vector<8x64xi1>, vector<8x64xf32>
    %c4_162 = arith.constant 4 : index
    %c0_163 = arith.constant 0 : index
    %558 = memref.load %arg9[%c4_162, %c0_163] : memref<8x8xf32, #tpu.memory_space<smem>>
    %559 = vector.broadcast %558 : f32 to vector<8x64xf32>
    %560 = arith.mulf %559, %149 : vector<8x64xf32>
    %c4_164 = arith.constant 4 : index
    %c1_165 = arith.constant 1 : index
    %561 = memref.load %arg9[%c4_164, %c1_165] : memref<8x8xf32, #tpu.memory_space<smem>>
    %562 = vector.broadcast %561 : f32 to vector<8x64xf32>
    %563 = arith.mulf %562, %185 : vector<8x64xf32>
    %564 = arith.addf %560, %563 : vector<8x64xf32>
    %c4_166 = arith.constant 4 : index
    %c2_167 = arith.constant 2 : index
    %565 = memref.load %arg9[%c4_166, %c2_167] : memref<8x8xf32, #tpu.memory_space<smem>>
    %566 = vector.broadcast %565 : f32 to vector<8x64xf32>
    %567 = arith.mulf %566, %221 : vector<8x64xf32>
    %568 = arith.addf %564, %567 : vector<8x64xf32>
    %c4_168 = arith.constant 4 : index
    %c3_169 = arith.constant 3 : index
    %569 = memref.load %arg9[%c4_168, %c3_169] : memref<8x8xf32, #tpu.memory_space<smem>>
    %570 = vector.broadcast %569 : f32 to vector<8x64xf32>
    %571 = arith.mulf %570, %257 : vector<8x64xf32>
    %572 = arith.addf %568, %571 : vector<8x64xf32>
    %c4_170 = arith.constant 4 : index
    %c4_171 = arith.constant 4 : index
    %573 = memref.load %arg9[%c4_170, %c4_171] : memref<8x8xf32, #tpu.memory_space<smem>>
    %574 = vector.broadcast %573 : f32 to vector<8x64xf32>
    %575 = arith.mulf %574, %293 : vector<8x64xf32>
    %576 = arith.addf %572, %575 : vector<8x64xf32>
    %c4_172 = arith.constant 4 : index
    %c5_173 = arith.constant 5 : index
    %577 = memref.load %arg9[%c4_172, %c5_173] : memref<8x8xf32, #tpu.memory_space<smem>>
    %578 = vector.broadcast %577 : f32 to vector<8x64xf32>
    %579 = arith.mulf %578, %329 : vector<8x64xf32>
    %580 = arith.addf %576, %579 : vector<8x64xf32>
    %c4_174 = arith.constant 4 : index
    %c6_175 = arith.constant 6 : index
    %581 = memref.load %arg9[%c4_174, %c6_175] : memref<8x8xf32, #tpu.memory_space<smem>>
    %582 = vector.broadcast %581 : f32 to vector<8x64xf32>
    %583 = arith.mulf %582, %365 : vector<8x64xf32>
    %584 = arith.addf %580, %583 : vector<8x64xf32>
    %c4_176 = arith.constant 4 : index
    %c7_177 = arith.constant 7 : index
    %585 = memref.load %arg9[%c4_176, %c7_177] : memref<8x8xf32, #tpu.memory_space<smem>>
    %586 = vector.broadcast %585 : f32 to vector<8x64xf32>
    %587 = arith.mulf %586, %401 : vector<8x64xf32>
    %588 = arith.addf %584, %587 : vector<8x64xf32>
    %c4_178 = arith.constant 4 : index
    %589 = memref.load %arg10[%c4_178] : memref<8xf32, #tpu.memory_space<smem>>
    %590 = vector.broadcast %589 : f32 to vector<8x64xf32>
    %591 = arith.addf %588, %590 : vector<8x64xf32>
    %cst_179 = arith.constant 0.000000e+00 : f32
    %592 = vector.broadcast %cst_179 : f32 to vector<8x64xf32>
    %593 = arith.cmpf oge, %591, %592 : vector<8x64xf32>
    %cst_180 = arith.constant 0.00999999977 : f32
    %594 = vector.broadcast %cst_180 : f32 to vector<8x64xf32>
    %595 = arith.mulf %594, %591 : vector<8x64xf32>
    %596 = arith.select %593, %591, %595 : vector<8x64xi1>, vector<8x64xf32>
    %c5_181 = arith.constant 5 : index
    %c0_182 = arith.constant 0 : index
    %597 = memref.load %arg9[%c5_181, %c0_182] : memref<8x8xf32, #tpu.memory_space<smem>>
    %598 = vector.broadcast %597 : f32 to vector<8x64xf32>
    %599 = arith.mulf %598, %149 : vector<8x64xf32>
    %c5_183 = arith.constant 5 : index
    %c1_184 = arith.constant 1 : index
    %600 = memref.load %arg9[%c5_183, %c1_184] : memref<8x8xf32, #tpu.memory_space<smem>>
    %601 = vector.broadcast %600 : f32 to vector<8x64xf32>
    %602 = arith.mulf %601, %185 : vector<8x64xf32>
    %603 = arith.addf %599, %602 : vector<8x64xf32>
    %c5_185 = arith.constant 5 : index
    %c2_186 = arith.constant 2 : index
    %604 = memref.load %arg9[%c5_185, %c2_186] : memref<8x8xf32, #tpu.memory_space<smem>>
    %605 = vector.broadcast %604 : f32 to vector<8x64xf32>
    %606 = arith.mulf %605, %221 : vector<8x64xf32>
    %607 = arith.addf %603, %606 : vector<8x64xf32>
    %c5_187 = arith.constant 5 : index
    %c3_188 = arith.constant 3 : index
    %608 = memref.load %arg9[%c5_187, %c3_188] : memref<8x8xf32, #tpu.memory_space<smem>>
    %609 = vector.broadcast %608 : f32 to vector<8x64xf32>
    %610 = arith.mulf %609, %257 : vector<8x64xf32>
    %611 = arith.addf %607, %610 : vector<8x64xf32>
    %c5_189 = arith.constant 5 : index
    %c4_190 = arith.constant 4 : index
    %612 = memref.load %arg9[%c5_189, %c4_190] : memref<8x8xf32, #tpu.memory_space<smem>>
    %613 = vector.broadcast %612 : f32 to vector<8x64xf32>
    %614 = arith.mulf %613, %293 : vector<8x64xf32>
    %615 = arith.addf %611, %614 : vector<8x64xf32>
    %c5_191 = arith.constant 5 : index
    %c5_192 = arith.constant 5 : index
    %616 = memref.load %arg9[%c5_191, %c5_192] : memref<8x8xf32, #tpu.memory_space<smem>>
    %617 = vector.broadcast %616 : f32 to vector<8x64xf32>
    %618 = arith.mulf %617, %329 : vector<8x64xf32>
    %619 = arith.addf %615, %618 : vector<8x64xf32>
    %c5_193 = arith.constant 5 : index
    %c6_194 = arith.constant 6 : index
    %620 = memref.load %arg9[%c5_193, %c6_194] : memref<8x8xf32, #tpu.memory_space<smem>>
    %621 = vector.broadcast %620 : f32 to vector<8x64xf32>
    %622 = arith.mulf %621, %365 : vector<8x64xf32>
    %623 = arith.addf %619, %622 : vector<8x64xf32>
    %c5_195 = arith.constant 5 : index
    %c7_196 = arith.constant 7 : index
    %624 = memref.load %arg9[%c5_195, %c7_196] : memref<8x8xf32, #tpu.memory_space<smem>>
    %625 = vector.broadcast %624 : f32 to vector<8x64xf32>
    %626 = arith.mulf %625, %401 : vector<8x64xf32>
    %627 = arith.addf %623, %626 : vector<8x64xf32>
    %c5_197 = arith.constant 5 : index
    %628 = memref.load %arg10[%c5_197] : memref<8xf32, #tpu.memory_space<smem>>
    %629 = vector.broadcast %628 : f32 to vector<8x64xf32>
    %630 = arith.addf %627, %629 : vector<8x64xf32>
    %cst_198 = arith.constant 0.000000e+00 : f32
    %631 = vector.broadcast %cst_198 : f32 to vector<8x64xf32>
    %632 = arith.cmpf oge, %630, %631 : vector<8x64xf32>
    %cst_199 = arith.constant 0.00999999977 : f32
    %633 = vector.broadcast %cst_199 : f32 to vector<8x64xf32>
    %634 = arith.mulf %633, %630 : vector<8x64xf32>
    %635 = arith.select %632, %630, %634 : vector<8x64xi1>, vector<8x64xf32>
    %c6_200 = arith.constant 6 : index
    %c0_201 = arith.constant 0 : index
    %636 = memref.load %arg9[%c6_200, %c0_201] : memref<8x8xf32, #tpu.memory_space<smem>>
    %637 = vector.broadcast %636 : f32 to vector<8x64xf32>
    %638 = arith.mulf %637, %149 : vector<8x64xf32>
    %c6_202 = arith.constant 6 : index
    %c1_203 = arith.constant 1 : index
    %639 = memref.load %arg9[%c6_202, %c1_203] : memref<8x8xf32, #tpu.memory_space<smem>>
    %640 = vector.broadcast %639 : f32 to vector<8x64xf32>
    %641 = arith.mulf %640, %185 : vector<8x64xf32>
    %642 = arith.addf %638, %641 : vector<8x64xf32>
    %c6_204 = arith.constant 6 : index
    %c2_205 = arith.constant 2 : index
    %643 = memref.load %arg9[%c6_204, %c2_205] : memref<8x8xf32, #tpu.memory_space<smem>>
    %644 = vector.broadcast %643 : f32 to vector<8x64xf32>
    %645 = arith.mulf %644, %221 : vector<8x64xf32>
    %646 = arith.addf %642, %645 : vector<8x64xf32>
    %c6_206 = arith.constant 6 : index
    %c3_207 = arith.constant 3 : index
    %647 = memref.load %arg9[%c6_206, %c3_207] : memref<8x8xf32, #tpu.memory_space<smem>>
    %648 = vector.broadcast %647 : f32 to vector<8x64xf32>
    %649 = arith.mulf %648, %257 : vector<8x64xf32>
    %650 = arith.addf %646, %649 : vector<8x64xf32>
    %c6_208 = arith.constant 6 : index
    %c4_209 = arith.constant 4 : index
    %651 = memref.load %arg9[%c6_208, %c4_209] : memref<8x8xf32, #tpu.memory_space<smem>>
    %652 = vector.broadcast %651 : f32 to vector<8x64xf32>
    %653 = arith.mulf %652, %293 : vector<8x64xf32>
    %654 = arith.addf %650, %653 : vector<8x64xf32>
    %c6_210 = arith.constant 6 : index
    %c5_211 = arith.constant 5 : index
    %655 = memref.load %arg9[%c6_210, %c5_211] : memref<8x8xf32, #tpu.memory_space<smem>>
    %656 = vector.broadcast %655 : f32 to vector<8x64xf32>
    %657 = arith.mulf %656, %329 : vector<8x64xf32>
    %658 = arith.addf %654, %657 : vector<8x64xf32>
    %c6_212 = arith.constant 6 : index
    %c6_213 = arith.constant 6 : index
    %659 = memref.load %arg9[%c6_212, %c6_213] : memref<8x8xf32, #tpu.memory_space<smem>>
    %660 = vector.broadcast %659 : f32 to vector<8x64xf32>
    %661 = arith.mulf %660, %365 : vector<8x64xf32>
    %662 = arith.addf %658, %661 : vector<8x64xf32>
    %c6_214 = arith.constant 6 : index
    %c7_215 = arith.constant 7 : index
    %663 = memref.load %arg9[%c6_214, %c7_215] : memref<8x8xf32, #tpu.memory_space<smem>>
    %664 = vector.broadcast %663 : f32 to vector<8x64xf32>
    %665 = arith.mulf %664, %401 : vector<8x64xf32>
    %666 = arith.addf %662, %665 : vector<8x64xf32>
    %c6_216 = arith.constant 6 : index
    %667 = memref.load %arg10[%c6_216] : memref<8xf32, #tpu.memory_space<smem>>
    %668 = vector.broadcast %667 : f32 to vector<8x64xf32>
    %669 = arith.addf %666, %668 : vector<8x64xf32>
    %cst_217 = arith.constant 0.000000e+00 : f32
    %670 = vector.broadcast %cst_217 : f32 to vector<8x64xf32>
    %671 = arith.cmpf oge, %669, %670 : vector<8x64xf32>
    %cst_218 = arith.constant 0.00999999977 : f32
    %672 = vector.broadcast %cst_218 : f32 to vector<8x64xf32>
    %673 = arith.mulf %672, %669 : vector<8x64xf32>
    %674 = arith.select %671, %669, %673 : vector<8x64xi1>, vector<8x64xf32>
    %c7_219 = arith.constant 7 : index
    %c0_220 = arith.constant 0 : index
    %675 = memref.load %arg9[%c7_219, %c0_220] : memref<8x8xf32, #tpu.memory_space<smem>>
    %676 = vector.broadcast %675 : f32 to vector<8x64xf32>
    %677 = arith.mulf %676, %149 : vector<8x64xf32>
    %c7_221 = arith.constant 7 : index
    %c1_222 = arith.constant 1 : index
    %678 = memref.load %arg9[%c7_221, %c1_222] : memref<8x8xf32, #tpu.memory_space<smem>>
    %679 = vector.broadcast %678 : f32 to vector<8x64xf32>
    %680 = arith.mulf %679, %185 : vector<8x64xf32>
    %681 = arith.addf %677, %680 : vector<8x64xf32>
    %c7_223 = arith.constant 7 : index
    %c2_224 = arith.constant 2 : index
    %682 = memref.load %arg9[%c7_223, %c2_224] : memref<8x8xf32, #tpu.memory_space<smem>>
    %683 = vector.broadcast %682 : f32 to vector<8x64xf32>
    %684 = arith.mulf %683, %221 : vector<8x64xf32>
    %685 = arith.addf %681, %684 : vector<8x64xf32>
    %c7_225 = arith.constant 7 : index
    %c3_226 = arith.constant 3 : index
    %686 = memref.load %arg9[%c7_225, %c3_226] : memref<8x8xf32, #tpu.memory_space<smem>>
    %687 = vector.broadcast %686 : f32 to vector<8x64xf32>
    %688 = arith.mulf %687, %257 : vector<8x64xf32>
    %689 = arith.addf %685, %688 : vector<8x64xf32>
    %c7_227 = arith.constant 7 : index
    %c4_228 = arith.constant 4 : index
    %690 = memref.load %arg9[%c7_227, %c4_228] : memref<8x8xf32, #tpu.memory_space<smem>>
    %691 = vector.broadcast %690 : f32 to vector<8x64xf32>
    %692 = arith.mulf %691, %293 : vector<8x64xf32>
    %693 = arith.addf %689, %692 : vector<8x64xf32>
    %c7_229 = arith.constant 7 : index
    %c5_230 = arith.constant 5 : index
    %694 = memref.load %arg9[%c7_229, %c5_230] : memref<8x8xf32, #tpu.memory_space<smem>>
    %695 = vector.broadcast %694 : f32 to vector<8x64xf32>
    %696 = arith.mulf %695, %329 : vector<8x64xf32>
    %697 = arith.addf %693, %696 : vector<8x64xf32>
    %c7_231 = arith.constant 7 : index
    %c6_232 = arith.constant 6 : index
    %698 = memref.load %arg9[%c7_231, %c6_232] : memref<8x8xf32, #tpu.memory_space<smem>>
    %699 = vector.broadcast %698 : f32 to vector<8x64xf32>
    %700 = arith.mulf %699, %365 : vector<8x64xf32>
    %701 = arith.addf %697, %700 : vector<8x64xf32>
    %c7_233 = arith.constant 7 : index
    %c7_234 = arith.constant 7 : index
    %702 = memref.load %arg9[%c7_233, %c7_234] : memref<8x8xf32, #tpu.memory_space<smem>>
    %703 = vector.broadcast %702 : f32 to vector<8x64xf32>
    %704 = arith.mulf %703, %401 : vector<8x64xf32>
    %705 = arith.addf %701, %704 : vector<8x64xf32>
    %c7_235 = arith.constant 7 : index
    %706 = memref.load %arg10[%c7_235] : memref<8xf32, #tpu.memory_space<smem>>
    %707 = vector.broadcast %706 : f32 to vector<8x64xf32>
    %708 = arith.addf %705, %707 : vector<8x64xf32>
    %cst_236 = arith.constant 0.000000e+00 : f32
    %709 = vector.broadcast %cst_236 : f32 to vector<8x64xf32>
    %710 = arith.cmpf oge, %708, %709 : vector<8x64xf32>
    %cst_237 = arith.constant 0.00999999977 : f32
    %711 = vector.broadcast %cst_237 : f32 to vector<8x64xf32>
    %712 = arith.mulf %711, %708 : vector<8x64xf32>
    %713 = arith.select %710, %708, %712 : vector<8x64xi1>, vector<8x64xf32>
    %c0_238 = arith.constant 0 : index
    %c0_239 = arith.constant 0 : index
    %714 = memref.load %arg11[%c0_238, %c0_239] : memref<4x8xf32, #tpu.memory_space<smem>>
    %715 = vector.broadcast %714 : f32 to vector<8x64xf32>
    %716 = arith.mulf %715, %440 : vector<8x64xf32>
    %c0_240 = arith.constant 0 : index
    %c1_241 = arith.constant 1 : index
    %717 = memref.load %arg11[%c0_240, %c1_241] : memref<4x8xf32, #tpu.memory_space<smem>>
    %718 = vector.broadcast %717 : f32 to vector<8x64xf32>
    %719 = arith.mulf %718, %479 : vector<8x64xf32>
    %720 = arith.addf %716, %719 : vector<8x64xf32>
    %c0_242 = arith.constant 0 : index
    %c2_243 = arith.constant 2 : index
    %721 = memref.load %arg11[%c0_242, %c2_243] : memref<4x8xf32, #tpu.memory_space<smem>>
    %722 = vector.broadcast %721 : f32 to vector<8x64xf32>
    %723 = arith.mulf %722, %518 : vector<8x64xf32>
    %724 = arith.addf %720, %723 : vector<8x64xf32>
    %c0_244 = arith.constant 0 : index
    %c3_245 = arith.constant 3 : index
    %725 = memref.load %arg11[%c0_244, %c3_245] : memref<4x8xf32, #tpu.memory_space<smem>>
    %726 = vector.broadcast %725 : f32 to vector<8x64xf32>
    %727 = arith.mulf %726, %557 : vector<8x64xf32>
    %728 = arith.addf %724, %727 : vector<8x64xf32>
    %c0_246 = arith.constant 0 : index
    %c4_247 = arith.constant 4 : index
    %729 = memref.load %arg11[%c0_246, %c4_247] : memref<4x8xf32, #tpu.memory_space<smem>>
    %730 = vector.broadcast %729 : f32 to vector<8x64xf32>
    %731 = arith.mulf %730, %596 : vector<8x64xf32>
    %732 = arith.addf %728, %731 : vector<8x64xf32>
    %c0_248 = arith.constant 0 : index
    %c5_249 = arith.constant 5 : index
    %733 = memref.load %arg11[%c0_248, %c5_249] : memref<4x8xf32, #tpu.memory_space<smem>>
    %734 = vector.broadcast %733 : f32 to vector<8x64xf32>
    %735 = arith.mulf %734, %635 : vector<8x64xf32>
    %736 = arith.addf %732, %735 : vector<8x64xf32>
    %c0_250 = arith.constant 0 : index
    %c6_251 = arith.constant 6 : index
    %737 = memref.load %arg11[%c0_250, %c6_251] : memref<4x8xf32, #tpu.memory_space<smem>>
    %738 = vector.broadcast %737 : f32 to vector<8x64xf32>
    %739 = arith.mulf %738, %674 : vector<8x64xf32>
    %740 = arith.addf %736, %739 : vector<8x64xf32>
    %c0_252 = arith.constant 0 : index
    %c7_253 = arith.constant 7 : index
    %741 = memref.load %arg11[%c0_252, %c7_253] : memref<4x8xf32, #tpu.memory_space<smem>>
    %742 = vector.broadcast %741 : f32 to vector<8x64xf32>
    %743 = arith.mulf %742, %713 : vector<8x64xf32>
    %744 = arith.addf %740, %743 : vector<8x64xf32>
    %c0_254 = arith.constant 0 : index
    %745 = memref.load %arg12[%c0_254] : memref<4xf32, #tpu.memory_space<smem>>
    %746 = vector.broadcast %745 : f32 to vector<8x64xf32>
    %747 = arith.addf %744, %746 : vector<8x64xf32>
    %c1_255 = arith.constant 1 : index
    %c0_256 = arith.constant 0 : index
    %748 = memref.load %arg11[%c1_255, %c0_256] : memref<4x8xf32, #tpu.memory_space<smem>>
    %749 = vector.broadcast %748 : f32 to vector<8x64xf32>
    %750 = arith.mulf %749, %440 : vector<8x64xf32>
    %c1_257 = arith.constant 1 : index
    %c1_258 = arith.constant 1 : index
    %751 = memref.load %arg11[%c1_257, %c1_258] : memref<4x8xf32, #tpu.memory_space<smem>>
    %752 = vector.broadcast %751 : f32 to vector<8x64xf32>
    %753 = arith.mulf %752, %479 : vector<8x64xf32>
    %754 = arith.addf %750, %753 : vector<8x64xf32>
    %c1_259 = arith.constant 1 : index
    %c2_260 = arith.constant 2 : index
    %755 = memref.load %arg11[%c1_259, %c2_260] : memref<4x8xf32, #tpu.memory_space<smem>>
    %756 = vector.broadcast %755 : f32 to vector<8x64xf32>
    %757 = arith.mulf %756, %518 : vector<8x64xf32>
    %758 = arith.addf %754, %757 : vector<8x64xf32>
    %c1_261 = arith.constant 1 : index
    %c3_262 = arith.constant 3 : index
    %759 = memref.load %arg11[%c1_261, %c3_262] : memref<4x8xf32, #tpu.memory_space<smem>>
    %760 = vector.broadcast %759 : f32 to vector<8x64xf32>
    %761 = arith.mulf %760, %557 : vector<8x64xf32>
    %762 = arith.addf %758, %761 : vector<8x64xf32>
    %c1_263 = arith.constant 1 : index
    %c4_264 = arith.constant 4 : index
    %763 = memref.load %arg11[%c1_263, %c4_264] : memref<4x8xf32, #tpu.memory_space<smem>>
    %764 = vector.broadcast %763 : f32 to vector<8x64xf32>
    %765 = arith.mulf %764, %596 : vector<8x64xf32>
    %766 = arith.addf %762, %765 : vector<8x64xf32>
    %c1_265 = arith.constant 1 : index
    %c5_266 = arith.constant 5 : index
    %767 = memref.load %arg11[%c1_265, %c5_266] : memref<4x8xf32, #tpu.memory_space<smem>>
    %768 = vector.broadcast %767 : f32 to vector<8x64xf32>
    %769 = arith.mulf %768, %635 : vector<8x64xf32>
    %770 = arith.addf %766, %769 : vector<8x64xf32>
    %c1_267 = arith.constant 1 : index
    %c6_268 = arith.constant 6 : index
    %771 = memref.load %arg11[%c1_267, %c6_268] : memref<4x8xf32, #tpu.memory_space<smem>>
    %772 = vector.broadcast %771 : f32 to vector<8x64xf32>
    %773 = arith.mulf %772, %674 : vector<8x64xf32>
    %774 = arith.addf %770, %773 : vector<8x64xf32>
    %c1_269 = arith.constant 1 : index
    %c7_270 = arith.constant 7 : index
    %775 = memref.load %arg11[%c1_269, %c7_270] : memref<4x8xf32, #tpu.memory_space<smem>>
    %776 = vector.broadcast %775 : f32 to vector<8x64xf32>
    %777 = arith.mulf %776, %713 : vector<8x64xf32>
    %778 = arith.addf %774, %777 : vector<8x64xf32>
    %c1_271 = arith.constant 1 : index
    %779 = memref.load %arg12[%c1_271] : memref<4xf32, #tpu.memory_space<smem>>
    %780 = vector.broadcast %779 : f32 to vector<8x64xf32>
    %781 = arith.addf %778, %780 : vector<8x64xf32>
    %c2_272 = arith.constant 2 : index
    %c0_273 = arith.constant 0 : index
    %782 = memref.load %arg11[%c2_272, %c0_273] : memref<4x8xf32, #tpu.memory_space<smem>>
    %783 = vector.broadcast %782 : f32 to vector<8x64xf32>
    %784 = arith.mulf %783, %440 : vector<8x64xf32>
    %c2_274 = arith.constant 2 : index
    %c1_275 = arith.constant 1 : index
    %785 = memref.load %arg11[%c2_274, %c1_275] : memref<4x8xf32, #tpu.memory_space<smem>>
    %786 = vector.broadcast %785 : f32 to vector<8x64xf32>
    %787 = arith.mulf %786, %479 : vector<8x64xf32>
    %788 = arith.addf %784, %787 : vector<8x64xf32>
    %c2_276 = arith.constant 2 : index
    %c2_277 = arith.constant 2 : index
    %789 = memref.load %arg11[%c2_276, %c2_277] : memref<4x8xf32, #tpu.memory_space<smem>>
    %790 = vector.broadcast %789 : f32 to vector<8x64xf32>
    %791 = arith.mulf %790, %518 : vector<8x64xf32>
    %792 = arith.addf %788, %791 : vector<8x64xf32>
    %c2_278 = arith.constant 2 : index
    %c3_279 = arith.constant 3 : index
    %793 = memref.load %arg11[%c2_278, %c3_279] : memref<4x8xf32, #tpu.memory_space<smem>>
    %794 = vector.broadcast %793 : f32 to vector<8x64xf32>
    %795 = arith.mulf %794, %557 : vector<8x64xf32>
    %796 = arith.addf %792, %795 : vector<8x64xf32>
    %c2_280 = arith.constant 2 : index
    %c4_281 = arith.constant 4 : index
    %797 = memref.load %arg11[%c2_280, %c4_281] : memref<4x8xf32, #tpu.memory_space<smem>>
    %798 = vector.broadcast %797 : f32 to vector<8x64xf32>
    %799 = arith.mulf %798, %596 : vector<8x64xf32>
    %800 = arith.addf %796, %799 : vector<8x64xf32>
    %c2_282 = arith.constant 2 : index
    %c5_283 = arith.constant 5 : index
    %801 = memref.load %arg11[%c2_282, %c5_283] : memref<4x8xf32, #tpu.memory_space<smem>>
    %802 = vector.broadcast %801 : f32 to vector<8x64xf32>
    %803 = arith.mulf %802, %635 : vector<8x64xf32>
    %804 = arith.addf %800, %803 : vector<8x64xf32>
    %c2_284 = arith.constant 2 : index
    %c6_285 = arith.constant 6 : index
    %805 = memref.load %arg11[%c2_284, %c6_285] : memref<4x8xf32, #tpu.memory_space<smem>>
    %806 = vector.broadcast %805 : f32 to vector<8x64xf32>
    %807 = arith.mulf %806, %674 : vector<8x64xf32>
    %808 = arith.addf %804, %807 : vector<8x64xf32>
    %c2_286 = arith.constant 2 : index
    %c7_287 = arith.constant 7 : index
    %809 = memref.load %arg11[%c2_286, %c7_287] : memref<4x8xf32, #tpu.memory_space<smem>>
    %810 = vector.broadcast %809 : f32 to vector<8x64xf32>
    %811 = arith.mulf %810, %713 : vector<8x64xf32>
    %812 = arith.addf %808, %811 : vector<8x64xf32>
    %c2_288 = arith.constant 2 : index
    %813 = memref.load %arg12[%c2_288] : memref<4xf32, #tpu.memory_space<smem>>
    %814 = vector.broadcast %813 : f32 to vector<8x64xf32>
    %815 = arith.addf %812, %814 : vector<8x64xf32>
    %c3_289 = arith.constant 3 : index
    %c0_290 = arith.constant 0 : index
    %816 = memref.load %arg11[%c3_289, %c0_290] : memref<4x8xf32, #tpu.memory_space<smem>>
    %817 = vector.broadcast %816 : f32 to vector<8x64xf32>
    %818 = arith.mulf %817, %440 : vector<8x64xf32>
    %c3_291 = arith.constant 3 : index
    %c1_292 = arith.constant 1 : index
    %819 = memref.load %arg11[%c3_291, %c1_292] : memref<4x8xf32, #tpu.memory_space<smem>>
    %820 = vector.broadcast %819 : f32 to vector<8x64xf32>
    %821 = arith.mulf %820, %479 : vector<8x64xf32>
    %822 = arith.addf %818, %821 : vector<8x64xf32>
    %c3_293 = arith.constant 3 : index
    %c2_294 = arith.constant 2 : index
    %823 = memref.load %arg11[%c3_293, %c2_294] : memref<4x8xf32, #tpu.memory_space<smem>>
    %824 = vector.broadcast %823 : f32 to vector<8x64xf32>
    %825 = arith.mulf %824, %518 : vector<8x64xf32>
    %826 = arith.addf %822, %825 : vector<8x64xf32>
    %c3_295 = arith.constant 3 : index
    %c3_296 = arith.constant 3 : index
    %827 = memref.load %arg11[%c3_295, %c3_296] : memref<4x8xf32, #tpu.memory_space<smem>>
    %828 = vector.broadcast %827 : f32 to vector<8x64xf32>
    %829 = arith.mulf %828, %557 : vector<8x64xf32>
    %830 = arith.addf %826, %829 : vector<8x64xf32>
    %c3_297 = arith.constant 3 : index
    %c4_298 = arith.constant 4 : index
    %831 = memref.load %arg11[%c3_297, %c4_298] : memref<4x8xf32, #tpu.memory_space<smem>>
    %832 = vector.broadcast %831 : f32 to vector<8x64xf32>
    %833 = arith.mulf %832, %596 : vector<8x64xf32>
    %834 = arith.addf %830, %833 : vector<8x64xf32>
    %c3_299 = arith.constant 3 : index
    %c5_300 = arith.constant 5 : index
    %835 = memref.load %arg11[%c3_299, %c5_300] : memref<4x8xf32, #tpu.memory_space<smem>>
    %836 = vector.broadcast %835 : f32 to vector<8x64xf32>
    %837 = arith.mulf %836, %635 : vector<8x64xf32>
    %838 = arith.addf %834, %837 : vector<8x64xf32>
    %c3_301 = arith.constant 3 : index
    %c6_302 = arith.constant 6 : index
    %839 = memref.load %arg11[%c3_301, %c6_302] : memref<4x8xf32, #tpu.memory_space<smem>>
    %840 = vector.broadcast %839 : f32 to vector<8x64xf32>
    %841 = arith.mulf %840, %674 : vector<8x64xf32>
    %842 = arith.addf %838, %841 : vector<8x64xf32>
    %c3_303 = arith.constant 3 : index
    %c7_304 = arith.constant 7 : index
    %843 = memref.load %arg11[%c3_303, %c7_304] : memref<4x8xf32, #tpu.memory_space<smem>>
    %844 = vector.broadcast %843 : f32 to vector<8x64xf32>
    %845 = arith.mulf %844, %713 : vector<8x64xf32>
    %846 = arith.addf %842, %845 : vector<8x64xf32>
    %c3_305 = arith.constant 3 : index
    %847 = memref.load %arg12[%c3_305] : memref<4xf32, #tpu.memory_space<smem>>
    %848 = vector.broadcast %847 : f32 to vector<8x64xf32>
    %849 = arith.addf %846, %848 : vector<8x64xf32>
    %850 = tpu.concatenate %747, %781, %815, %849 in 1 : vector<8x64xf32>, vector<8x64xf32>, vector<8x64xf32>, vector<8x64xf32> -> vector<8x256xf32>
    %851 = tpu.transpose %850, [1, 0] : vector<8x256xf32> -> vector<256x8xf32>
    %852 = vector.extract_strided_slice %851 {offsets = [0, 0], sizes = [32, 8], strides = [1, 1]} : vector<256x8xf32> to vector<32x8xf32>
    %c0_306 = arith.constant 0 : index
    %c0_307 = arith.constant 0 : index
    %c0_308 = arith.constant 0 : index
    %c0_309 = arith.constant 0 : index
    %853 = vector.load %arg13[%c0_306, %c0_307, %c0_308, %c0_309] : memref<2x4x32x8xf32, #tpu.memory_space<vmem>>, vector<1x1x32x8xf32>
    %854 = vector.shape_cast %853 : vector<1x1x32x8xf32> to vector<32x8xf32>
    %855 = vector.shape_cast %852 : vector<32x8xf32> to vector<1x1x32x8xf32>
    tpu.vector_store %arg13[%c0_306, %c0_307, %c0_308, %c0_309], %855 {strides = array<i32>} : memref<2x4x32x8xf32, #tpu.memory_space<vmem>>, vector<1x1x32x8xf32>,
    %856 = vector.extract_strided_slice %851 {offsets = [64, 0], sizes = [32, 8], strides = [1, 1]} : vector<256x8xf32> to vector<32x8xf32>
    %c0_310 = arith.constant 0 : index
    %c1_311 = arith.constant 1 : index
    %c0_312 = arith.constant 0 : index
    %c0_313 = arith.constant 0 : index
    %857 = vector.load %arg13[%c0_310, %c1_311, %c0_312, %c0_313] : memref<2x4x32x8xf32, #tpu.memory_space<vmem>>, vector<1x1x32x8xf32>
    %858 = vector.shape_cast %857 : vector<1x1x32x8xf32> to vector<32x8xf32>
    %859 = vector.shape_cast %856 : vector<32x8xf32> to vector<1x1x32x8xf32>
    tpu.vector_store %arg13[%c0_310, %c1_311, %c0_312, %c0_313], %859 {strides = array<i32>} : memref<2x4x32x8xf32, #tpu.memory_space<vmem>>, vector<1x1x32x8xf32>,
    %860 = vector.extract_strided_slice %851 {offsets = [128, 0], sizes = [32, 8], strides = [1, 1]} : vector<256x8xf32> to vector<32x8xf32>
    %c0_314 = arith.constant 0 : index
    %c2_315 = arith.constant 2 : index
    %c0_316 = arith.constant 0 : index
    %c0_317 = arith.constant 0 : index
    %861 = vector.load %arg13[%c0_314, %c2_315, %c0_316, %c0_317] : memref<2x4x32x8xf32, #tpu.memory_space<vmem>>, vector<1x1x32x8xf32>
    %862 = vector.shape_cast %861 : vector<1x1x32x8xf32> to vector<32x8xf32>
    %863 = vector.shape_cast %860 : vector<32x8xf32> to vector<1x1x32x8xf32>
    tpu.vector_store %arg13[%c0_314, %c2_315, %c0_316, %c0_317], %863 {strides = array<i32>} : memref<2x4x32x8xf32, #tpu.memory_space<vmem>>, vector<1x1x32x8xf32>,
    %864 = vector.extract_strided_slice %851 {offsets = [192, 0], sizes = [32, 8], strides = [1, 1]} : vector<256x8xf32> to vector<32x8xf32>
    %c0_318 = arith.constant 0 : index
    %c3_319 = arith.constant 3 : index
    %c0_320 = arith.constant 0 : index
    %c0_321 = arith.constant 0 : index
    %865 = vector.load %arg13[%c0_318, %c3_319, %c0_320, %c0_321] : memref<2x4x32x8xf32, #tpu.memory_space<vmem>>, vector<1x1x32x8xf32>
    %866 = vector.shape_cast %865 : vector<1x1x32x8xf32> to vector<32x8xf32>
    %867 = vector.shape_cast %864 : vector<32x8xf32> to vector<1x1x32x8xf32>
    tpu.vector_store %arg13[%c0_318, %c3_319, %c0_320, %c0_321], %867 {strides = array<i32>} : memref<2x4x32x8xf32, #tpu.memory_space<vmem>>, vector<1x1x32x8xf32>,
    %868 = vector.extract_strided_slice %851 {offsets = [32, 0], sizes = [32, 8], strides = [1, 1]} : vector<256x8xf32> to vector<32x8xf32>
    %c1_322 = arith.constant 1 : index
    %c0_323 = arith.constant 0 : index
    %c0_324 = arith.constant 0 : index
    %c0_325 = arith.constant 0 : index
    %869 = vector.load %arg13[%c1_322, %c0_323, %c0_324, %c0_325] : memref<2x4x32x8xf32, #tpu.memory_space<vmem>>, vector<1x1x32x8xf32>
    %870 = vector.shape_cast %869 : vector<1x1x32x8xf32> to vector<32x8xf32>
    %871 = vector.shape_cast %868 : vector<32x8xf32> to vector<1x1x32x8xf32>
    tpu.vector_store %arg13[%c1_322, %c0_323, %c0_324, %c0_325], %871 {strides = array<i32>} : memref<2x4x32x8xf32, #tpu.memory_space<vmem>>, vector<1x1x32x8xf32>,
    %872 = vector.extract_strided_slice %851 {offsets = [96, 0], sizes = [32, 8], strides = [1, 1]} : vector<256x8xf32> to vector<32x8xf32>
    %c1_326 = arith.constant 1 : index
    %c1_327 = arith.constant 1 : index
    %c0_328 = arith.constant 0 : index
    %c0_329 = arith.constant 0 : index
    %873 = vector.load %arg13[%c1_326, %c1_327, %c0_328, %c0_329] : memref<2x4x32x8xf32, #tpu.memory_space<vmem>>, vector<1x1x32x8xf32>
    %874 = vector.shape_cast %873 : vector<1x1x32x8xf32> to vector<32x8xf32>
    %875 = vector.shape_cast %872 : vector<32x8xf32> to vector<1x1x32x8xf32>
    tpu.vector_store %arg13[%c1_326, %c1_327, %c0_328, %c0_329], %875 {strides = array<i32>} : memref<2x4x32x8xf32, #tpu.memory_space<vmem>>, vector<1x1x32x8xf32>,
    %876 = vector.extract_strided_slice %851 {offsets = [160, 0], sizes = [32, 8], strides = [1, 1]} : vector<256x8xf32> to vector<32x8xf32>
    %c1_330 = arith.constant 1 : index
    %c2_331 = arith.constant 2 : index
    %c0_332 = arith.constant 0 : index
    %c0_333 = arith.constant 0 : index
    %877 = vector.load %arg13[%c1_330, %c2_331, %c0_332, %c0_333] : memref<2x4x32x8xf32, #tpu.memory_space<vmem>>, vector<1x1x32x8xf32>
    %878 = vector.shape_cast %877 : vector<1x1x32x8xf32> to vector<32x8xf32>
    %879 = vector.shape_cast %876 : vector<32x8xf32> to vector<1x1x32x8xf32>
    tpu.vector_store %arg13[%c1_330, %c2_331, %c0_332, %c0_333], %879 {strides = array<i32>} : memref<2x4x32x8xf32, #tpu.memory_space<vmem>>, vector<1x1x32x8xf32>,
    %880 = vector.extract_strided_slice %851 {offsets = [224, 0], sizes = [32, 8], strides = [1, 1]} : vector<256x8xf32> to vector<32x8xf32>
    %c1_334 = arith.constant 1 : index
    %c3_335 = arith.constant 3 : index
    %c0_336 = arith.constant 0 : index
    %c0_337 = arith.constant 0 : index
    %881 = vector.load %arg13[%c1_334, %c3_335, %c0_336, %c0_337] : memref<2x4x32x8xf32, #tpu.memory_space<vmem>>, vector<1x1x32x8xf32>
    %882 = vector.shape_cast %881 : vector<1x1x32x8xf32> to vector<32x8xf32>
    %883 = vector.shape_cast %880 : vector<32x8xf32> to vector<1x1x32x8xf32>
    tpu.vector_store %arg13[%c1_334, %c3_335, %c0_336, %c0_337], %883 {strides = array<i32>} : memref<2x4x32x8xf32, #tpu.memory_space<vmem>>, vector<1x1x32x8xf32>,
    return
  }
}

</mosaic_0001>

<llo_original>
// kernel: multi_head_self_attention.1
$region0: #{multi_head_self_attention.1}
  #allocation0 [shape = 'u32[]', space=smem, size = 0x4, offset = 0x4, fixed_abs, tag = 'smem constant byte address 0x4 - core index']
  #allocation1 [shape = 'u32[144,128]{1,0:T(1,128)}', space=vmem, size = 0x12000, scoped, tag = 'internal scratch']
  %s0 = inlined_call_operand.vmem [shape: f32[2,4,256], index: 0, kind: input, shape index: {}]
  %s1 = inlined_call_operand.vmem [shape: f32[8,4], index: 1, kind: input, shape index: {}]
  %s2 = inlined_call_operand.vmem [shape: f32[8,1], index: 2, kind: input, shape index: {}]
  %s3 = inlined_call_operand.vmem [shape: f32[8,4], index: 3, kind: input, shape index: {}]
  %s4 = inlined_call_operand.vmem [shape: f32[8,1], index: 4, kind: input, shape index: {}]
  %s5 = inlined_call_operand.vmem [shape: f32[8,4], index: 5, kind: input, shape index: {}]
  %s6 = inlined_call_operand.vmem [shape: f32[8,1], index: 6, kind: input, shape index: {}]
  %s7 = inlined_call_operand.vmem [shape: f32[8], index: 7, kind: input, shape index: {}]
  %s8 = inlined_call_operand.vmem [shape: f32[8], index: 8, kind: input, shape index: {}]
  %s9 = inlined_call_operand.vmem [shape: f32[8,8], index: 9, kind: input, shape index: {}]
  %s10 = inlined_call_operand.vmem [shape: f32[8], index: 10, kind: input, shape index: {}]
  %s11 = inlined_call_operand.vmem [shape: f32[4,8], index: 11, kind: input, shape index: {}]
  %s12 = inlined_call_operand.vmem [shape: f32[4], index: 12, kind: input, shape index: {}]
  %s13 = inlined_call_operand.vmem [shape: f32[2,4,32,8], index: 13, kind: output, shape index: {}]
  %s14 = sld [smem:[#allocation0]]
  $region86: #{multi_head_self_attention.1} parent=0
    _
  %s16 = ssub.s32 1, %s14
  %s17 = scalar_select 0, %s16, %s14
  $region1: #{multi_head_self_attention.1} parent=0
    #allocation2 [shape = 'u8[512]{0}', space=smem, size = 0x200, scoped, tag = 'input window, operand 7, single buffered']
    #allocation3 [shape = 's32[1]{0}', space=sflag, size = 0x4, scoped, tag = 'scoped memory for multi_head_self_attention.1']
    #allocation4 [shape = 'u8[512]{0}', space=smem, size = 0x200, scoped, tag = 'input window, operand 8, single buffered']
    #allocation5 [shape = 's32[1]{0}', space=sflag, size = 0x4, scoped, tag = 'scoped memory for multi_head_self_attention.1']
    #allocation6 [shape = 'u8[4096]{0}', space=smem, size = 0x1000, scoped, tag = 'input window, operand 9, single buffered']
    #allocation7 [shape = 'u8[512]{0}', space=smem, size = 0x200, scoped, tag = 'input window, operand 10, single buffered']
    #allocation8 [shape = 's32[1]{0}', space=sflag, size = 0x4, scoped, tag = 'scoped memory for multi_head_self_attention.1']
    #allocation9 [shape = 'u8[2048]{0}', space=smem, size = 0x800, scoped, tag = 'input window, operand 11, single buffered']
    #allocation10 [shape = 'u8[512]{0}', space=smem, size = 0x200, scoped, tag = 'input window, operand 12, single buffered']
    #allocation11 [shape = 's32[1]{0}', space=sflag, size = 0x4, scoped, tag = 'scoped memory for multi_head_self_attention.1']
    %18 = vsyncpa [#allocation3], 0
    %19 = vsyncpa [#allocation5], 0
    %20 = vsyncpa [#allocation8], 0
    %21 = vsyncpa [#allocation11], 0
    // Predicated region
    $region2: #{multi_head_self_attention.1} parent=1 // pred_check
      _
    $region3: #{multi_head_self_attention.1} parent=1 // pred_check_branch
      %23 = sbr.rel (0) target = $region5
    $region4: #{multi_head_self_attention.1} parent=1 // pred_region
      _
    $region5: #{multi_head_self_attention.1} parent=1 // pred_fallthru
      _
    // Predicated region
    $region6: #{multi_head_self_attention.1} parent=1 // pred_check
      _
    $region7: #{multi_head_self_attention.1} parent=1 // pred_check_branch
      %25 = sbr.rel (0) target = $region9
    $region8: #{multi_head_self_attention.1} parent=1 // pred_region
      _
    $region9: #{multi_head_self_attention.1} parent=1 // pred_fallthru
      _
    // Predicated region
    $region10: #{multi_head_self_attention.1} parent=1 // pred_check
      _
    $region11: #{multi_head_self_attention.1} parent=1 // pred_check_branch
      %27 = sbr.rel (0) target = $region13
    $region12: #{multi_head_self_attention.1} parent=1 // pred_region
      _
    $region13: #{multi_head_self_attention.1} parent=1 // pred_fallthru
      _
    // Predicated region
    $region14: #{multi_head_self_attention.1} parent=1 // pred_check
      _
    $region15: #{multi_head_self_attention.1} parent=1 // pred_check_branch
      %29 = sbr.rel (0) target = $region17
    $region16: #{multi_head_self_attention.1} parent=1 // pred_region
      _
    $region17: #{multi_head_self_attention.1} parent=1 // pred_fallthru
      _
    // Predicated region
    $region18: #{multi_head_self_attention.1} parent=1 // pred_check
      _
    $region19: #{multi_head_self_attention.1} parent=1 // pred_check_branch
      %31 = sbr.rel (0) target = $region21
    $region20: #{multi_head_self_attention.1} parent=1 // pred_region
      _
    $region21: #{multi_head_self_attention.1} parent=1 // pred_fallthru
      _
    // Predicated region
    $region22: #{multi_head_self_attention.1} parent=1 // pred_check
      _
    $region23: #{multi_head_self_attention.1} parent=1 // pred_check_branch
      %33 = sbr.rel (0) target = $region25
    $region24: #{multi_head_self_attention.1} parent=1 // pred_region
      _
    $region25: #{multi_head_self_attention.1} parent=1 // pred_fallthru
      _
    // Predicated region
    $region26: #{multi_head_self_attention.1} parent=1 // pred_check
      _
    $region27: #{multi_head_self_attention.1} parent=1 // pred_check_branch
      %35 = sbr.rel (0) target = $region29
    $region28: #{multi_head_self_attention.1} parent=1 // pred_region
      _
    $region29: #{multi_head_self_attention.1} parent=1 // pred_fallthru
      _
    // Predicated region
    $region30: #{multi_head_self_attention.1} parent=1 // pred_check
      _
    $region31: #{multi_head_self_attention.1} parent=1 // pred_check_branch
      %37 = sbr.rel (0) target = $region33
    $region32: #{multi_head_self_attention.1} parent=1 // pred_region
      %s39 = ssub.s32 16, 16
      %40 = vsyncadd [#allocation3], %s39
      %s42 = sshll.u32 %s7, 4
      %s43 = int_to_ptr.vmem [resolvable:$true] %s42
      %45 = dma.vmem_to_smem %s43, 16, [#allocation2], [#allocation3]
    $region33: #{multi_head_self_attention.1} parent=1 // pred_fallthru
      _
    // Predicated region
    $region34: #{multi_head_self_attention.1} parent=1 // pred_check
      _
    $region35: #{multi_head_self_attention.1} parent=1 // pred_check_branch
      %47 = sbr.rel (0) target = $region37
    $region36: #{multi_head_self_attention.1} parent=1 // pred_region
      %s49 = ssub.s32 16, 16
      %50 = vsyncadd [#allocation5], %s49
      %s52 = sshll.u32 %s8, 4
      %s53 = int_to_ptr.vmem [resolvable:$true] %s52
      %55 = dma.vmem_to_smem %s53, 16, [#allocation4], [#allocation5]
    $region37: #{multi_head_self_attention.1} parent=1 // pred_fallthru
      _
    // Predicated region
    $region38: #{multi_head_self_attention.1} parent=1 // pred_check
      _
    $region39: #{multi_head_self_attention.1} parent=1 // pred_check_branch
      %57 = sbr.rel (0) target = $region41
    $region40: #{multi_head_self_attention.1} parent=1 // pred_region
      %s59 = ssub.s32 128, 128
      %60 = vsyncadd [#allocation5], %s59
      %s62 = sshll.u32 %s9, 4
      %s63 = int_to_ptr.vmem [resolvable:$true] %s62
      %65 = dma.vmem_to_smem %s63, 128, [#allocation6], [#allocation5]
    $region41: #{multi_head_self_attention.1} parent=1 // pred_fallthru
      _
    // Predicated region
    $region42: #{multi_head_self_attention.1} parent=1 // pred_check
      _
    $region43: #{multi_head_self_attention.1} parent=1 // pred_check_branch
      %67 = sbr.rel (0) target = $region45
    $region44: #{multi_head_self_attention.1} parent=1 // pred_region
      %s69 = ssub.s32 16, 16
      %70 = vsyncadd [#allocation8], %s69
      %s72 = sshll.u32 %s10, 4
      %s73 = int_to_ptr.vmem [resolvable:$true] %s72
      %75 = dma.vmem_to_smem %s73, 16, [#allocation7], [#allocation8]
    $region45: #{multi_head_self_attention.1} parent=1 // pred_fallthru
      _
    // Predicated region
    $region46: #{multi_head_self_attention.1} parent=1 // pred_check
      _
    $region47: #{multi_head_self_attention.1} parent=1 // pred_check_branch
      %77 = sbr.rel (0) target = $region49
    $region48: #{multi_head_self_attention.1} parent=1 // pred_region
      %s79 = ssub.s32 64, 64
      %80 = vsyncadd [#allocation8], %s79
      %s82 = sshll.u32 %s11, 4
      %s83 = int_to_ptr.vmem [resolvable:$true] %s82
      %85 = dma.vmem_to_smem %s83, 64, [#allocation9], [#allocation8]
    $region49: #{multi_head_self_attention.1} parent=1 // pred_fallthru
      _
    // Predicated region
    $region50: #{multi_head_self_attention.1} parent=1 // pred_check
      _
    $region51: #{multi_head_self_attention.1} parent=1 // pred_check_branch
      %87 = sbr.rel (0) target = $region53
    $region52: #{multi_head_self_attention.1} parent=1 // pred_region
      %s89 = ssub.s32 16, 16
      %90 = vsyncadd [#allocation11], %s89
      %s92 = sshll.u32 %s12, 4
      %s93 = int_to_ptr.vmem [resolvable:$true] %s92
      %95 = dma.vmem_to_smem %s93, 16, [#allocation10], [#allocation11]
    $region53: #{multi_head_self_attention.1} parent=1 // pred_fallthru
      _
    // Predicated region
    $region54: #{multi_head_self_attention.1} parent=1 // pred_check
      _
    $region55: #{multi_head_self_attention.1} parent=1 // pred_check_branch
      %97 = sbr.rel (0) target = $region57
    $region56: #{multi_head_self_attention.1} parent=1 // pred_region
      %98 = dma.done [#allocation3], 16
    $region57: #{multi_head_self_attention.1} parent=1 // pred_fallthru
      _
    // Predicated region
    $region58: #{multi_head_self_attention.1} parent=1 // pred_check
      _
    $region59: #{multi_head_self_attention.1} parent=1 // pred_check_branch
      %100 = sbr.rel (0) target = $region61
    $region60: #{multi_head_self_attention.1} parent=1 // pred_region
      %101 = dma.done [#allocation5], 16
    $region61: #{multi_head_self_attention.1} parent=1 // pred_fallthru
      _
    // Predicated region
    $region62: #{multi_head_self_attention.1} parent=1 // pred_check
      _
    $region63: #{multi_head_self_attention.1} parent=1 // pred_check_branch
      %103 = sbr.rel (0) target = $region65
    $region64: #{multi_head_self_attention.1} parent=1 // pred_region
      %104 = dma.done [#allocation5], 128
    $region65: #{multi_head_self_attention.1} parent=1 // pred_fallthru
      _
    // Predicated region
    $region66: #{multi_head_self_attention.1} parent=1 // pred_check
      _
    $region67: #{multi_head_self_attention.1} parent=1 // pred_check_branch
      %106 = sbr.rel (0) target = $region69
    $region68: #{multi_head_self_attention.1} parent=1 // pred_region
      %107 = dma.done [#allocation8], 16
    $region69: #{multi_head_self_attention.1} parent=1 // pred_fallthru
      _
    // Predicated region
    $region70: #{multi_head_self_attention.1} parent=1 // pred_check
      _
    $region71: #{multi_head_self_attention.1} parent=1 // pred_check_branch
      %109 = sbr.rel (0) target = $region73
    $region72: #{multi_head_self_attention.1} parent=1 // pred_region
      %110 = dma.done [#allocation8], 64
    $region73: #{multi_head_self_attention.1} parent=1 // pred_fallthru
      _
    // Predicated region
    $region74: #{multi_head_self_attention.1} parent=1 // pred_check
      _
    $region75: #{multi_head_self_attention.1} parent=1 // pred_check_branch
      %112 = sbr.rel (0) target = $region77
    $region76: #{multi_head_self_attention.1} parent=1 // pred_region
      %113 = dma.done [#allocation11], 16
    $region77: #{multi_head_self_attention.1} parent=1 // pred_fallthru
      _
    %114 = sfence
    %v115 = vld [vmem:[%s0] sm:$0xff]
    %s116 = scalar_lea.vmem %s0, 8
    %v117 = vld [vmem:[%s116] sm:$0xff]
    %v119 = vcombine.high %v115, %v115
    %v122 = vcombine.high %v117, %v117
    %v124 = vld [vmem:[%s1] sm:$0xff]
    %v125 = vld [vmem:[%s2] sm:$0xff]
    %127 = vset.pattern.permute.xlu0 0
    %128 = vperm.xlu0 %127, %v124
    %v129 = vpop.permute.xlu0 %128
    %v131 = vlaneseq
    %v132 = vshrl.u32 %v131, 7
    %v133 = vsub.s32 0, %v132
    %v134 = vrot.slane %v115, %v133
    %v135 = vlaneseq
    %v136 = vshrl.u32 %v135, 7
    %v137 = vsub.s32 0, %v136
    %v138 = vrot.slane %v119, %v137
    %v139 = vlaneseq
    %v140 = vshrl.u32 %v139, 7
    %v141 = vsub.s32 0, %v140
    %v142 = vrot.slane %v117, %v141
    %v143 = vlaneseq
    %v144 = vshrl.u32 %v143, 7
    %v145 = vsub.s32 0, %v144
    %v146 = vrot.slane %v122, %v145
    %v147 = vmul.f32 %v129, %v134
    %v148 = vmul.f32 %v129, %v138
    %v149 = vmul.f32 %v129, %v142
    %v150 = vmul.f32 %v129, %v146
    %151 = vset.pattern.permute.xlu0 1
    %152 = vperm.xlu0 %151, %v124
    %v153 = vpop.permute.xlu0 %152
    %v155 = vlaneseq
    %v156 = vshrl.u32 %v155, 7
    %v157 = vsub.s32 1, %v156
    %v158 = vrot.slane %v115, %v157
    %v159 = vlaneseq
    %v160 = vshrl.u32 %v159, 7
    %v161 = vsub.s32 1, %v160
    %v162 = vrot.slane %v119, %v161
    %v163 = vlaneseq
    %v164 = vshrl.u32 %v163, 7
    %v165 = vsub.s32 1, %v164
    %v166 = vrot.slane %v117, %v165
    %v167 = vlaneseq
    %v168 = vshrl.u32 %v167, 7
    %v169 = vsub.s32 1, %v168
    %v170 = vrot.slane %v122, %v169
    %v171 = vmul.f32 %v153, %v158
    %v172 = vmul.f32 %v153, %v162
    %v173 = vmul.f32 %v153, %v166
    %v174 = vmul.f32 %v153, %v170
    %v175 = vadd.f32 %v147, %v171
    %v176 = vadd.f32 %v148, %v172
    %v177 = vadd.f32 %v149, %v173
    %v178 = vadd.f32 %v150, %v174
    %179 = vset.pattern.permute.xlu0 2
    %180 = vperm.xlu0 %179, %v124
    %v181 = vpop.permute.xlu0 %180
    %v183 = vlaneseq
    %v184 = vshrl.u32 %v183, 7
    %v185 = vsub.s32 2, %v184
    %v186 = vrot.slane %v115, %v185
    %v187 = vlaneseq
    %v188 = vshrl.u32 %v187, 7
    %v189 = vsub.s32 2, %v188
    %v190 = vrot.slane %v119, %v189
    %v191 = vlaneseq
    %v192 = vshrl.u32 %v191, 7
    %v193 = vsub.s32 2, %v192
    %v194 = vrot.slane %v117, %v193
    %v195 = vlaneseq
    %v196 = vshrl.u32 %v195, 7
    %v197 = vsub.s32 2, %v196
    %v198 = vrot.slane %v122, %v197
    %v199 = vmul.f32 %v181, %v186
    %v200 = vmul.f32 %v181, %v190
    %v201 = vmul.f32 %v181, %v194
    %v202 = vmul.f32 %v181, %v198
    %v203 = vadd.f32 %v175, %v199
    %v204 = vadd.f32 %v176, %v200
    %v205 = vadd.f32 %v177, %v201
    %v206 = vadd.f32 %v178, %v202
    %207 = vset.pattern.permute.xlu0 3
    %208 = vperm.xlu0 %207, %v124
    %v209 = vpop.permute.xlu0 %208
    %v211 = vlaneseq
    %v212 = vshrl.u32 %v211, 7
    %v213 = vsub.s32 3, %v212
    %v214 = vrot.slane %v115, %v213
    %v215 = vlaneseq
    %v216 = vshrl.u32 %v215, 7
    %v217 = vsub.s32 3, %v216
    %v218 = vrot.slane %v119, %v217
    %v219 = vlaneseq
    %v220 = vshrl.u32 %v219, 7
    %v221 = vsub.s32 3, %v220
    %v222 = vrot.slane %v117, %v221
    %v223 = vlaneseq
    %v224 = vshrl.u32 %v223, 7
    %v225 = vsub.s32 3, %v224
    %v226 = vrot.slane %v122, %v225
    %v227 = vmul.f32 %v209, %v214
    %v228 = vmul.f32 %v209, %v218
    %v229 = vmul.f32 %v209, %v222
    %v230 = vmul.f32 %v209, %v226
    %v231 = vadd.f32 %v203, %v227
    %v232 = vadd.f32 %v204, %v228
    %v233 = vadd.f32 %v205, %v229
    %v234 = vadd.f32 %v206, %v230
    %236 = vset.pattern.permute.xlu0 0
    %237 = vperm.xlu0 %236, %v125
    %v238 = vpop.permute.xlu0 %237
    %v240 = vadd.f32 %v231, %v238
    %v241 = vadd.f32 %v232, %v238
    %v242 = vadd.f32 %v233, %v238
    %v243 = vadd.f32 %v234, %v238
    %v244 = vld [vmem:[%s3] sm:$0xff]
    %v245 = vld [vmem:[%s4] sm:$0xff]
    %247 = vset.pattern.permute.xlu0 0
    %248 = vperm.xlu0 %247, %v244
    %v249 = vpop.permute.xlu0 %248
    %v251 = vmul.f32 %v249, %v134
    %v252 = vmul.f32 %v249, %v138
    %v253 = vmul.f32 %v249, %v142
    %v254 = vmul.f32 %v249, %v146
    %255 = vset.pattern.permute.xlu0 1
    %256 = vperm.xlu0 %255, %v244
    %v257 = vpop.permute.xlu0 %256
    %v259 = vmul.f32 %v257, %v158
    %v260 = vmul.f32 %v257, %v162
    %v261 = vmul.f32 %v257, %v166
    %v262 = vmul.f32 %v257, %v170
    %v263 = vadd.f32 %v251, %v259
    %v264 = vadd.f32 %v252, %v260
    %v265 = vadd.f32 %v253, %v261
    %v266 = vadd.f32 %v254, %v262
    %267 = vset.pattern.permute.xlu0 2
    %268 = vperm.xlu0 %267, %v244
    %v269 = vpop.permute.xlu0 %268
    %v271 = vmul.f32 %v269, %v186
    %v272 = vmul.f32 %v269, %v190
    %v273 = vmul.f32 %v269, %v194
    %v274 = vmul.f32 %v269, %v198
    %v275 = vadd.f32 %v263, %v271
    %v276 = vadd.f32 %v264, %v272
    %v277 = vadd.f32 %v265, %v273
    %v278 = vadd.f32 %v266, %v274
    %279 = vset.pattern.permute.xlu0 3
    %280 = vperm.xlu0 %279, %v244
    %v281 = vpop.permute.xlu0 %280
    %v283 = vmul.f32 %v281, %v214
    %v284 = vmul.f32 %v281, %v218
    %v285 = vmul.f32 %v281, %v222
    %v286 = vmul.f32 %v281, %v226
    %v287 = vadd.f32 %v275, %v283
    %v288 = vadd.f32 %v276, %v284
    %v289 = vadd.f32 %v277, %v285
    %v290 = vadd.f32 %v278, %v286
    %292 = vset.pattern.permute.xlu0 0
    %293 = vperm.xlu0 %292, %v245
    %v294 = vpop.permute.xlu0 %293
    %v296 = vadd.f32 %v287, %v294
    %v297 = vadd.f32 %v288, %v294
    %v298 = vadd.f32 %v289, %v294
    %v299 = vadd.f32 %v290, %v294
    %v300 = vld [vmem:[%s5] sm:$0xff]
    %v301 = vld [vmem:[%s6] sm:$0xff]
    %303 = vset.pattern.permute.xlu0 0
    %304 = vperm.xlu0 %303, %v300
    %v305 = vpop.permute.xlu0 %304
    %v307 = vmul.f32 %v305, %v134
    %v308 = vmul.f32 %v305, %v138
    %v309 = vmul.f32 %v305, %v142
    %v310 = vmul.f32 %v305, %v146
    %311 = vset.pattern.permute.xlu0 1
    %312 = vperm.xlu0 %311, %v300
    %v313 = vpop.permute.xlu0 %312
    %v315 = vmul.f32 %v313, %v158
    %v316 = vmul.f32 %v313, %v162
    %v317 = vmul.f32 %v313, %v166
    %v318 = vmul.f32 %v313, %v170
    %v319 = vadd.f32 %v307, %v315
    %v320 = vadd.f32 %v308, %v316
    %v321 = vadd.f32 %v309, %v317
    %v322 = vadd.f32 %v310, %v318
    %323 = vset.pattern.permute.xlu0 2
    %324 = vperm.xlu0 %323, %v300
    %v325 = vpop.permute.xlu0 %324
    %v327 = vmul.f32 %v325, %v186
    %v328 = vmul.f32 %v325, %v190
    %v329 = vmul.f32 %v325, %v194
    %v330 = vmul.f32 %v325, %v198
    %v331 = vadd.f32 %v319, %v327
    %v332 = vadd.f32 %v320, %v328
    %v333 = vadd.f32 %v321, %v329
    %v334 = vadd.f32 %v322, %v330
    %335 = vset.pattern.permute.xlu0 3
    %336 = vperm.xlu0 %335, %v300
    %v337 = vpop.permute.xlu0 %336
    %v339 = vmul.f32 %v337, %v214
    %v340 = vmul.f32 %v337, %v218
    %v341 = vmul.f32 %v337, %v222
    %v342 = vmul.f32 %v337, %v226
    %v343 = vadd.f32 %v331, %v339
    %v344 = vadd.f32 %v332, %v340
    %v345 = vadd.f32 %v333, %v341
    %v346 = vadd.f32 %v334, %v342
    %348 = vset.pattern.permute.xlu0 0
    %349 = vperm.xlu0 %348, %v301
    %v350 = vpop.permute.xlu0 %349
    %v352 = vadd.f32 %v343, %v350
    %v353 = vadd.f32 %v344, %v350
    %v354 = vadd.f32 %v345, %v350
    %v355 = vadd.f32 %v346, %v350
    %356 = vmatprep.subr.mxu0 %v297
    %357 = vmatpush1.xpose.msra.mxu0 %v296
    %358 = vmatprep.subr.mxu0 0.0
    %359 = vmatpush1.xpose.msra.mxu0 0.0
    %360 = vmatprep.subr.mxu0 0.0
    %361 = vmatpush1.xpose.msra.mxu0 0.0
    %362 = vmatprep.subr.mxu0 0.0
    %363 = vmatpush1.xpose.msra.mxu0 0.0
    %364 = vmatprep.subr.mxu0 0.0
    %365 = vmatpush1.xpose.msra.mxu0 0.0
    %366 = vmatprep.subr.mxu0 0.0
    %367 = vmatpush1.xpose.msra.mxu0 0.0
    %368 = vmatprep.subr.mxu0 0.0
    %369 = vmatpush1.xpose.msra.mxu0 0.0
    %370 = vmatprep.subr.mxu0 0.0
    %371 = vmatpush1.xpose.msra.mxu0 0.0
    %372 = vmatprep.subr.mxu0 0.0
    %373 = vmatpush1.xpose.msra.mxu0 0.0
    %374 = vmatprep.subr.mxu0 0.0
    %375 = vmatpush1.xpose.msra.mxu0 0.0
    %376 = vmatprep.subr.mxu0 0.0
    %377 = vmatpush1.xpose.msra.mxu0 0.0
    %378 = vmatprep.subr.mxu0 0.0
    %379 = vmatpush1.xpose.msra.mxu0 0.0
    %380 = vmatprep.subr.mxu0 0.0
    %381 = vmatpush1.xpose.msra.mxu0 0.0
    %382 = vmatprep.subr.mxu0 0.0
    %383 = vmatpush1.xpose.msra.mxu0 0.0
    %384 = vmatprep.subr.mxu0 0.0
    %385 = vmatpush1.xpose.msra.mxu0 0.0
    %386 = vmatprep.subr.mxu0 0.0
    %387 = vmatpush1.xpose.msra.mxu0 0.0
    %388 = vmatprep.subr.mxu0 0.0
    %389 = vmatpush1.xpose.msra.mxu0 0.0
    %390 = vmatprep.subr.mxu0 0.0
    %391 = vmatpush1.xpose.msra.mxu0 0.0
    %392 = vmatprep.subr.mxu0 0.0
    %393 = vmatpush1.xpose.msra.mxu0 0.0
    %394 = vmatprep.subr.mxu0 0.0
    %395 = vmatpush1.xpose.msra.mxu0 0.0
    %396 = vmatprep.subr.mxu0 0.0
    %397 = vmatpush1.xpose.msra.mxu0 0.0
    %398 = vmatprep.subr.mxu0 0.0
    %399 = vmatpush1.xpose.msra.mxu0 0.0
    %400 = vmatprep.subr.mxu0 0.0
    %401 = vmatpush1.xpose.msra.mxu0 0.0
    %402 = vmatprep.subr.mxu0 0.0
    %403 = vmatpush1.xpose.msra.mxu0 0.0
    %404 = vmatprep.subr.mxu0 0.0
    %405 = vmatpush1.xpose.msra.mxu0 0.0
    %406 = vmatprep.subr.mxu0 0.0
    %407 = vmatpush1.xpose.msra.mxu0 0.0
    %408 = vmatprep.subr.mxu0 0.0
    %409 = vmatpush1.xpose.msra.mxu0 0.0
    %410 = vmatprep.subr.mxu0 0.0
    %411 = vmatpush1.xpose.msra.mxu0 0.0
    %412 = vmatprep.subr.mxu0 0.0
    %413 = vmatpush1.xpose.msra.mxu0 0.0
    %414 = vmatprep.subr.mxu0 0.0
    %415 = vmatpush1.xpose.msra.mxu0 0.0
    %416 = vmatprep.subr.mxu0 0.0
    %417 = vmatpush1.xpose.msra.mxu0 0.0
    %418 = vmatprep.subr.mxu0 0.0
    %419 = vmatpush1.xpose.msra.mxu0 0.0
    %420 = vmatprep.mubr.f32.mxu0 %v241
    %421 = vmatmul.mubr.f32.gmra.mrb[0].mxu0 %v240
    %v422 = vpop.f32.mrb[0].mxu0
    %v423 = vadd.f32 0.0, %v422
    %v424 = vpop.f32.mrb[0].mxu0
    %425 = vdwg.mxu0
    %426 = vmatprep.subr.mxu0 %v299
    %427 = vmatpush1.xpose.msra.mxu0 %v298
    %428 = vmatprep.subr.mxu0 0.0
    %429 = vmatpush1.xpose.msra.mxu0 0.0
    %430 = vmatprep.subr.mxu0 0.0
    %431 = vmatpush1.xpose.msra.mxu0 0.0
    %432 = vmatprep.subr.mxu0 0.0
    %433 = vmatpush1.xpose.msra.mxu0 0.0
    %434 = vmatprep.subr.mxu0 0.0
    %435 = vmatpush1.xpose.msra.mxu0 0.0
    %436 = vmatprep.subr.mxu0 0.0
    %437 = vmatpush1.xpose.msra.mxu0 0.0
    %438 = vmatprep.subr.mxu0 0.0
    %439 = vmatpush1.xpose.msra.mxu0 0.0
    %440 = vmatprep.subr.mxu0 0.0
    %441 = vmatpush1.xpose.msra.mxu0 0.0
    %442 = vmatprep.subr.mxu0 0.0
    %443 = vmatpush1.xpose.msra.mxu0 0.0
    %444 = vmatprep.subr.mxu0 0.0
    %445 = vmatpush1.xpose.msra.mxu0 0.0
    %446 = vmatprep.subr.mxu0 0.0
    %447 = vmatpush1.xpose.msra.mxu0 0.0
    %448 = vmatprep.subr.mxu0 0.0
    %449 = vmatpush1.xpose.msra.mxu0 0.0
    %450 = vmatprep.subr.mxu0 0.0
    %451 = vmatpush1.xpose.msra.mxu0 0.0
    %452 = vmatprep.subr.mxu0 0.0
    %453 = vmatpush1.xpose.msra.mxu0 0.0
    %454 = vmatprep.subr.mxu0 0.0
    %455 = vmatpush1.xpose.msra.mxu0 0.0
    %456 = vmatprep.subr.mxu0 0.0
    %457 = vmatpush1.xpose.msra.mxu0 0.0
    %458 = vmatprep.subr.mxu0 0.0
    %459 = vmatpush1.xpose.msra.mxu0 0.0
    %460 = vmatprep.subr.mxu0 0.0
    %461 = vmatpush1.xpose.msra.mxu0 0.0
    %462 = vmatprep.subr.mxu0 0.0
    %463 = vmatpush1.xpose.msra.mxu0 0.0
    %464 = vmatprep.subr.mxu0 0.0
    %465 = vmatpush1.xpose.msra.mxu0 0.0
    %466 = vmatprep.subr.mxu0 0.0
    %467 = vmatpush1.xpose.msra.mxu0 0.0
    %468 = vmatprep.subr.mxu0 0.0
    %469 = vmatpush1.xpose.msra.mxu0 0.0
    %470 = vmatprep.subr.mxu0 0.0
    %471 = vmatpush1.xpose.msra.mxu0 0.0
    %472 = vmatprep.subr.mxu0 0.0
    %473 = vmatpush1.xpose.msra.mxu0 0.0
    %474 = vmatprep.subr.mxu0 0.0
    %475 = vmatpush1.xpose.msra.mxu0 0.0
    %476 = vmatprep.subr.mxu0 0.0
    %477 = vmatpush1.xpose.msra.mxu0 0.0
    %478 = vmatprep.subr.mxu0 0.0
    %479 = vmatpush1.xpose.msra.mxu0 0.0
    %480 = vmatprep.subr.mxu0 0.0
    %481 = vmatpush1.xpose.msra.mxu0 0.0
    %482 = vmatprep.subr.mxu0 0.0
    %483 = vmatpush1.xpose.msra.mxu0 0.0
    %484 = vmatprep.subr.mxu0 0.0
    %485 = vmatpush1.xpose.msra.mxu0 0.0
    %486 = vmatprep.subr.mxu0 0.0
    %487 = vmatpush1.xpose.msra.mxu0 0.0
    %488 = vmatprep.subr.mxu0 0.0
    %489 = vmatpush1.xpose.msra.mxu0 0.0
    %490 = vmatprep.mubr.f32.mxu0 %v243
    %491 = vmatmul.mubr.f32.gmra.mrb[0].mxu0 %v242
    %v492 = vpop.f32.mrb[0].mxu0
    %v493 = vadd.f32 0.0, %v492
    %v494 = vpop.f32.mrb[0].mxu0
    %495 = vdwg.mxu0
    %v496 = vmul.f32 %v423, 0.0625
    %v497 = vmul.f32 %v493, 0.0625
    %vm498 = vcmask 64512
    %v499 = vsel %vm498, %v496, -inf
    %500 = vmax.xlane.f32.xlu0 %v499
    %v501 = vpop.xlane.xlu0 %500
    %v502 = vsel %vm498, %v497, -inf
    %503 = vmax.xlane.f32.xlu0 %v502
    %v504 = vpop.xlane.xlu0 %503
    %v505 = vsub.f32 %v496, %v501
    %v506 = vsub.f32 %v497, %v504
    %v507 = vmul.f32 %v505, 1.442695
    %v508 = vpow.pop %v507
    %v509 = vmul.f32 %v506, 1.442695
    %v510 = vpow.pop %v509
    %v511 = vsel %vm498, %v508, 0.0
    %512 = vadd.xlane.f32.xlu0 %v511
    %v513 = vpop.xlane.xlu0 %512
    %v514 = vsel %vm498, %v510, 0.0
    %515 = vadd.xlane.f32.xlu0 %v514
    %v516 = vpop.xlane.xlu0 %515
    %v517 = vrcp.pop %v513
    %v518 = vmul.f32 %v508, %v517
    %v519 = vrcp.pop %v516
    %v520 = vmul.f32 %v510, %v519
    %v522 = vsel %vm498, %v518, 0
    %524 = vmatprep.subr.mxu0 %v353
    %525 = vmatpush1.msra.mxu0 %v352
    %526 = vmatprep.subr.mxu0 0.0
    %527 = vmatpush1.msra.mxu0 0.0
    %528 = vmatprep.subr.mxu0 0.0
    %529 = vmatpush1.msra.mxu0 0.0
    %530 = vmatprep.subr.mxu0 0.0
    %531 = vmatpush1.msra.mxu0 0.0
    %532 = vmatprep.subr.mxu0 0.0
    %533 = vmatpush1.msra.mxu0 0.0
    %534 = vmatprep.subr.mxu0 0.0
    %535 = vmatpush1.msra.mxu0 0.0
    %536 = vmatprep.subr.mxu0 0.0
    %537 = vmatpush1.msra.mxu0 0.0
    %538 = vmatprep.subr.mxu0 0.0
    %539 = vmatpush1.msra.mxu0 0.0
    %540 = vmatprep.subr.mxu0 0.0
    %541 = vmatpush1.msra.mxu0 0.0
    %542 = vmatprep.subr.mxu0 0.0
    %543 = vmatpush1.msra.mxu0 0.0
    %544 = vmatprep.subr.mxu0 0.0
    %545 = vmatpush1.msra.mxu0 0.0
    %546 = vmatprep.subr.mxu0 0.0
    %547 = vmatpush1.msra.mxu0 0.0
    %548 = vmatprep.subr.mxu0 0.0
    %549 = vmatpush1.msra.mxu0 0.0
    %550 = vmatprep.subr.mxu0 0.0
    %551 = vmatpush1.msra.mxu0 0.0
    %552 = vmatprep.subr.mxu0 0.0
    %553 = vmatpush1.msra.mxu0 0.0
    %554 = vmatprep.subr.mxu0 0.0
    %555 = vmatpush1.msra.mxu0 0.0
    %556 = vmatprep.subr.mxu0 0.0
    %557 = vmatpush1.msra.mxu0 0.0
    %558 = vmatprep.subr.mxu0 0.0
    %559 = vmatpush1.msra.mxu0 0.0
    %560 = vmatprep.subr.mxu0 0.0
    %561 = vmatpush1.msra.mxu0 0.0
    %562 = vmatprep.subr.mxu0 0.0
    %563 = vmatpush1.msra.mxu0 0.0
    %564 = vmatprep.subr.mxu0 0.0
    %565 = vmatpush1.msra.mxu0 0.0
    %566 = vmatprep.subr.mxu0 0.0
    %567 = vmatpush1.msra.mxu0 0.0
    %568 = vmatprep.subr.mxu0 0.0
    %569 = vmatpush1.msra.mxu0 0.0
    %570 = vmatprep.subr.mxu0 0.0
    %571 = vmatpush1.msra.mxu0 0.0
    %572 = vmatprep.subr.mxu0 0.0
    %573 = vmatpush1.msra.mxu0 0.0
    %574 = vmatprep.subr.mxu0 0.0
    %575 = vmatpush1.msra.mxu0 0.0
    %576 = vmatprep.subr.mxu0 0.0
    %577 = vmatpush1.msra.mxu0 0.0
    %578 = vmatprep.subr.mxu0 0.0
    %579 = vmatpush1.msra.mxu0 0.0
    %580 = vmatprep.subr.mxu0 0.0
    %581 = vmatpush1.msra.mxu0 0.0
    %582 = vmatprep.subr.mxu0 0.0
    %583 = vmatpush1.msra.mxu0 0.0
    %584 = vmatprep.subr.mxu0 0.0
    %585 = vmatpush1.msra.mxu0 0.0
    %586 = vmatprep.subr.mxu0 0.0
    %587 = vmatpush1.msra.mxu0 0.0
    %588 = vmatprep.mubr.f32.mxu0 0.0
    %589 = vmatmul.mubr.f32.gmra.mrb[0].mxu0 %v522
    %v590 = vpop.f32.mrb[0].mxu0
    %v591 = vadd.f32 0.0, %v590
    %v592 = vpop.f32.mrb[0].mxu0
    %v593 = vadd.f32 0.0, %v592
    %594 = vdwg.mxu0
    %v596 = vsel %vm498, %v520, 0
    %598 = vmatprep.subr.mxu0 %v355
    %599 = vmatpush1.msra.mxu0 %v354
    %600 = vmatprep.subr.mxu0 0.0
    %601 = vmatpush1.msra.mxu0 0.0
    %602 = vmatprep.subr.mxu0 0.0
    %603 = vmatpush1.msra.mxu0 0.0
    %604 = vmatprep.subr.mxu0 0.0
    %605 = vmatpush1.msra.mxu0 0.0
    %606 = vmatprep.subr.mxu0 0.0
    %607 = vmatpush1.msra.mxu0 0.0
    %608 = vmatprep.subr.mxu0 0.0
    %609 = vmatpush1.msra.mxu0 0.0
    %610 = vmatprep.subr.mxu0 0.0
    %611 = vmatpush1.msra.mxu0 0.0
    %612 = vmatprep.subr.mxu0 0.0
    %613 = vmatpush1.msra.mxu0 0.0
    %614 = vmatprep.subr.mxu0 0.0
    %615 = vmatpush1.msra.mxu0 0.0
    %616 = vmatprep.subr.mxu0 0.0
    %617 = vmatpush1.msra.mxu0 0.0
    %618 = vmatprep.subr.mxu0 0.0
    %619 = vmatpush1.msra.mxu0 0.0
    %620 = vmatprep.subr.mxu0 0.0
    %621 = vmatpush1.msra.mxu0 0.0
    %622 = vmatprep.subr.mxu0 0.0
    %623 = vmatpush1.msra.mxu0 0.0
    %624 = vmatprep.subr.mxu0 0.0
    %625 = vmatpush1.msra.mxu0 0.0
    %626 = vmatprep.subr.mxu0 0.0
    %627 = vmatpush1.msra.mxu0 0.0
    %628 = vmatprep.subr.mxu0 0.0
    %629 = vmatpush1.msra.mxu0 0.0
    %630 = vmatprep.subr.mxu0 0.0
    %631 = vmatpush1.msra.mxu0 0.0
    %632 = vmatprep.subr.mxu0 0.0
    %633 = vmatpush1.msra.mxu0 0.0
    %634 = vmatprep.subr.mxu0 0.0
    %635 = vmatpush1.msra.mxu0 0.0
    %636 = vmatprep.subr.mxu0 0.0
    %637 = vmatpush1.msra.mxu0 0.0
    %638 = vmatprep.subr.mxu0 0.0
    %639 = vmatpush1.msra.mxu0 0.0
    %640 = vmatprep.subr.mxu0 0.0
    %641 = vmatpush1.msra.mxu0 0.0
    %642 = vmatprep.subr.mxu0 0.0
    %643 = vmatpush1.msra.mxu0 0.0
    %644 = vmatprep.subr.mxu0 0.0
    %645 = vmatpush1.msra.mxu0 0.0
    %646 = vmatprep.subr.mxu0 0.0
    %647 = vmatpush1.msra.mxu0 0.0
    %648 = vmatprep.subr.mxu0 0.0
    %649 = vmatpush1.msra.mxu0 0.0
    %650 = vmatprep.subr.mxu0 0.0
    %651 = vmatpush1.msra.mxu0 0.0
    %652 = vmatprep.subr.mxu0 0.0
    %653 = vmatpush1.msra.mxu0 0.0
    %654 = vmatprep.subr.mxu0 0.0
    %655 = vmatpush1.msra.mxu0 0.0
    %656 = vmatprep.subr.mxu0 0.0
    %657 = vmatpush1.msra.mxu0 0.0
    %658 = vmatprep.subr.mxu0 0.0
    %659 = vmatpush1.msra.mxu0 0.0
    %660 = vmatprep.subr.mxu0 0.0
    %661 = vmatpush1.msra.mxu0 0.0
    %662 = vmatprep.mubr.f32.mxu0 0.0
    %663 = vmatmul.mubr.f32.gmra.mrb[0].mxu0 %v596
    %v664 = vpop.f32.mrb[0].mxu0
    %v665 = vadd.f32 0.0, %v664
    %v666 = vpop.f32.mrb[0].mxu0
    %v667 = vadd.f32 0.0, %v666
    %668 = vdwg.mxu0
    %670 = vrot.lane.b32.xlu0 %v665, 32
    %v671 = vpop.permute.xlu0 %670
    %vm673 = vcmask 261120
    %v674 = vsel %vm673, %v591, %v671
    %vm675 = vcmask 523264
    %v676 = vsel %vm675, %v674, 0.0
    %677 = vadd.xlane.f32.xlu0 %v676
    %v678 = vpop.xlane.xlu0 %677
    %v679 = vrot.slane %v678, 4
    %v680 = vadd.f32 %v678, %v679
    %v681 = vrot.slane %v680, 2
    %v682 = vadd.f32 %v680, %v681
    %v683 = vrot.slane %v682, 1
    %v684 = vadd.f32 %v682, %v683
    %s685 = vtos %v684
    %s686 = smul.f32 %s685, 0.001953125
    %v687 = vstv %s686
    %v688 = vsub.f32 %v674, %v687
    %v689 = vmul.f32 %v688, %v688
    %v690 = vsel %vm675, %v689, 0.0
    %691 = vadd.xlane.f32.xlu0 %v690
    %v692 = vpop.xlane.xlu0 %691
    %v693 = vrot.slane %v692, 4
    %v694 = vadd.f32 %v692, %v693
    %v695 = vrot.slane %v694, 2
    %v696 = vadd.f32 %v694, %v695
    %v697 = vrot.slane %v696, 1
    %v698 = vadd.f32 %v696, %v697
    %s699 = vtos %v698
    %s700 = smul.f32 %s699, 0.001953125
    %s701 = sld [smem:[#allocation2]]
    %s702 = sadd.f32 %s700, 0.0001
    %v703 = vstv %s702
    %v704 = vrsqrt.pop %v703
    %s705 = vtos %v704
    %s706 = smul.f32 %s701, %s705
    %s707 = sld [smem:[#allocation4]]
    %s708 = smul.f32 %s686, %s706
    %s709 = ssub.f32 %s707, %s708
    %v710 = vstv %s706
    %v711 = vmul.f32 %v674, %v710
    %v712 = vstv %s709
    %v713 = vadd.f32 %v711, %v712
    %vm714 = vcmp.ge.f32.partialorder %v713, 0.0
    %v715 = vmul.f32 %v713, 0.01
    %v716 = vsel %vm714, %v713, %v715
    %718 = vrot.lane.b32.xlu0 %v591, 96
    %v719 = vpop.permute.xlu0 %718
    %v721 = vsel %vm673, %v719, %v665
    %v722 = vsel %vm675, %v721, 0.0
    %723 = vadd.xlane.f32.xlu0 %v722
    %v724 = vpop.xlane.xlu0 %723
    %v725 = vrot.slane %v724, 4
    %v726 = vadd.f32 %v724, %v725
    %v727 = vrot.slane %v726, 2
    %v728 = vadd.f32 %v726, %v727
    %v729 = vrot.slane %v728, 1
    %v730 = vadd.f32 %v728, %v729
    %s731 = vtos %v730
    %s732 = smul.f32 %s731, 0.001953125
    %v733 = vstv %s732
    %v734 = vsub.f32 %v721, %v733
    %v735 = vmul.f32 %v734, %v734
    %v736 = vsel %vm675, %v735, 0.0
    %737 = vadd.xlane.f32.xlu0 %v736
    %v738 = vpop.xlane.xlu0 %737
    %v739 = vrot.slane %v738, 4
    %v740 = vadd.f32 %v738, %v739
    %v741 = vrot.slane %v740, 2
    %v742 = vadd.f32 %v740, %v741
    %v743 = vrot.slane %v742, 1
    %v744 = vadd.f32 %v742, %v743
    %s745 = vtos %v744
    %s746 = smul.f32 %s745, 0.001953125
    %s747 = sld [smem:[#allocation2 + $0x1]]
    %s748 = sadd.f32 %s746, 0.0001
    %v749 = vstv %s748
    %v750 = vrsqrt.pop %v749
    %s751 = vtos %v750
    %s752 = smul.f32 %s747, %s751
    %s753 = sld [smem:[#allocation4 + $0x1]]
    %s754 = smul.f32 %s732, %s752
    %s755 = ssub.f32 %s753, %s754
    %v756 = vstv %s752
    %v757 = vmul.f32 %v721, %v756
    %v758 = vstv %s755
    %v759 = vadd.f32 %v757, %v758
    %vm760 = vcmp.ge.f32.partialorder %v759, 0.0
    %v761 = vmul.f32 %v759, 0.01
    %v762 = vsel %vm760, %v759, %v761
    %763 = vrot.lane.b32.xlu0 %v591, 64
    %v764 = vpop.permute.xlu0 %763
    %766 = vrot.lane.b32.xlu0 %v665, 96
    %v767 = vpop.permute.xlu0 %766
    %v769 = vsel %vm673, %v764, %v767
    %v770 = vsel %vm675, %v769, 0.0
    %771 = vadd.xlane.f32.xlu0 %v770
    %v772 = vpop.xlane.xlu0 %771
    %v773 = vrot.slane %v772, 4
    %v774 = vadd.f32 %v772, %v773
    %v775 = vrot.slane %v774, 2
    %v776 = vadd.f32 %v774, %v775
    %v777 = vrot.slane %v776, 1
    %v778 = vadd.f32 %v776, %v777
    %s779 = vtos %v778
    %s780 = smul.f32 %s779, 0.001953125
    %v781 = vstv %s780
    %v782 = vsub.f32 %v769, %v781
    %v783 = vmul.f32 %v782, %v782
    %v784 = vsel %vm675, %v783, 0.0
    %785 = vadd.xlane.f32.xlu0 %v784
    %v786 = vpop.xlane.xlu0 %785
    %v787 = vrot.slane %v786, 4
    %v788 = vadd.f32 %v786, %v787
    %v789 = vrot.slane %v788, 2
    %v790 = vadd.f32 %v788, %v789
    %v791 = vrot.slane %v790, 1
    %v792 = vadd.f32 %v790, %v791
    %s793 = vtos %v792
    %s794 = smul.f32 %s793, 0.001953125
    %s795 = sld [smem:[#allocation2 + $0x2]]
    %s796 = sadd.f32 %s794, 0.0001
    %v797 = vstv %s796
    %v798 = vrsqrt.pop %v797
    %s799 = vtos %v798
    %s800 = smul.f32 %s795, %s799
    %s801 = sld [smem:[#allocation4 + $0x2]]
    %s802 = smul.f32 %s780, %s800
    %s803 = ssub.f32 %s801, %s802
    %v804 = vstv %s800
    %v805 = vmul.f32 %v769, %v804
    %v806 = vstv %s803
    %v807 = vadd.f32 %v805, %v806
    %vm808 = vcmp.ge.f32.partialorder %v807, 0.0
    %v809 = vmul.f32 %v807, 0.01
    %v810 = vsel %vm808, %v807, %v809
    %811 = vrot.lane.b32.xlu0 %v591, 32
    %v812 = vpop.permute.xlu0 %811
    %814 = vrot.lane.b32.xlu0 %v665, 64
    %v815 = vpop.permute.xlu0 %814
    %v817 = vsel %vm673, %v812, %v815
    %v818 = vsel %vm675, %v817, 0.0
    %819 = vadd.xlane.f32.xlu0 %v818
    %v820 = vpop.xlane.xlu0 %819
    %v821 = vrot.slane %v820, 4
    %v822 = vadd.f32 %v820, %v821
    %v823 = vrot.slane %v822, 2
    %v824 = vadd.f32 %v822, %v823
    %v825 = vrot.slane %v824, 1
    %v826 = vadd.f32 %v824, %v825
    %s827 = vtos %v826
    %s828 = smul.f32 %s827, 0.001953125
    %v829 = vstv %s828
    %v830 = vsub.f32 %v817, %v829
    %v831 = vmul.f32 %v830, %v830
    %v832 = vsel %vm675, %v831, 0.0
    %833 = vadd.xlane.f32.xlu0 %v832
    %v834 = vpop.xlane.xlu0 %833
    %v835 = vrot.slane %v834, 4
    %v836 = vadd.f32 %v834, %v835
    %v837 = vrot.slane %v836, 2
    %v838 = vadd.f32 %v836, %v837
    %v839 = vrot.slane %v838, 1
    %v840 = vadd.f32 %v838, %v839
    %s841 = vtos %v840
    %s842 = smul.f32 %s841, 0.001953125
    %s843 = sld [smem:[#allocation2 + $0x3]]
    %s844 = sadd.f32 %s842, 0.0001
    %v845 = vstv %s844
    %v846 = vrsqrt.pop %v845
    %s847 = vtos %v846
    %s848 = smul.f32 %s843, %s847
    %s849 = sld [smem:[#allocation4 + $0x3]]
    %s850 = smul.f32 %s828, %s848
    %s851 = ssub.f32 %s849, %s850
    %v852 = vstv %s848
    %v853 = vmul.f32 %v817, %v852
    %v854 = vstv %s851
    %v855 = vadd.f32 %v853, %v854
    %vm856 = vcmp.ge.f32.partialorder %v855, 0.0
    %v857 = vmul.f32 %v855, 0.01
    %v858 = vsel %vm856, %v855, %v857
    %860 = vrot.lane.b32.xlu0 %v667, 32
    %v861 = vpop.permute.xlu0 %860
    %v863 = vsel %vm673, %v593, %v861
    %v864 = vsel %vm675, %v863, 0.0
    %865 = vadd.xlane.f32.xlu0 %v864
    %v866 = vpop.xlane.xlu0 %865
    %v867 = vrot.slane %v866, 4
    %v868 = vadd.f32 %v866, %v867
    %v869 = vrot.slane %v868, 2
    %v870 = vadd.f32 %v868, %v869
    %v871 = vrot.slane %v870, 1
    %v872 = vadd.f32 %v870, %v871
    %s873 = vtos %v872
    %s874 = smul.f32 %s873, 0.001953125
    %v875 = vstv %s874
    %v876 = vsub.f32 %v863, %v875
    %v877 = vmul.f32 %v876, %v876
    %v878 = vsel %vm675, %v877, 0.0
    %879 = vadd.xlane.f32.xlu0 %v878
    %v880 = vpop.xlane.xlu0 %879
    %v881 = vrot.slane %v880, 4
    %v882 = vadd.f32 %v880, %v881
    %v883 = vrot.slane %v882, 2
    %v884 = vadd.f32 %v882, %v883
    %v885 = vrot.slane %v884, 1
    %v886 = vadd.f32 %v884, %v885
    %s887 = vtos %v886
    %s888 = smul.f32 %s887, 0.001953125
    %s889 = sld [smem:[#allocation2 + $0x4]]
    %s890 = sadd.f32 %s888, 0.0001
    %v891 = vstv %s890
    %v892 = vrsqrt.pop %v891
    %s893 = vtos %v892
    %s894 = smul.f32 %s889, %s893
    %s895 = sld [smem:[#allocation4 + $0x4]]
    %s896 = smul.f32 %s874, %s894
    %s897 = ssub.f32 %s895, %s896
    %v898 = vstv %s894
    %v899 = vmul.f32 %v863, %v898
    %v900 = vstv %s897
    %v901 = vadd.f32 %v899, %v900
    %vm902 = vcmp.ge.f32.partialorder %v901, 0.0
    %v903 = vmul.f32 %v901, 0.01
    %v904 = vsel %vm902, %v901, %v903
    %906 = vrot.lane.b32.xlu0 %v593, 96
    %v907 = vpop.permute.xlu0 %906
    %v909 = vsel %vm673, %v907, %v667
    %v910 = vsel %vm675, %v909, 0.0
    %911 = vadd.xlane.f32.xlu0 %v910
    %v912 = vpop.xlane.xlu0 %911
    %v913 = vrot.slane %v912, 4
    %v914 = vadd.f32 %v912, %v913
    %v915 = vrot.slane %v914, 2
    %v916 = vadd.f32 %v914, %v915
    %v917 = vrot.slane %v916, 1
    %v918 = vadd.f32 %v916, %v917
    %s919 = vtos %v918
    %s920 = smul.f32 %s919, 0.001953125
    %v921 = vstv %s920
    %v922 = vsub.f32 %v909, %v921
    %v923 = vmul.f32 %v922, %v922
    %v924 = vsel %vm675, %v923, 0.0
    %925 = vadd.xlane.f32.xlu0 %v924
    %v926 = vpop.xlane.xlu0 %925
    %v927 = vrot.slane %v926, 4
    %v928 = vadd.f32 %v926, %v927
    %v929 = vrot.slane %v928, 2
    %v930 = vadd.f32 %v928, %v929
    %v931 = vrot.slane %v930, 1
    %v932 = vadd.f32 %v930, %v931
    %s933 = vtos %v932
    %s934 = smul.f32 %s933, 0.001953125
    %s935 = sld [smem:[#allocation2 + $0x5]]
    %s936 = sadd.f32 %s934, 0.0001
    %v937 = vstv %s936
    %v938 = vrsqrt.pop %v937
    %s939 = vtos %v938
    %s940 = smul.f32 %s935, %s939
    %s941 = sld [smem:[#allocation4 + $0x5]]
    %s942 = smul.f32 %s920, %s940
    %s943 = ssub.f32 %s941, %s942
    %v944 = vstv %s940
    %v945 = vmul.f32 %v909, %v944
    %v946 = vstv %s943
    %v947 = vadd.f32 %v945, %v946
    %vm948 = vcmp.ge.f32.partialorder %v947, 0.0
    %v949 = vmul.f32 %v947, 0.01
    %v950 = vsel %vm948, %v947, %v949
    %951 = vrot.lane.b32.xlu0 %v593, 64
    %v952 = vpop.permute.xlu0 %951
    %954 = vrot.lane.b32.xlu0 %v667, 96
    %v955 = vpop.permute.xlu0 %954
    %v957 = vsel %vm673, %v952, %v955
    %v958 = vsel %vm675, %v957, 0.0
    %959 = vadd.xlane.f32.xlu0 %v958
    %v960 = vpop.xlane.xlu0 %959
    %v961 = vrot.slane %v960, 4
    %v962 = vadd.f32 %v960, %v961
    %v963 = vrot.slane %v962, 2
    %v964 = vadd.f32 %v962, %v963
    %v965 = vrot.slane %v964, 1
    %v966 = vadd.f32 %v964, %v965
    %s967 = vtos %v966
    %s968 = smul.f32 %s967, 0.001953125
    %v969 = vstv %s968
    %v970 = vsub.f32 %v957, %v969
    %v971 = vmul.f32 %v970, %v970
    %v972 = vsel %vm675, %v971, 0.0
    %973 = vadd.xlane.f32.xlu0 %v972
    %v974 = vpop.xlane.xlu0 %973
    %v975 = vrot.slane %v974, 4
    %v976 = vadd.f32 %v974, %v975
    %v977 = vrot.slane %v976, 2
    %v978 = vadd.f32 %v976, %v977
    %v979 = vrot.slane %v978, 1
    %v980 = vadd.f32 %v978, %v979
    %s981 = vtos %v980
    %s982 = smul.f32 %s981, 0.001953125
    %s983 = sld [smem:[#allocation2 + $0x6]]
    %s984 = sadd.f32 %s982, 0.0001
    %v985 = vstv %s984
    %v986 = vrsqrt.pop %v985
    %s987 = vtos %v986
    %s988 = smul.f32 %s983, %s987
    %s989 = sld [smem:[#allocation4 + $0x6]]
    %s990 = smul.f32 %s968, %s988
    %s991 = ssub.f32 %s989, %s990
    %v992 = vstv %s988
    %v993 = vmul.f32 %v957, %v992
    %v994 = vstv %s991
    %v995 = vadd.f32 %v993, %v994
    %vm996 = vcmp.ge.f32.partialorder %v995, 0.0
    %v997 = vmul.f32 %v995, 0.01
    %v998 = vsel %vm996, %v995, %v997
    %999 = vrot.lane.b32.xlu0 %v593, 32
    %v1000 = vpop.permute.xlu0 %999
    %1002 = vrot.lane.b32.xlu0 %v667, 64
    %v1003 = vpop.permute.xlu0 %1002
    %v1005 = vsel %vm673, %v1000, %v1003
    %v1006 = vsel %vm675, %v1005, 0.0
    %1007 = vadd.xlane.f32.xlu0 %v1006
    %v1008 = vpop.xlane.xlu0 %1007
    %v1009 = vrot.slane %v1008, 4
    %v1010 = vadd.f32 %v1008, %v1009
    %v1011 = vrot.slane %v1010, 2
    %v1012 = vadd.f32 %v1010, %v1011
    %v1013 = vrot.slane %v1012, 1
    %v1014 = vadd.f32 %v1012, %v1013
    %s1015 = vtos %v1014
    %s1016 = smul.f32 %s1015, 0.001953125
    %v1017 = vstv %s1016
    %v1018 = vsub.f32 %v1005, %v1017
    %v1019 = vmul.f32 %v1018, %v1018
    %v1020 = vsel %vm675, %v1019, 0.0
    %1021 = vadd.xlane.f32.xlu0 %v1020
    %v1022 = vpop.xlane.xlu0 %1021
    %v1023 = vrot.slane %v1022, 4
    %v1024 = vadd.f32 %v1022, %v1023
    %v1025 = vrot.slane %v1024, 2
    %v1026 = vadd.f32 %v1024, %v1025
    %v1027 = vrot.slane %v1026, 1
    %v1028 = vadd.f32 %v1026, %v1027
    %s1029 = vtos %v1028
    %s1030 = smul.f32 %s1029, 0.001953125
    %s1031 = sld [smem:[#allocation2 + $0x7]]
    %s1032 = sadd.f32 %s1030, 0.0001
    %v1033 = vstv %s1032
    %v1034 = vrsqrt.pop %v1033
    %s1035 = vtos %v1034
    %s1036 = smul.f32 %s1031, %s1035
    %s1037 = sld [smem:[#allocation4 + $0x7]]
    %s1038 = smul.f32 %s1016, %s1036
    %s1039 = ssub.f32 %s1037, %s1038
    %v1040 = vstv %s1036
    %v1041 = vmul.f32 %v1005, %v1040
    %v1042 = vstv %s1039
    %v1043 = vadd.f32 %v1041, %v1042
    %vm1044 = vcmp.ge.f32.partialorder %v1043, 0.0
    %v1045 = vmul.f32 %v1043, 0.01
    %v1046 = vsel %vm1044, %v1043, %v1045
    %s1047 = sld [smem:[#allocation6]]
    %v1048 = vstv %s1047
    %v1049 = vmul.f32 %v1048, %v716
    %s1050 = sld [smem:[#allocation6 + $0x1]]
    %v1051 = vstv %s1050
    %v1052 = vmul.f32 %v1051, %v762
    %v1053 = vadd.f32 %v1049, %v1052
    %s1054 = sld [smem:[#allocation6 + $0x2]]
    %v1055 = vstv %s1054
    %v1056 = vmul.f32 %v1055, %v810
    %v1057 = vadd.f32 %v1053, %v1056
    %s1058 = sld [smem:[#allocation6 + $0x3]]
    %v1059 = vstv %s1058
    %v1060 = vmul.f32 %v1059, %v858
    %v1061 = vadd.f32 %v1057, %v1060
    %s1062 = sld [smem:[#allocation6 + $0x4]]
    %v1063 = vstv %s1062
    %v1064 = vmul.f32 %v1063, %v904
    %v1065 = vadd.f32 %v1061, %v1064
    %s1066 = sld [smem:[#allocation6 + $0x5]]
    %v1067 = vstv %s1066
    %v1068 = vmul.f32 %v1067, %v950
    %v1069 = vadd.f32 %v1065, %v1068
    %s1070 = sld [smem:[#allocation6 + $0x6]]
    %v1071 = vstv %s1070
    %v1072 = vmul.f32 %v1071, %v998
    %v1073 = vadd.f32 %v1069, %v1072
    %s1074 = sld [smem:[#allocation6 + $0x7]]
    %v1075 = vstv %s1074
    %v1076 = vmul.f32 %v1075, %v1046
    %v1077 = vadd.f32 %v1073, %v1076
    %s1078 = sld [smem:[#allocation7]]
    %v1079 = vstv %s1078
    %v1080 = vadd.f32 %v1077, %v1079
    %vm1081 = vcmp.ge.f32.partialorder %v1080, 0.0
    %v1082 = vmul.f32 %v1080, 0.01
    %v1083 = vsel %vm1081, %v1080, %v1082
    %s1084 = sld [smem:[#allocation6 + $0x80]]
    %v1085 = vstv %s1084
    %v1086 = vmul.f32 %v1085, %v716
    %s1087 = sld [smem:[#allocation6 + $0x81]]
    %v1088 = vstv %s1087
    %v1089 = vmul.f32 %v1088, %v762
    %v1090 = vadd.f32 %v1086, %v1089
    %s1091 = sld [smem:[#allocation6 + $0x82]]
    %v1092 = vstv %s1091
    %v1093 = vmul.f32 %v1092, %v810
    %v1094 = vadd.f32 %v1090, %v1093
    %s1095 = sld [smem:[#allocation6 + $0x83]]
    %v1096 = vstv %s1095
    %v1097 = vmul.f32 %v1096, %v858
    %v1098 = vadd.f32 %v1094, %v1097
    %s1099 = sld [smem:[#allocation6 + $0x84]]
    %v1100 = vstv %s1099
    %v1101 = vmul.f32 %v1100, %v904
    %v1102 = vadd.f32 %v1098, %v1101
    %s1103 = sld [smem:[#allocation6 + $0x85]]
    %v1104 = vstv %s1103
    %v1105 = vmul.f32 %v1104, %v950
    %v1106 = vadd.f32 %v1102, %v1105
    %s1107 = sld [smem:[#allocation6 + $0x86]]
    %v1108 = vstv %s1107
    %v1109 = vmul.f32 %v1108, %v998
    %v1110 = vadd.f32 %v1106, %v1109
    %s1111 = sld [smem:[#allocation6 + $0x87]]
    %v1112 = vstv %s1111
    %v1113 = vmul.f32 %v1112, %v1046
    %v1114 = vadd.f32 %v1110, %v1113
    %s1115 = sld [smem:[#allocation7 + $0x1]]
    %v1116 = vstv %s1115
    %v1117 = vadd.f32 %v1114, %v1116
    %vm1118 = vcmp.ge.f32.partialorder %v1117, 0.0
    %v1119 = vmul.f32 %v1117, 0.01
    %v1120 = vsel %vm1118, %v1117, %v1119
    %s1121 = sld [smem:[#allocation6 + $0x100]]
    %v1122 = vstv %s1121
    %v1123 = vmul.f32 %v1122, %v716
    %s1124 = sld [smem:[#allocation6 + $0x101]]
    %v1125 = vstv %s1124
    %v1126 = vmul.f32 %v1125, %v762
    %v1127 = vadd.f32 %v1123, %v1126
    %s1128 = sld [smem:[#allocation6 + $0x102]]
    %v1129 = vstv %s1128
    %v1130 = vmul.f32 %v1129, %v810
    %v1131 = vadd.f32 %v1127, %v1130
    %s1132 = sld [smem:[#allocation6 + $0x103]]
    %v1133 = vstv %s1132
    %v1134 = vmul.f32 %v1133, %v858
    %v1135 = vadd.f32 %v1131, %v1134
    %s1136 = sld [smem:[#allocation6 + $0x104]]
    %v1137 = vstv %s1136
    %v1138 = vmul.f32 %v1137, %v904
    %v1139 = vadd.f32 %v1135, %v1138
    %s1140 = sld [smem:[#allocation6 + $0x105]]
    %v1141 = vstv %s1140
    %v1142 = vmul.f32 %v1141, %v950
    %v1143 = vadd.f32 %v1139, %v1142
    %s1144 = sld [smem:[#allocation6 + $0x106]]
    %v1145 = vstv %s1144
    %v1146 = vmul.f32 %v1145, %v998
    %v1147 = vadd.f32 %v1143, %v1146
    %s1148 = sld [smem:[#allocation6 + $0x107]]
    %v1149 = vstv %s1148
    %v1150 = vmul.f32 %v1149, %v1046
    %v1151 = vadd.f32 %v1147, %v1150
    %s1152 = sld [smem:[#allocation7 + $0x2]]
    %v1153 = vstv %s1152
    %v1154 = vadd.f32 %v1151, %v1153
    %vm1155 = vcmp.ge.f32.partialorder %v1154, 0.0
    %v1156 = vmul.f32 %v1154, 0.01
    %v1157 = vsel %vm1155, %v1154, %v1156
    %s1158 = sld [smem:[#allocation6 + $0x180]]
    %v1159 = vstv %s1158
    %v1160 = vmul.f32 %v1159, %v716
    %s1161 = sld [smem:[#allocation6 + $0x181]]
    %v1162 = vstv %s1161
    %v1163 = vmul.f32 %v1162, %v762
    %v1164 = vadd.f32 %v1160, %v1163
    %s1165 = sld [smem:[#allocation6 + $0x182]]
    %v1166 = vstv %s1165
    %v1167 = vmul.f32 %v1166, %v810
    %v1168 = vadd.f32 %v1164, %v1167
    %s1169 = sld [smem:[#allocation6 + $0x183]]
    %v1170 = vstv %s1169
    %v1171 = vmul.f32 %v1170, %v858
    %v1172 = vadd.f32 %v1168, %v1171
    %s1173 = sld [smem:[#allocation6 + $0x184]]
    %v1174 = vstv %s1173
    %v1175 = vmul.f32 %v1174, %v904
    %v1176 = vadd.f32 %v1172, %v1175
    %s1177 = sld [smem:[#allocation6 + $0x185]]
    %v1178 = vstv %s1177
    %v1179 = vmul.f32 %v1178, %v950
    %v1180 = vadd.f32 %v1176, %v1179
    %s1181 = sld [smem:[#allocation6 + $0x186]]
    %v1182 = vstv %s1181
    %v1183 = vmul.f32 %v1182, %v998
    %v1184 = vadd.f32 %v1180, %v1183
    %s1185 = sld [smem:[#allocation6 + $0x187]]
    %v1186 = vstv %s1185
    %v1187 = vmul.f32 %v1186, %v1046
    %v1188 = vadd.f32 %v1184, %v1187
    %s1189 = sld [smem:[#allocation7 + $0x3]]
    %v1190 = vstv %s1189
    %v1191 = vadd.f32 %v1188, %v1190
    %vm1192 = vcmp.ge.f32.partialorder %v1191, 0.0
    %v1193 = vmul.f32 %v1191, 0.01
    %v1194 = vsel %vm1192, %v1191, %v1193
    %s1195 = sld [smem:[#allocation6 + $0x200]]
    %v1196 = vstv %s1195
    %v1197 = vmul.f32 %v1196, %v716
    %s1198 = sld [smem:[#allocation6 + $0x201]]
    %v1199 = vstv %s1198
    %v1200 = vmul.f32 %v1199, %v762
    %v1201 = vadd.f32 %v1197, %v1200
    %s1202 = sld [smem:[#allocation6 + $0x202]]
    %v1203 = vstv %s1202
    %v1204 = vmul.f32 %v1203, %v810
    %v1205 = vadd.f32 %v1201, %v1204
    %s1206 = sld [smem:[#allocation6 + $0x203]]
    %v1207 = vstv %s1206
    %v1208 = vmul.f32 %v1207, %v858
    %v1209 = vadd.f32 %v1205, %v1208
    %s1210 = sld [smem:[#allocation6 + $0x204]]
    %v1211 = vstv %s1210
    %v1212 = vmul.f32 %v1211, %v904
    %v1213 = vadd.f32 %v1209, %v1212
    %s1214 = sld [smem:[#allocation6 + $0x205]]
    %v1215 = vstv %s1214
    %v1216 = vmul.f32 %v1215, %v950
    %v1217 = vadd.f32 %v1213, %v1216
    %s1218 = sld [smem:[#allocation6 + $0x206]]
    %v1219 = vstv %s1218
    %v1220 = vmul.f32 %v1219, %v998
    %v1221 = vadd.f32 %v1217, %v1220
    %s1222 = sld [smem:[#allocation6 + $0x207]]
    %v1223 = vstv %s1222
    %v1224 = vmul.f32 %v1223, %v1046
    %v1225 = vadd.f32 %v1221, %v1224
    %s1226 = sld [smem:[#allocation7 + $0x4]]
    %v1227 = vstv %s1226
    %v1228 = vadd.f32 %v1225, %v1227
    %vm1229 = vcmp.ge.f32.partialorder %v1228, 0.0
    %v1230 = vmul.f32 %v1228, 0.01
    %v1231 = vsel %vm1229, %v1228, %v1230
    %s1232 = sld [smem:[#allocation6 + $0x280]]
    %v1233 = vstv %s1232
    %v1234 = vmul.f32 %v1233, %v716
    %s1235 = sld [smem:[#allocation6 + $0x281]]
    %v1236 = vstv %s1235
    %v1237 = vmul.f32 %v1236, %v762
    %v1238 = vadd.f32 %v1234, %v1237
    %s1239 = sld [smem:[#allocation6 + $0x282]]
    %v1240 = vstv %s1239
    %v1241 = vmul.f32 %v1240, %v810
    %v1242 = vadd.f32 %v1238, %v1241
    %s1243 = sld [smem:[#allocation6 + $0x283]]
    %v1244 = vstv %s1243
    %v1245 = vmul.f32 %v1244, %v858
    %v1246 = vadd.f32 %v1242, %v1245
    %s1247 = sld [smem:[#allocation6 + $0x284]]
    %v1248 = vstv %s1247
    %v1249 = vmul.f32 %v1248, %v904
    %v1250 = vadd.f32 %v1246, %v1249
    %s1251 = sld [smem:[#allocation6 + $0x285]]
    %v1252 = vstv %s1251
    %v1253 = vmul.f32 %v1252, %v950
    %v1254 = vadd.f32 %v1250, %v1253
    %s1255 = sld [smem:[#allocation6 + $0x286]]
    %v1256 = vstv %s1255
    %v1257 = vmul.f32 %v1256, %v998
    %v1258 = vadd.f32 %v1254, %v1257
    %s1259 = sld [smem:[#allocation6 + $0x287]]
    %v1260 = vstv %s1259
    %v1261 = vmul.f32 %v1260, %v1046
    %v1262 = vadd.f32 %v1258, %v1261
    %s1263 = sld [smem:[#allocation7 + $0x5]]
    %v1264 = vstv %s1263
    %v1265 = vadd.f32 %v1262, %v1264
    %vm1266 = vcmp.ge.f32.partialorder %v1265, 0.0
    %v1267 = vmul.f32 %v1265, 0.01
    %v1268 = vsel %vm1266, %v1265, %v1267
    %s1269 = sld [smem:[#allocation6 + $0x300]]
    %v1270 = vstv %s1269
    %v1271 = vmul.f32 %v1270, %v716
    %s1272 = sld [smem:[#allocation6 + $0x301]]
    %v1273 = vstv %s1272
    %v1274 = vmul.f32 %v1273, %v762
    %v1275 = vadd.f32 %v1271, %v1274
    %s1276 = sld [smem:[#allocation6 + $0x302]]
    %v1277 = vstv %s1276
    %v1278 = vmul.f32 %v1277, %v810
    %v1279 = vadd.f32 %v1275, %v1278
    %s1280 = sld [smem:[#allocation6 + $0x303]]
    %v1281 = vstv %s1280
    %v1282 = vmul.f32 %v1281, %v858
    %v1283 = vadd.f32 %v1279, %v1282
    %s1284 = sld [smem:[#allocation6 + $0x304]]
    %v1285 = vstv %s1284
    %v1286 = vmul.f32 %v1285, %v904
    %v1287 = vadd.f32 %v1283, %v1286
    %s1288 = sld [smem:[#allocation6 + $0x305]]
    %v1289 = vstv %s1288
    %v1290 = vmul.f32 %v1289, %v950
    %v1291 = vadd.f32 %v1287, %v1290
    %s1292 = sld [smem:[#allocation6 + $0x306]]
    %v1293 = vstv %s1292
    %v1294 = vmul.f32 %v1293, %v998
    %v1295 = vadd.f32 %v1291, %v1294
    %s1296 = sld [smem:[#allocation6 + $0x307]]
    %v1297 = vstv %s1296
    %v1298 = vmul.f32 %v1297, %v1046
    %v1299 = vadd.f32 %v1295, %v1298
    %s1300 = sld [smem:[#allocation7 + $0x6]]
    %v1301 = vstv %s1300
    %v1302 = vadd.f32 %v1299, %v1301
    %vm1303 = vcmp.ge.f32.partialorder %v1302, 0.0
    %v1304 = vmul.f32 %v1302, 0.01
    %v1305 = vsel %vm1303, %v1302, %v1304
    %s1306 = sld [smem:[#allocation6 + $0x380]]
    %v1307 = vstv %s1306
    %v1308 = vmul.f32 %v1307, %v716
    %s1309 = sld [smem:[#allocation6 + $0x381]]
    %v1310 = vstv %s1309
    %v1311 = vmul.f32 %v1310, %v762
    %v1312 = vadd.f32 %v1308, %v1311
    %s1313 = sld [smem:[#allocation6 + $0x382]]
    %v1314 = vstv %s1313
    %v1315 = vmul.f32 %v1314, %v810
    %v1316 = vadd.f32 %v1312, %v1315
    %s1317 = sld [smem:[#allocation6 + $0x383]]
    %v1318 = vstv %s1317
    %v1319 = vmul.f32 %v1318, %v858
    %v1320 = vadd.f32 %v1316, %v1319
    %s1321 = sld [smem:[#allocation6 + $0x384]]
    %v1322 = vstv %s1321
    %v1323 = vmul.f32 %v1322, %v904
    %v1324 = vadd.f32 %v1320, %v1323
    %s1325 = sld [smem:[#allocation6 + $0x385]]
    %v1326 = vstv %s1325
    %v1327 = vmul.f32 %v1326, %v950
    %v1328 = vadd.f32 %v1324, %v1327
    %s1329 = sld [smem:[#allocation6 + $0x386]]
    %v1330 = vstv %s1329
    %v1331 = vmul.f32 %v1330, %v998
    %v1332 = vadd.f32 %v1328, %v1331
    %s1333 = sld [smem:[#allocation6 + $0x387]]
    %v1334 = vstv %s1333
    %v1335 = vmul.f32 %v1334, %v1046
    %v1336 = vadd.f32 %v1332, %v1335
    %s1337 = sld [smem:[#allocation7 + $0x7]]
    %v1338 = vstv %s1337
    %v1339 = vadd.f32 %v1336, %v1338
    %vm1340 = vcmp.ge.f32.partialorder %v1339, 0.0
    %v1341 = vmul.f32 %v1339, 0.01
    %v1342 = vsel %vm1340, %v1339, %v1341
    %s1343 = sld [smem:[#allocation9]]
    %v1344 = vstv %s1343
    %v1345 = vmul.f32 %v1344, %v1083
    %s1346 = sld [smem:[#allocation9 + $0x1]]
    %v1347 = vstv %s1346
    %v1348 = vmul.f32 %v1347, %v1120
    %v1349 = vadd.f32 %v1345, %v1348
    %s1350 = sld [smem:[#allocation9 + $0x2]]
    %v1351 = vstv %s1350
    %v1352 = vmul.f32 %v1351, %v1157
    %v1353 = vadd.f32 %v1349, %v1352
    %s1354 = sld [smem:[#allocation9 + $0x3]]
    %v1355 = vstv %s1354
    %v1356 = vmul.f32 %v1355, %v1194
    %v1357 = vadd.f32 %v1353, %v1356
    %s1358 = sld [smem:[#allocation9 + $0x4]]
    %v1359 = vstv %s1358
    %v1360 = vmul.f32 %v1359, %v1231
    %v1361 = vadd.f32 %v1357, %v1360
    %s1362 = sld [smem:[#allocation9 + $0x5]]
    %v1363 = vstv %s1362
    %v1364 = vmul.f32 %v1363, %v1268
    %v1365 = vadd.f32 %v1361, %v1364
    %s1366 = sld [smem:[#allocation9 + $0x6]]
    %v1367 = vstv %s1366
    %v1368 = vmul.f32 %v1367, %v1305
    %v1369 = vadd.f32 %v1365, %v1368
    %s1370 = sld [smem:[#allocation9 + $0x7]]
    %v1371 = vstv %s1370
    %v1372 = vmul.f32 %v1371, %v1342
    %v1373 = vadd.f32 %v1369, %v1372
    %s1374 = sld [smem:[#allocation10]]
    %v1375 = vstv %s1374
    %v1376 = vadd.f32 %v1373, %v1375
    %s1377 = sld [smem:[#allocation9 + $0x80]]
    %v1378 = vstv %s1377
    %v1379 = vmul.f32 %v1378, %v1083
    %s1380 = sld [smem:[#allocation9 + $0x81]]
    %v1381 = vstv %s1380
    %v1382 = vmul.f32 %v1381, %v1120
    %v1383 = vadd.f32 %v1379, %v1382
    %s1384 = sld [smem:[#allocation9 + $0x82]]
    %v1385 = vstv %s1384
    %v1386 = vmul.f32 %v1385, %v1157
    %v1387 = vadd.f32 %v1383, %v1386
    %s1388 = sld [smem:[#allocation9 + $0x83]]
    %v1389 = vstv %s1388
    %v1390 = vmul.f32 %v1389, %v1194
    %v1391 = vadd.f32 %v1387, %v1390
    %s1392 = sld [smem:[#allocation9 + $0x84]]
    %v1393 = vstv %s1392
    %v1394 = vmul.f32 %v1393, %v1231
    %v1395 = vadd.f32 %v1391, %v1394
    %s1396 = sld [smem:[#allocation9 + $0x85]]
    %v1397 = vstv %s1396
    %v1398 = vmul.f32 %v1397, %v1268
    %v1399 = vadd.f32 %v1395, %v1398
    %s1400 = sld [smem:[#allocation9 + $0x86]]
    %v1401 = vstv %s1400
    %v1402 = vmul.f32 %v1401, %v1305
    %v1403 = vadd.f32 %v1399, %v1402
    %s1404 = sld [smem:[#allocation9 + $0x87]]
    %v1405 = vstv %s1404
    %v1406 = vmul.f32 %v1405, %v1342
    %v1407 = vadd.f32 %v1403, %v1406
    %s1408 = sld [smem:[#allocation10 + $0x1]]
    %v1409 = vstv %s1408
    %v1410 = vadd.f32 %v1407, %v1409
    %s1411 = sld [smem:[#allocation9 + $0x100]]
    %v1412 = vstv %s1411
    %v1413 = vmul.f32 %v1412, %v1083
    %s1414 = sld [smem:[#allocation9 + $0x101]]
    %v1415 = vstv %s1414
    %v1416 = vmul.f32 %v1415, %v1120
    %v1417 = vadd.f32 %v1413, %v1416
    %s1418 = sld [smem:[#allocation9 + $0x102]]
    %v1419 = vstv %s1418
    %v1420 = vmul.f32 %v1419, %v1157
    %v1421 = vadd.f32 %v1417, %v1420
    %s1422 = sld [smem:[#allocation9 + $0x103]]
    %v1423 = vstv %s1422
    %v1424 = vmul.f32 %v1423, %v1194
    %v1425 = vadd.f32 %v1421, %v1424
    %s1426 = sld [smem:[#allocation9 + $0x104]]
    %v1427 = vstv %s1426
    %v1428 = vmul.f32 %v1427, %v1231
    %v1429 = vadd.f32 %v1425, %v1428
    %s1430 = sld [smem:[#allocation9 + $0x105]]
    %v1431 = vstv %s1430
    %v1432 = vmul.f32 %v1431, %v1268
    %v1433 = vadd.f32 %v1429, %v1432
    %s1434 = sld [smem:[#allocation9 + $0x106]]
    %v1435 = vstv %s1434
    %v1436 = vmul.f32 %v1435, %v1305
    %v1437 = vadd.f32 %v1433, %v1436
    %s1438 = sld [smem:[#allocation9 + $0x107]]
    %v1439 = vstv %s1438
    %v1440 = vmul.f32 %v1439, %v1342
    %v1441 = vadd.f32 %v1437, %v1440
    %s1442 = sld [smem:[#allocation10 + $0x2]]
    %v1443 = vstv %s1442
    %v1444 = vadd.f32 %v1441, %v1443
    %s1445 = sld [smem:[#allocation9 + $0x180]]
    %v1446 = vstv %s1445
    %v1447 = vmul.f32 %v1446, %v1083
    %s1448 = sld [smem:[#allocation9 + $0x181]]
    %v1449 = vstv %s1448
    %v1450 = vmul.f32 %v1449, %v1120
    %v1451 = vadd.f32 %v1447, %v1450
    %s1452 = sld [smem:[#allocation9 + $0x182]]
    %v1453 = vstv %s1452
    %v1454 = vmul.f32 %v1453, %v1157
    %v1455 = vadd.f32 %v1451, %v1454
    %s1456 = sld [smem:[#allocation9 + $0x183]]
    %v1457 = vstv %s1456
    %v1458 = vmul.f32 %v1457, %v1194
    %v1459 = vadd.f32 %v1455, %v1458
    %s1460 = sld [smem:[#allocation9 + $0x184]]
    %v1461 = vstv %s1460
    %v1462 = vmul.f32 %v1461, %v1231
    %v1463 = vadd.f32 %v1459, %v1462
    %s1464 = sld [smem:[#allocation9 + $0x185]]
    %v1465 = vstv %s1464
    %v1466 = vmul.f32 %v1465, %v1268
    %v1467 = vadd.f32 %v1463, %v1466
    %s1468 = sld [smem:[#allocation9 + $0x186]]
    %v1469 = vstv %s1468
    %v1470 = vmul.f32 %v1469, %v1305
    %v1471 = vadd.f32 %v1467, %v1470
    %s1472 = sld [smem:[#allocation9 + $0x187]]
    %v1473 = vstv %s1472
    %v1474 = vmul.f32 %v1473, %v1342
    %v1475 = vadd.f32 %v1471, %v1474
    %s1476 = sld [smem:[#allocation10 + $0x3]]
    %v1477 = vstv %s1476
    %v1478 = vadd.f32 %v1475, %v1477
    %1480 = vrot.lane.b32.xlu0 %v1410, 64
    %v1481 = vpop.permute.xlu0 %1480
    %1484 = vrot.lane.b32.xlu0 %v1478, 64
    %v1485 = vpop.permute.xlu0 %1484
    %v1487 = vsel %vm675, %v1376, %v1481
    %v1488 = vsel %vm675, %v1444, %v1485
    %1489 = vxpose.xlu0.b32.start [1/16] %v1487, 128
    %1490 = vxpose.xlu0.b32.cont [2/16] 0.0, 128
    %1491 = vxpose.xlu0.b32.cont [3/16] 0.0, 128
    %1492 = vxpose.xlu0.b32.cont [4/16] 0.0, 128
    %1493 = vxpose.xlu0.b32.cont [5/16] 0.0, 128
    %1494 = vxpose.xlu0.b32.cont [6/16] 0.0, 128
    %1495 = vxpose.xlu0.b32.cont [7/16] 0.0, 128
    %1496 = vxpose.xlu0.b32.cont [8/16] 0.0, 128
    %1497 = vxpose.xlu0.b32.cont [9/16] 0.0, 128
    %1498 = vxpose.xlu0.b32.cont [10/16] 0.0, 128
    %1499 = vxpose.xlu0.b32.cont [11/16] 0.0, 128
    %1500 = vxpose.xlu0.b32.cont [12/16] 0.0, 128
    %1501 = vxpose.xlu0.b32.cont [13/16] 0.0, 128
    %1502 = vxpose.xlu0.b32.cont [14/16] 0.0, 128
    %1503 = vxpose.xlu0.b32.cont [15/16] 0.0, 128
    %1504 = vxpose.xlu0.b32.end [16/16] 0.0, 128
    %v1505 = vpop.trf.xlu0
    %v1506 = vpop.trf.xlu0
    %v1507 = vpop.trf.xlu0
    %v1508 = vpop.trf.xlu0
    %v1509 = vpop.trf.xlu0
    %v1510 = vpop.trf.xlu0
    %v1511 = vpop.trf.xlu0
    %v1512 = vpop.trf.xlu0
    %v1513 = vpop.trf.xlu0
    %v1514 = vpop.trf.xlu0
    %v1515 = vpop.trf.xlu0
    %v1516 = vpop.trf.xlu0
    %v1517 = vpop.trf.xlu0
    %v1518 = vpop.trf.xlu0
    %v1519 = vpop.trf.xlu0
    %v1520 = vpop.trf.xlu0
    %1521 = vxpose.xlu0.b32.start [1/16] %v1488, 128
    %1522 = vxpose.xlu0.b32.cont [2/16] 0.0, 128
    %1523 = vxpose.xlu0.b32.cont [3/16] 0.0, 128
    %1524 = vxpose.xlu0.b32.cont [4/16] 0.0, 128
    %1525 = vxpose.xlu0.b32.cont [5/16] 0.0, 128
    %1526 = vxpose.xlu0.b32.cont [6/16] 0.0, 128
    %1527 = vxpose.xlu0.b32.cont [7/16] 0.0, 128
    %1528 = vxpose.xlu0.b32.cont [8/16] 0.0, 128
    %1529 = vxpose.xlu0.b32.cont [9/16] 0.0, 128
    %1530 = vxpose.xlu0.b32.cont [10/16] 0.0, 128
    %1531 = vxpose.xlu0.b32.cont [11/16] 0.0, 128
    %1532 = vxpose.xlu0.b32.cont [12/16] 0.0, 128
    %1533 = vxpose.xlu0.b32.cont [13/16] 0.0, 128
    %1534 = vxpose.xlu0.b32.cont [14/16] 0.0, 128
    %1535 = vxpose.xlu0.b32.cont [15/16] 0.0, 128
    %1536 = vxpose.xlu0.b32.end [16/16] 0.0, 128
    %v1537 = vpop.trf.xlu0
    %v1538 = vpop.trf.xlu0
    %v1539 = vpop.trf.xlu0
    %v1540 = vpop.trf.xlu0
    %v1541 = vpop.trf.xlu0
    %v1542 = vpop.trf.xlu0
    %v1543 = vpop.trf.xlu0
    %v1544 = vpop.trf.xlu0
    %v1545 = vpop.trf.xlu0
    %v1546 = vpop.trf.xlu0
    %v1547 = vpop.trf.xlu0
    %v1548 = vpop.trf.xlu0
    %v1549 = vpop.trf.xlu0
    %v1550 = vpop.trf.xlu0
    %v1551 = vpop.trf.xlu0
    %v1552 = vpop.trf.xlu0
    %1553 = vst.msk [vmem:[%s13] sm:$0xff] %vm498, %v1505
    %1554 = vst.msk [vmem:[%s13 + $0x8] sm:$0xff] %vm498, %v1506
    %1555 = vst.msk [vmem:[%s13 + $0x10] sm:$0xff] %vm498, %v1507
    %1556 = vst.msk [vmem:[%s13 + $0x18] sm:$0xff] %vm498, %v1508
    %s1557 = scalar_lea.vmem %s13, 32
    %1558 = vst.msk [vmem:[%s1557] sm:$0xff] %vm498, %v1513
    %1559 = vst.msk [vmem:[%s1557 + $0x8] sm:$0xff] %vm498, %v1514
    %1560 = vst.msk [vmem:[%s1557 + $0x10] sm:$0xff] %vm498, %v1515
    %1561 = vst.msk [vmem:[%s1557 + $0x18] sm:$0xff] %vm498, %v1516
    %s1562 = scalar_lea.vmem %s13, 64
    %1563 = vst.msk [vmem:[%s1562] sm:$0xff] %vm498, %v1537
    %1564 = vst.msk [vmem:[%s1562 + $0x8] sm:$0xff] %vm498, %v1538
    %1565 = vst.msk [vmem:[%s1562 + $0x10] sm:$0xff] %vm498, %v1539
    %1566 = vst.msk [vmem:[%s1562 + $0x18] sm:$0xff] %vm498, %v1540
    %s1567 = scalar_lea.vmem %s13, 96
    %1568 = vst.msk [vmem:[%s1567] sm:$0xff] %vm498, %v1545
    %1569 = vst.msk [vmem:[%s1567 + $0x8] sm:$0xff] %vm498, %v1546
    %1570 = vst.msk [vmem:[%s1567 + $0x10] sm:$0xff] %vm498, %v1547
    %1571 = vst.msk [vmem:[%s1567 + $0x18] sm:$0xff] %vm498, %v1548
    %s1572 = scalar_lea.vmem %s13, 128
    %1573 = vst.msk [vmem:[%s1572] sm:$0xff] %vm498, %v1509
    %1574 = vst.msk [vmem:[%s1572 + $0x8] sm:$0xff] %vm498, %v1510
    %1575 = vst.msk [vmem:[%s1572 + $0x10] sm:$0xff] %vm498, %v1511
    %1576 = vst.msk [vmem:[%s1572 + $0x18] sm:$0xff] %vm498, %v1512
    %s1577 = scalar_lea.vmem %s13, 160
    %1578 = vst.msk [vmem:[%s1577] sm:$0xff] %vm498, %v1517
    %1579 = vst.msk [vmem:[%s1577 + $0x8] sm:$0xff] %vm498, %v1518
    %1580 = vst.msk [vmem:[%s1577 + $0x10] sm:$0xff] %vm498, %v1519
    %1581 = vst.msk [vmem:[%s1577 + $0x18] sm:$0xff] %vm498, %v1520
    %s1582 = scalar_lea.vmem %s13, 192
    %1583 = vst.msk [vmem:[%s1582] sm:$0xff] %vm498, %v1541
    %1584 = vst.msk [vmem:[%s1582 + $0x8] sm:$0xff] %vm498, %v1542
    %1585 = vst.msk [vmem:[%s1582 + $0x10] sm:$0xff] %vm498, %v1543
    %1586 = vst.msk [vmem:[%s1582 + $0x18] sm:$0xff] %vm498, %v1544
    %s1587 = scalar_lea.vmem %s13, 224
    %1588 = vst.msk [vmem:[%s1587] sm:$0xff] %vm498, %v1549
    %1589 = vst.msk [vmem:[%s1587 + $0x8] sm:$0xff] %vm498, %v1550
    %1590 = vst.msk [vmem:[%s1587 + $0x10] sm:$0xff] %vm498, %v1551
    %1591 = vst.msk [vmem:[%s1587 + $0x18] sm:$0xff] %vm498, %v1552
    // Predicated region
    $region78: #{multi_head_self_attention.1} parent=1 // pred_check
      _
    $region79: #{multi_head_self_attention.1} parent=1 // pred_check_branch
      %1593 = sbr.rel (0) target = $region81
    $region80: #{multi_head_self_attention.1} parent=1 // pred_region
      _
    $region81: #{multi_head_self_attention.1} parent=1 // pred_fallthru
      _
    // Predicated region
    $region82: #{multi_head_self_attention.1} parent=1 // pred_check
      _
    $region83: #{multi_head_self_attention.1} parent=1 // pred_check_branch
      %1595 = sbr.rel (0) target = $region85
    $region84: #{multi_head_self_attention.1} parent=1 // pred_region
      _
    $region85: #{multi_head_self_attention.1} parent=1 // pred_fallthru
      _
    %1596 = vsyncpa [#allocation3], 1
    %1597 = vsyncpa [#allocation5], 1
    %1598 = vsyncpa [#allocation8], 1
    %1599 = vsyncpa [#allocation11], 1

</llo_original>
